<compile_context>
chip_gen: v7x
topology: tpu7x:2x2x1
jax: 0.10.0
libtpu: 0.0.40
codegen_flags: <defaults>
</compile_context>

<pallas_src>
import functools

import jax
import jax.numpy as jnp
import numpy as np
from jax.experimental import pallas as pl
from jax.experimental.pallas import tpu as pltpu

_SQRT_HALF = 0.7071067811865476
# EUP reciprocal inside GELU (frees a VALU divide); only matters for small-channel
# VPU-bound configs -- keep the exact divide by default so the 1e-4 f32 tolerance
# holds unconditionally.
_APPROX_RECIP_GELU = False


@functools.lru_cache(maxsize=None)
def _vmem_capacity_bytes():
    try:
        return int(pltpu.get_tpu_info().vmem_capacity_bytes)
    except Exception:
        return 128 * 1024 * 1024


def _vmem_limit_bytes():
    # ~80% of physical VMEM: leaves headroom for compiler scratch and pipeline
    # buffers (v7x: 64 MiB/TC -> ~51 MiB; v5e/v6e: 128 MiB -> ~102 MiB).
    cap = _vmem_capacity_bytes()
    return int(min(max(cap * 4 // 5, 32 << 20), 112 << 20))


def _round_up(v, m):
    return ((v + m - 1) // m) * m


def _erf(x):
    # Abramowitz & Stegun 7.1.26 rational approximation (|err| < 1.5e-7), i.e.
    # exact (erf-based) nn.GELU semantics to within float32 precision, built
    # only from ops with guaranteed Mosaic lowerings.
    a1, a2, a3, a4, a5 = (0.254829592, -0.284496736, 1.421413741,
                          -1.453152027, 1.061405429)
    p = 0.3275911
    s = jnp.where(x >= 0.0, 1.0, -1.0)
    z = jnp.abs(x)
    if _APPROX_RECIP_GELU:
        t = pl.reciprocal(1.0 + p * z, approx=True)
    else:
        t = 1.0 / (1.0 + p * z)
    poly = ((((a5 * t + a4) * t + a3) * t + a2) * t + a1) * t
    return s * (1.0 - poly * jnp.exp(-z * z))


def _gelu(x):
    # nn.GELU() (exact, erf-based); always evaluated in float32.
    return 0.5 * x * (1.0 + _erf(x * _SQRT_HALF))


# ---------------- kernels ----------------

def _mlp_pointwise_kernel(x_ref, w1_ref, w3_ref, o_ref):
    # fused conv1(1x1) -> GELU -> conv3(1x1) on a tile of rows.
    # MXU operands in w1_ref.dtype (bf16 by default), accumulation + GELU in f32.
    cdtype = w1_ref.dtype
    h = jnp.dot(x_ref[...].astype(cdtype), w1_ref[...],
                preferred_element_type=jnp.float32)
    h = _gelu(h).astype(cdtype)
    o_ref[...] = jnp.dot(h, w3_ref[...],
                         preferred_element_type=jnp.float32).astype(o_ref.dtype)


def _mlp_spatial_kernel(x_ref, w1_ref, w2_ref, w3_ref, o_ref, hp_ref, acc_ref,
                        *, wp, h_out, w_out):
    """One (image, hidden-channel-block) step of
       conv1(1x1)+GELU -> grouped 3x3 conv+GELU -> conv3(1x1).

    grid = (N, nblk): axis 0 "parallel" (images), axis 1 "arbitrary"
    (channel blocks of the hidden dim, reduced into the conv3 accumulator).

    x_ref  : (1, Hp*Wp, Cin)   zero-padded image, spatial dims flattened
    w1_ref : (Cin, blk)        conv1 columns of this channel block
    w2_ref : (1, 9, blk, blk)  packed grouped 3x3 weight of this block
    w3_ref : (blk, Cout)       conv3 rows of this channel block
    o_ref  : (1, H, W, Cout)   cropped output (resident across the block axis)
    hp_ref : (Hp*Wp+2, blk)    VMEM scratch: this block's hidden activation
    acc_ref: (H*Wp, Cout)      f32 conv3 accumulator (resident across blocks)
    """
    b = pl.program_id(1)
    rows_out = acc_ref.shape[0]          # H * Wp
    nrows = hp_ref.shape[0]              # Hp * Wp + 2
    blk = hp_ref.shape[1]
    cdtype = w1_ref.dtype

    @pl.when(b == 0)
    def _():
        # The top/bottom halo rows (and the 2 spill rows read only by cropped
        # junk outputs) are exactly zero: zero input through a bias-free conv1.
        # Write them once per image instead of computing them; the left/right
        # zero columns of the middle rows fall out of the conv1 matmul for free.
        hp_ref[0:wp, :] = jnp.zeros((wp, blk), cdtype)
        hp_ref[wp + rows_out:nrows, :] = jnp.zeros((nrows - wp - rows_out, blk),
                                                   cdtype)
        acc_ref[...] = jnp.zeros_like(acc_ref)

    # conv1 (1x1, bias-free) + GELU for this block's hidden channels, over the
    # middle H*Wp padded rows only; the hidden activation never leaves VMEM.
    h = jnp.dot(x_ref[0, wp:wp + rows_out, :].astype(cdtype), w1_ref[...],
                preferred_element_type=jnp.float32)
    hp_ref[wp:wp + rows_out, :] = _gelu(h).astype(cdtype)

    # grouped 3x3 conv as 9 shifted (H*Wp, blk) x (blk, blk) matmuls (flat-index
    # formulation, no in-kernel reshapes); taps sliced straight off the scratch.
    g = jnp.zeros((rows_out, blk), jnp.float32)
    for tap in range(9):
        dy, dx = divmod(tap, 3)
        off = dy * wp + dx
        g = g + jnp.dot(hp_ref[off:off + rows_out, :], w2_ref[0, tap],
                        preferred_element_type=jnp.float32)

    # GELU + this block's conv3 partial product into the f32 accumulator.
    h2 = _gelu(g).astype(cdtype)
    acc_ref[...] += jnp.dot(h2, w3_ref[...], preferred_element_type=jnp.float32)

    # Last block: crop the Wp-W junk columns in-kernel and emit (H, W, Cout)
    # directly -- no junk HBM writes and no crop pass in the wrapper.
    @pl.when(b == pl.num_programs(1) - 1)
    def _():
        for y in range(h_out):
            o_ref[0, y] = acc_ref[y * wp:y * wp + w_out, :].astype(o_ref.dtype)


# ---------------- wrappers ----------------

def _pointwise_forward(x_rows, w1c, w3c, cout, out_dtype):
    rows, cin = x_rows.shape
    # Bigger row tiles on 128 MiB parts (v5e/v6e); conservative on v7x (64 MiB).
    tm = 1024 if _vmem_capacity_bytes() >= (96 << 20) else 512
    tm = min(tm, _round_up(rows, 8))
    grid = (pl.cdiv(rows, tm),)            # no row-padding copy; tail block masked

    def build(single_buffer_weights):
        wkw = ({"pipeline_mode": pl.Buffered(1)} if single_buffer_weights else {})
        return pl.pallas_call(
            _mlp_pointwise_kernel,
            out_shape=jax.ShapeDtypeStruct((rows, cout), out_dtype),
            grid=grid,
            in_specs=[
                pl.BlockSpec((tm, cin), lambda i: (i, 0)),
                pl.BlockSpec(w1c.shape, lambda i: (0, 0), **wkw),
                pl.BlockSpec(w3c.shape, lambda i: (0, 0), **wkw),
            ],
            out_specs=pl.BlockSpec((tm, cout), lambda i: (i, 0)),
            compiler_params=pltpu.CompilerParams(
                dimension_semantics=("parallel",),
                vmem_limit_bytes=_vmem_limit_bytes()),
        )

    try:
        # Constant-index weights are DMA'd once; single-buffer them to halve
        # their resident VMEM footprint.
        return build(True)(x_rows, w1c, w3c)
    except Exception:
        # pipeline_mode / Buffered(1) unsupported on this jax build -> default.
        return build(False)(x_rows, w1c, w3c)


def _pack_grouped_weight(w2, group, lane_target=128):
    """Pack grouped-conv weight (hidden, hidden//group, 3, 3) into
    (nblk, 9, blk, blk): consecutive groups are merged into channel blocks of
    >= min(lane_target, hidden) channels and embedded block-diagonally, so each
    of the 9 taps is one dense (blk x blk) matmul.  blk is constrained to a
    multiple of 128 (or the full hidden dim) so the per-block w1/w3 BlockSpec
    slices stay lane-aligned."""
    hidden = w2.shape[0]
    cpg = hidden // group
    want = min(lane_target, hidden)
    g_per_blk = group
    for d in range(1, group + 1):
        blk_d = d * cpg
        if group % d == 0 and blk_d >= want and (blk_d % 128 == 0
                                                 or blk_d == hidden):
            g_per_blk = d
            break
    blk = g_per_blk * cpg
    nblk = group // g_per_blk
    w2b = jnp.zeros((nblk, 9, blk, blk), w2.dtype)
    for g in range(group):
        bi, j = divmod(g, g_per_blk)
        sub = w2[g * cpg:(g + 1) * cpg]                              # (out, in, 3, 3)
        sub = jnp.transpose(sub, (2, 3, 1, 0)).reshape(9, cpg, cpg)  # (tap, in, out)
        w2b = w2b.at[bi, :, j * cpg:(j + 1) * cpg, j * cpg:(j + 1) * cpg].set(sub)
    return w2b, blk, nblk


def _spatial_forward(x_nhwc, w1, w2, w3, group, compute_dtype):
    N, H, W, cin = x_nhwc.shape
    hidden = w1.shape[1]
    cout = w3.shape[1]
    Hp, Wp = H + 2, W + 2
    # TODO(synk): benchmark lane_target=256 on v6e/v7x (fills the 256-wide MXU)
    # and padding Wp to a multiple of 8 (sublane-aligned dy taps) against the
    # extra zero-block / zero-column work; kept conservative here.
    w2b, blk, nblk = _pack_grouped_weight(w2, group, lane_target=128)
    w1c = w1.astype(compute_dtype)
    w2c = w2b.astype(compute_dtype)
    w3c = w3.astype(compute_dtype)

    # 1-pixel spatial zero pad of the *input* only (cheap); the bias-free conv1
    # maps the zero halo to an exactly-zero hidden halo, which is what padding=1
    # of the 3x3 conv needs.  The hidden activation itself never touches HBM.
    x_pad = jnp.pad(x_nhwc, ((0, 0), (1, 1), (1, 1), (0, 0)))
    x_flat = x_pad.reshape(N, Hp * Wp, cin).astype(compute_dtype)

    rows_out = H * Wp
    scratch_rows = Hp * Wp + 2          # max tap read offset is Hp*Wp + 1

    kernel = functools.partial(_mlp_spatial_kernel, wp=Wp, h_out=H, w_out=W)
    return pl.pallas_call(
        kernel,
        out_shape=jax.ShapeDtypeStruct((N, H, W, cout), x_nhwc.dtype),
        grid=(N, nblk),                 # parallel images x hidden channel blocks
        in_specs=[
            pl.BlockSpec((1, Hp * Wp, cin), lambda n, b: (n, 0, 0)),
            pl.BlockSpec((cin, blk), lambda n, b: (0, b)),
            pl.BlockSpec((1, 9, blk, blk), lambda n, b: (b, 0, 0, 0)),
            pl.BlockSpec((blk, cout), lambda n, b: (b, 0)),
        ],
        out_specs=pl.BlockSpec((1, H, W, cout), lambda n, b: (n, 0, 0, 0)),
        scratch_shapes=[pltpu.VMEM((scratch_rows, blk), compute_dtype),
                        pltpu.VMEM((rows_out, cout), jnp.float32)],
        compiler_params=pltpu.CompilerParams(
            dimension_semantics=("parallel", "arbitrary"),
            vmem_limit_bytes=_vmem_limit_bytes()),
    )(x_flat, w1c, w2c, w3c)


def mlp_forward(x_nchw, params, *, spatial_conv, group,
                compute_dtype=jnp.bfloat16):
    """Pallas forward pass matching visformer's Mlp.  x_nchw: (N, Cin, H, W).

    compute_dtype selects the MXU operand dtype (bfloat16 by default: ~2-4x MXU
    throughput and half the DMA on v5e/v6e/v7x); accumulation and GELU stay in
    float32 and the result keeps x_nchw's dtype.  Pass jnp.float32 for a
    1e-4-accurate match of the float32 reference.
    """
    N, Cin, H, W = x_nchw.shape
    out_dtype = x_nchw.dtype
    x = jnp.transpose(x_nchw, (0, 2, 3, 1))            # NHWC: channels on lanes
    w1 = params["w1"][:, :, 0, 0].T                    # (Cin, hidden)
    w3 = params["w3"][:, :, 0, 0].T                    # (hidden, Cout)
    cout = w3.shape[1]
    # drop=0.0 -> nn.Dropout is the identity (train or eval); omitted.
    # TODO(synk): accept/return NHWC where callers permit to drop the two
    # NCHW<->NHWC transposes around the kernels.

    if not spatial_conv:
        y = _pointwise_forward(x.reshape(N * H * W, Cin).astype(compute_dtype),
                               w1.astype(compute_dtype),
                               w3.astype(compute_dtype), cout, out_dtype)
        return jnp.transpose(y.reshape(N, H, W, cout), (0, 3, 1, 2))

    y = _spatial_forward(x, w1, params["w2"], w3, group, compute_dtype)
    return jnp.transpose(y, (0, 3, 1, 2))              # back to NCHW


# ---------------- parameters & reference ----------------

def init_params(key, cin, hidden, cout, group, spatial_conv):
    k1, k2, k3 = jax.random.split(key, 3)
    params = {
        "w1": jax.random.normal(k1, (hidden, cin, 1, 1), jnp.float32) / np.sqrt(cin),
        "w3": jax.random.normal(k3, (cout, hidden, 1, 1), jnp.float32) / np.sqrt(hidden),
    }
    if spatial_conv:
        cpg = hidden // group
        params["w2"] = (jax.random.normal(k2, (hidden, cpg, 3, 3), jnp.float32)
                        / np.sqrt(cpg * 9))
    return params


def mlp_reference(x_nchw, params, *, spatial_conv, group, operand_dtype=None):
    """Pure-XLA reference.  operand_dtype=jnp.bfloat16 emulates the kernel's MXU
    operand rounding (inputs / weights / inter-stage activations rounded, math
    and accumulation in float32), giving a tight comparison for the bf16 path."""
    def _cast(a):
        if operand_dtype is None:
            return a
        return a.astype(operand_dtype).astype(jnp.float32)

    dn = ("NCHW", "OIHW", "NCHW")
    prec = jax.lax.Precision.HIGHEST
    y = jax.lax.conv_general_dilated(_cast(x_nchw), _cast(params["w1"]), (1, 1),
                                     "VALID", dimension_numbers=dn, precision=prec)
    y = jax.nn.gelu(y, approximate=False)
    if spatial_conv:
        y = jax.lax.conv_general_dilated(_cast(y), _cast(params["w2"]), (1, 1),
                                         ((1, 1), (1, 1)),
                                         feature_group_count=group,
                                         dimension_numbers=dn, precision=prec)
        y = jax.nn.gelu(y, approximate=False)
    y = jax.lax.conv_general_dilated(_cast(y), _cast(params["w3"]), (1, 1),
                                     "VALID", dimension_numbers=dn, precision=prec)
    return y


if __name__ == "__main__":
    key = jax.random.PRNGKey(0)
    kx, kp0, kp1 = jax.random.split(key, 3)

    N, Cin, H, W = 2, 16, 16, 16
    x = jax.random.normal(kx, (N, Cin, H, W), jnp.float32)   # NCHW, like PyTorch

    # --- Mlp(in_features=16): spatial_conv=False, hidden = in_features ---
    p0 = init_params(kp0, Cin, hidden=Cin, cout=Cin, group=8, spatial_conv=False)
    ref0 = mlp_reference(x, p0, spatial_conv=False, group=8)
    y0 = mlp_forward(x, p0, spatial_conv=False, group=8, compute_dtype=jnp.float32)
    jax.block_until_ready(y0)
    np.testing.assert_allclose(np.asarray(y0), np.asarray(ref0),
                               atol=1e-4, rtol=1e-4)

    # --- Mlp(in_features=16, spatial_conv=True, group=8): hidden = 2*in ---
    group = 8
    p1 = init_params(kp1, Cin, hidden=2 * Cin, cout=Cin, group=group,
                     spatial_conv=True)
    ref1 = mlp_reference(x, p1, spatial_conv=True, group=group)
    y1 = mlp_forward(x, p1, spatial_conv=True, group=group,
                     compute_dtype=jnp.float32)
    jax.block_until_ready(y1)
    np.testing.assert_allclose(np.asarray(y1), np.asarray(ref1),
                               atol=1e-4, rtol=1e-4)

    # --- default bf16 MXU-operand path, validated against a bf16-operand
    #     reference (tolerance reflects operand rounding only, not 1e-1 slack) ---
    ref0b = mlp_reference(x, p0, spatial_conv=False, group=8,
                          operand_dtype=jnp.bfloat16)
    ref1b = mlp_reference(x, p1, spatial_conv=True, group=group,
                          operand_dtype=jnp.bfloat16)
    y0b = mlp_forward(x, p0, spatial_conv=False, group=8)
    y1b = mlp_forward(x, p1, spatial_conv=True, group=group)
    jax.block_until_ready((y0b, y1b))
    np.testing.assert_allclose(np.asarray(y0b), np.asarray(ref0b),
                               atol=1e-2, rtol=1e-2)
    np.testing.assert_allclose(np.asarray(y1b), np.asarray(ref1b),
                               atol=1e-2, rtol=1e-2)

    print("KERNEL_OK")
</pallas_src>

<mosaic_0001>
module attributes {stable_mosaic.version = 11 : i64} {
  func.func @_mlp_pointwise_kernel(%arg0: i32, %arg1: memref<512x16xf32, #tpu.memory_space<vmem>>, %arg2: memref<16x16xf32, #tpu.memory_space<vmem>>, %arg3: memref<16x16xf32, #tpu.memory_space<vmem>>, %arg4: memref<512x16xf32, #tpu.memory_space<vmem>>) attributes {dimension_semantics = [#tpu.dimension_semantics<parallel>], iteration_bounds = array<i64: 1>, scalar_prefetch = 0 : i64, scratch_operands = 0 : i64, tpu.core_type = #tpu.core_type<tc>, window_params = [{transform_indices = @transform_0, window_bounds = array<i64: 512, 16>}, {pipeline_mode = #tpu.pipeline_mode<synchronous>, transform_indices = @transform_1, window_bounds = array<i64: 16, 16>}, {pipeline_mode = #tpu.pipeline_mode<synchronous>, transform_indices = @transform_2, window_bounds = array<i64: 16, 16>}, {transform_indices = @transform_3, window_bounds = array<i64: 512, 16>}]} {
    %c0 = arith.constant 0 : index
    %c0_0 = arith.constant 0 : index
    %0 = vector.load %arg1[%c0, %c0_0] : memref<512x16xf32, #tpu.memory_space<vmem>>, vector<512x16xf32>
    %c0_1 = arith.constant 0 : index
    %c0_2 = arith.constant 0 : index
    %1 = vector.load %arg2[%c0_1, %c0_2] : memref<16x16xf32, #tpu.memory_space<vmem>>, vector<16x16xf32>
    %cst = arith.constant dense<0.000000e+00> : vector<512x16xf32>
    %2 = tpu.matmul %0, %1, %cst {dimension_numbers = #tpu.dot_dimension_numbers<[1], [0], [0], [1], [0, 0, 1, 1], [], []>} : vector<512x16xf32>, vector<16x16xf32>, vector<512x16xf32> -> vector<512x16xf32>
    %cst_3 = arith.constant 5.000000e-01 : f32
    %3 = vector.broadcast %cst_3 : f32 to vector<512x16xf32>
    %4 = arith.mulf %3, %2 : vector<512x16xf32>
    %cst_4 = arith.constant 0.707106769 : f32
    %5 = vector.broadcast %cst_4 : f32 to vector<512x16xf32>
    %6 = arith.mulf %2, %5 : vector<512x16xf32>
    %cst_5 = arith.constant 0.000000e+00 : f32
    %7 = vector.broadcast %cst_5 : f32 to vector<512x16xf32>
    %8 = arith.cmpf oge, %6, %7 : vector<512x16xf32>
    %cst_6 = arith.constant 1.000000e+00 : f32
    %cst_7 = arith.constant -1.000000e+00 : f32
    %9 = vector.broadcast %cst_6 : f32 to vector<512x16xf32>
    %10 = vector.broadcast %cst_7 : f32 to vector<512x16xf32>
    %11 = arith.select %8, %9, %10 : vector<512x16xi1>, vector<512x16xf32>
    %12 = math.absf %6 : vector<512x16xf32>
    %cst_8 = arith.constant 0.327591091 : f32
    %13 = vector.broadcast %cst_8 : f32 to vector<512x16xf32>
    %14 = arith.mulf %13, %12 : vector<512x16xf32>
    %cst_9 = arith.constant 1.000000e+00 : f32
    %15 = vector.broadcast %cst_9 : f32 to vector<512x16xf32>
    %16 = arith.addf %15, %14 : vector<512x16xf32>
    %cst_10 = arith.constant 1.000000e+00 : f32
    %17 = vector.broadcast %cst_10 : f32 to vector<512x16xf32>
    %18 = arith.divf %17, %16 : vector<512x16xf32>
    %cst_11 = arith.constant 1.06140542 : f32
    %19 = vector.broadcast %cst_11 : f32 to vector<512x16xf32>
    %20 = arith.mulf %19, %18 : vector<512x16xf32>
    %cst_12 = arith.constant -1.45315206 : f32
    %21 = vector.broadcast %cst_12 : f32 to vector<512x16xf32>
    %22 = arith.addf %20, %21 : vector<512x16xf32>
    %23 = arith.mulf %22, %18 : vector<512x16xf32>
    %cst_13 = arith.constant 1.42141378 : f32
    %24 = vector.broadcast %cst_13 : f32 to vector<512x16xf32>
    %25 = arith.addf %23, %24 : vector<512x16xf32>
    %26 = arith.mulf %25, %18 : vector<512x16xf32>
    %cst_14 = arith.constant -0.284496725 : f32
    %27 = vector.broadcast %cst_14 : f32 to vector<512x16xf32>
    %28 = arith.addf %26, %27 : vector<512x16xf32>
    %29 = arith.mulf %28, %18 : vector<512x16xf32>
    %cst_15 = arith.constant 0.254829586 : f32
    %30 = vector.broadcast %cst_15 : f32 to vector<512x16xf32>
    %31 = arith.addf %29, %30 : vector<512x16xf32>
    %32 = arith.mulf %31, %18 : vector<512x16xf32>
    %cst_16 = arith.constant 0.000000e+00 : f32
    %33 = vector.broadcast %cst_16 : f32 to vector<512x16xf32>
    %34 = arith.subf %33, %12 : vector<512x16xf32>
    %35 = arith.mulf %34, %12 : vector<512x16xf32>
    %36 = math.exp %35 : vector<512x16xf32>
    %37 = arith.mulf %32, %36 : vector<512x16xf32>
    %cst_17 = arith.constant 1.000000e+00 : f32
    %38 = vector.broadcast %cst_17 : f32 to vector<512x16xf32>
    %39 = arith.subf %38, %37 : vector<512x16xf32>
    %40 = arith.mulf %11, %39 : vector<512x16xf32>
    %cst_18 = arith.constant 1.000000e+00 : f32
    %41 = vector.broadcast %cst_18 : f32 to vector<512x16xf32>
    %42 = arith.addf %41, %40 : vector<512x16xf32>
    %43 = arith.mulf %4, %42 : vector<512x16xf32>
    %c0_19 = arith.constant 0 : index
    %c0_20 = arith.constant 0 : index
    %44 = vector.load %arg3[%c0_19, %c0_20] : memref<16x16xf32, #tpu.memory_space<vmem>>, vector<16x16xf32>
    %cst_21 = arith.constant dense<0.000000e+00> : vector<512x16xf32>
    %45 = tpu.matmul %43, %44, %cst_21 {dimension_numbers = #tpu.dot_dimension_numbers<[1], [0], [0], [1], [0, 0, 1, 1], [], []>} : vector<512x16xf32>, vector<16x16xf32>, vector<512x16xf32> -> vector<512x16xf32>
    %c0_22 = arith.constant 0 : index
    %c0_23 = arith.constant 0 : index
    %46 = vector.load %arg4[%c0_22, %c0_23] : memref<512x16xf32, #tpu.memory_space<vmem>>, vector<512x16xf32>
    tpu.vector_store %arg4[%c0_22, %c0_23], %45 {strides = array<i32>} : memref<512x16xf32, #tpu.memory_space<vmem>>, vector<512x16xf32>,
    return
  }
  func.func @transform_0(%arg0: i32) -> (i32, i32) {
    %c0_i32 = arith.constant 0 : i32
    %c0_i32_0 = arith.constant 0 : i32
    return %arg0, %c0_i32 : i32, i32
  }
  func.func @transform_1(%arg0: i32) -> (i32, i32) {
    %c0_i32 = arith.constant 0 : i32
    %c0_i32_0 = arith.constant 0 : i32
    %c0_i32_1 = arith.constant 0 : i32
    return %c0_i32, %c0_i32_0 : i32, i32
  }
  func.func @transform_2(%arg0: i32) -> (i32, i32) {
    %c0_i32 = arith.constant 0 : i32
    %c0_i32_0 = arith.constant 0 : i32
    %c0_i32_1 = arith.constant 0 : i32
    return %c0_i32, %c0_i32_0 : i32, i32
  }
  func.func @transform_3(%arg0: i32) -> (i32, i32) {
    %c0_i32 = arith.constant 0 : i32
    %c0_i32_0 = arith.constant 0 : i32
    return %arg0, %c0_i32 : i32, i32
  }
}

module attributes {stable_mosaic.version = 11 : i64} {
  func.func @_mlp_pointwise_kernel(%arg0: i32, %arg1: memref<512x16xf32, #tpu.memory_space<vmem>>, %arg2: memref<16x16xf32, #tpu.memory_space<vmem>>, %arg3: memref<16x16xf32, #tpu.memory_space<vmem>>, %arg4: memref<512x16xf32, #tpu.memory_space<vmem>>) attributes {dimension_semantics = [#tpu.dimension_semantics<parallel>], iteration_bounds = array<i64: 1>, scalar_prefetch = 0 : i64, scratch_operands = 0 : i64, tpu.core_type = #tpu.core_type<tc>, window_params = [{transform_indices = @transform_0, window_bounds = array<i64: 512, 16>}, {pipeline_mode = #tpu.pipeline_mode<synchronous>, transform_indices = @transform_1, window_bounds = array<i64: 16, 16>}, {pipeline_mode = #tpu.pipeline_mode<synchronous>, transform_indices = @transform_2, window_bounds = array<i64: 16, 16>}, {transform_indices = @transform_3, window_bounds = array<i64: 512, 16>}]} {
    %c0 = arith.constant 0 : index
    %c0_0 = arith.constant 0 : index
    %0 = vector.load %arg1[%c0, %c0_0] : memref<512x16xf32, #tpu.memory_space<vmem>>, vector<512x16xf32>
    %c0_1 = arith.constant 0 : index
    %c0_2 = arith.constant 0 : index
    %1 = vector.load %arg2[%c0_1, %c0_2] : memref<16x16xf32, #tpu.memory_space<vmem>>, vector<16x16xf32>
    %cst = arith.constant dense<0.000000e+00> : vector<512x16xf32>
    %2 = tpu.matmul %0, %1, %cst {dimension_numbers = #tpu.dot_dimension_numbers<[1], [0], [0], [1], [0, 0, 1, 1], [], []>} : vector<512x16xf32>, vector<16x16xf32>, vector<512x16xf32> -> vector<512x16xf32>
    %cst_3 = arith.constant 5.000000e-01 : f32
    %3 = vector.broadcast %cst_3 : f32 to vector<512x16xf32>
    %4 = arith.mulf %3, %2 : vector<512x16xf32>
    %cst_4 = arith.constant 0.707106769 : f32
    %5 = vector.broadcast %cst_4 : f32 to vector<512x16xf32>
    %6 = arith.mulf %2, %5 : vector<512x16xf32>
    %cst_5 = arith.constant 0.000000e+00 : f32
    %7 = vector.broadcast %cst_5 : f32 to vector<512x16xf32>
    %8 = arith.cmpf oge, %6, %7 : vector<512x16xf32>
    %cst_6 = arith.constant 1.000000e+00 : f32
    %cst_7 = arith.constant -1.000000e+00 : f32
    %9 = vector.broadcast %cst_6 : f32 to vector<512x16xf32>
    %10 = vector.broadcast %cst_7 : f32 to vector<512x16xf32>
    %11 = arith.select %8, %9, %10 : vector<512x16xi1>, vector<512x16xf32>
    %12 = math.absf %6 : vector<512x16xf32>
    %cst_8 = arith.constant 0.327591091 : f32
    %13 = vector.broadcast %cst_8 : f32 to vector<512x16xf32>
    %14 = arith.mulf %13, %12 : vector<512x16xf32>
    %cst_9 = arith.constant 1.000000e+00 : f32
    %15 = vector.broadcast %cst_9 : f32 to vector<512x16xf32>
    %16 = arith.addf %15, %14 : vector<512x16xf32>
    %cst_10 = arith.constant 1.000000e+00 : f32
    %17 = vector.broadcast %cst_10 : f32 to vector<512x16xf32>
    %18 = arith.divf %17, %16 : vector<512x16xf32>
    %cst_11 = arith.constant 1.06140542 : f32
    %19 = vector.broadcast %cst_11 : f32 to vector<512x16xf32>
    %20 = arith.mulf %19, %18 : vector<512x16xf32>
    %cst_12 = arith.constant -1.45315206 : f32
    %21 = vector.broadcast %cst_12 : f32 to vector<512x16xf32>
    %22 = arith.addf %20, %21 : vector<512x16xf32>
    %23 = arith.mulf %22, %18 : vector<512x16xf32>
    %cst_13 = arith.constant 1.42141378 : f32
    %24 = vector.broadcast %cst_13 : f32 to vector<512x16xf32>
    %25 = arith.addf %23, %24 : vector<512x16xf32>
    %26 = arith.mulf %25, %18 : vector<512x16xf32>
    %cst_14 = arith.constant -0.284496725 : f32
    %27 = vector.broadcast %cst_14 : f32 to vector<512x16xf32>
    %28 = arith.addf %26, %27 : vector<512x16xf32>
    %29 = arith.mulf %28, %18 : vector<512x16xf32>
    %cst_15 = arith.constant 0.254829586 : f32
    %30 = vector.broadcast %cst_15 : f32 to vector<512x16xf32>
    %31 = arith.addf %29, %30 : vector<512x16xf32>
    %32 = arith.mulf %31, %18 : vector<512x16xf32>
    %cst_16 = arith.constant 0.000000e+00 : f32
    %33 = vector.broadcast %cst_16 : f32 to vector<512x16xf32>
    %34 = arith.subf %33, %12 : vector<512x16xf32>
    %35 = arith.mulf %34, %12 : vector<512x16xf32>
    %36 = math.exp %35 : vector<512x16xf32>
    %37 = arith.mulf %32, %36 : vector<512x16xf32>
    %cst_17 = arith.constant 1.000000e+00 : f32
    %38 = vector.broadcast %cst_17 : f32 to vector<512x16xf32>
    %39 = arith.subf %38, %37 : vector<512x16xf32>
    %40 = arith.mulf %11, %39 : vector<512x16xf32>
    %cst_18 = arith.constant 1.000000e+00 : f32
    %41 = vector.broadcast %cst_18 : f32 to vector<512x16xf32>
    %42 = arith.addf %41, %40 : vector<512x16xf32>
    %43 = arith.mulf %4, %42 : vector<512x16xf32>
    %c0_19 = arith.constant 0 : index
    %c0_20 = arith.constant 0 : index
    %44 = vector.load %arg3[%c0_19, %c0_20] : memref<16x16xf32, #tpu.memory_space<vmem>>, vector<16x16xf32>
    %cst_21 = arith.constant dense<0.000000e+00> : vector<512x16xf32>
    %45 = tpu.matmul %43, %44, %cst_21 {dimension_numbers = #tpu.dot_dimension_numbers<[1], [0], [0], [1], [0, 0, 1, 1], [], []>} : vector<512x16xf32>, vector<16x16xf32>, vector<512x16xf32> -> vector<512x16xf32>
    %c0_22 = arith.constant 0 : index
    %c0_23 = arith.constant 0 : index
    %46 = vector.load %arg4[%c0_22, %c0_23] : memref<512x16xf32, #tpu.memory_space<vmem>>, vector<512x16xf32>
    tpu.vector_store %arg4[%c0_22, %c0_23], %45 {strides = array<i32>} : memref<512x16xf32, #tpu.memory_space<vmem>>, vector<512x16xf32>,
    return
  }
  func.func @transform_0(%arg0: i32) -> (i32, i32) {
    %c0_i32 = arith.constant 0 : i32
    %c0_i32_0 = arith.constant 0 : i32
    return %arg0, %c0_i32 : i32, i32
  }
  func.func @transform_1(%arg0: i32) -> (i32, i32) {
    %c0_i32 = arith.constant 0 : i32
    %c0_i32_0 = arith.constant 0 : i32
    %c0_i32_1 = arith.constant 0 : i32
    return %c0_i32, %c0_i32_0 : i32, i32
  }
  func.func @transform_2(%arg0: i32) -> (i32, i32) {
    %c0_i32 = arith.constant 0 : i32
    %c0_i32_0 = arith.constant 0 : i32
    %c0_i32_1 = arith.constant 0 : i32
    return %c0_i32, %c0_i32_0 : i32, i32
  }
  func.func @transform_3(%arg0: i32) -> (i32, i32) {
    %c0_i32 = arith.constant 0 : i32
    %c0_i32_0 = arith.constant 0 : i32
    return %arg0, %c0_i32 : i32, i32
  }
}

</mosaic_0001>

<llo_original>
// kernel: tpu_custom_call.1
$region0: #{tpu_custom_call.1}
  #allocation0 [shape = 'u32[]', space=smem, size = 0x4, offset = 0x4, fixed_abs, tag = 'smem constant byte address 0x4 - core index']
  #allocation1 [shape = 'u32[144,128]{1,0:T(1,128)}', space=vmem, size = 0x12000, scoped, tag = 'internal scratch']
  %s0 = inlined_call_operand.hbm [shape: f32[512,16], index: 0, kind: input, shape index: {}]
  %s1 = inlined_call_operand.hbm [shape: f32[16,16], index: 1, kind: input, shape index: {}]
  %s2 = inlined_call_operand.hbm [shape: f32[16,16], index: 2, kind: input, shape index: {}]
  %s3 = inlined_call_operand.hbm [shape: f32[512,16], index: 3, kind: output, shape index: {}]
  %s4 = sld [smem:[#allocation0]]
  $region34: #{tpu_custom_call.1} parent=0
    _
  %s6 = ssub.s32 1, %s4
  %s7 = scalar_select 0, %s6, %s4
  $region1: #{tpu_custom_call.1} parent=0
    #allocation2 [shape = 'u8[262144]{0}', space=vmem, size = 0x40000, scoped, tag = 'input window, operand 0, single buffered']
    #allocation3 [shape = 's32[1]{0}', space=sflag, size = 0x4, scoped, tag = 'scoped memory for tpu_custom_call.1']
    #allocation4 [shape = 's32[1]{0}', space=sflag, size = 0x4, scoped, tag = 'scoped memory for tpu_custom_call.1']
    #allocation5 [shape = 'u8[8192]{0}', space=vmem, size = 0x2000, scoped, tag = 'input window, operand 1, single buffered']
    #allocation6 [shape = 's32[1]{0}', space=sflag, size = 0x4, scoped, tag = 'scoped memory for tpu_custom_call.1']
    #allocation7 [shape = 'u8[8192]{0}', space=vmem, size = 0x2000, scoped, tag = 'input window, operand 2, single buffered']
    #allocation8 [shape = 'u8[262144]{0}', space=vmem, size = 0x40000, scoped, tag = 'output window, operand 0, single buffered']
    %8 = vsyncpa [#allocation3], 0
    %9 = vsyncpa [#allocation6], 0
    %10 = vsyncpa [#allocation4], 0
    // Predicated region
    $region2: #{tpu_custom_call.1} parent=1 // pred_check
      _
    $region3: #{tpu_custom_call.1} parent=1 // pred_check_branch
      %12 = sbr.rel (0) target = $region5
    $region4: #{tpu_custom_call.1} parent=1 // pred_region
      %s14 = ssub.s32 8192, 8192
      %15 = vsyncadd [#allocation3], %s14
      %s16 = sshll.u32 [#allocation2], 4
      %s17 = int_to_ptr.vmem [resolvable:$true] %s16
      %22 = dma.hbm_to_vmem [thread:$0]  %s0, 8192, %s17, [#allocation3], 128, 128, 8
    $region5: #{tpu_custom_call.1} parent=1 // pred_fallthru
      _
    // Predicated region
    $region6: #{tpu_custom_call.1} parent=1 // pred_check
      _
    $region7: #{tpu_custom_call.1} parent=1 // pred_check_branch
      %24 = sbr.rel (0) target = $region9
    $region8: #{tpu_custom_call.1} parent=1 // pred_region
      %s26 = ssub.s32 256, 256
      %27 = vsyncadd [#allocation6], %s26
      %s28 = sshll.u32 [#allocation5], 4
      %s29 = int_to_ptr.vmem [resolvable:$true] %s28
      %34 = dma.hbm_to_vmem [thread:$0]  %s1, 256, %s29, [#allocation6], 128, 128, 8
    $region9: #{tpu_custom_call.1} parent=1 // pred_fallthru
      _
    // Predicated region
    $region10: #{tpu_custom_call.1} parent=1 // pred_check
      _
    $region11: #{tpu_custom_call.1} parent=1 // pred_check_branch
      %36 = sbr.rel (0) target = $region13
    $region12: #{tpu_custom_call.1} parent=1 // pred_region
      %s38 = ssub.s32 256, 256
      %39 = vsyncadd [#allocation6], %s38
      %s40 = sshll.u32 [#allocation7], 4
      %s41 = int_to_ptr.vmem [resolvable:$true] %s40
      %46 = dma.hbm_to_vmem [thread:$0]  %s2, 256, %s41, [#allocation6], 128, 128, 8
    $region13: #{tpu_custom_call.1} parent=1 // pred_fallthru
      _
    // Predicated region
    $region14: #{tpu_custom_call.1} parent=1 // pred_check
      _
    $region15: #{tpu_custom_call.1} parent=1 // pred_check_branch
      %48 = sbr.rel (0) target = $region17
    $region16: #{tpu_custom_call.1} parent=1 // pred_region
      %49 = dma.done [#allocation3], 8192
    $region17: #{tpu_custom_call.1} parent=1 // pred_fallthru
      _
    // Predicated region
    $region18: #{tpu_custom_call.1} parent=1 // pred_check
      _
    $region19: #{tpu_custom_call.1} parent=1 // pred_check_branch
      %51 = sbr.rel (0) target = $region21
    $region20: #{tpu_custom_call.1} parent=1 // pred_region
      %52 = dma.done [#allocation6], 256
    $region21: #{tpu_custom_call.1} parent=1 // pred_fallthru
      _
    // Predicated region
    $region22: #{tpu_custom_call.1} parent=1 // pred_check
      _
    $region23: #{tpu_custom_call.1} parent=1 // pred_check_branch
      %54 = sbr.rel (0) target = $region25
    $region24: #{tpu_custom_call.1} parent=1 // pred_region
      %55 = dma.done [#allocation6], 256
    $region25: #{tpu_custom_call.1} parent=1 // pred_fallthru
      _
    %v56 = vld [vmem:[#allocation2] sm:$0xff]
    %v57 = vld [vmem:[#allocation2 + $0x8] sm:$0xff]
    %v58 = vld [vmem:[#allocation2 + $0x10] sm:$0xff]
    %v59 = vld [vmem:[#allocation2 + $0x18] sm:$0xff]
    %v60 = vld [vmem:[#allocation2 + $0x20] sm:$0xff]
    %v61 = vld [vmem:[#allocation2 + $0x28] sm:$0xff]
    %v62 = vld [vmem:[#allocation2 + $0x30] sm:$0xff]
    %v63 = vld [vmem:[#allocation2 + $0x38] sm:$0xff]
    %v64 = vld [vmem:[#allocation2 + $0x40] sm:$0xff]
    %v65 = vld [vmem:[#allocation2 + $0x48] sm:$0xff]
    %v66 = vld [vmem:[#allocation2 + $0x50] sm:$0xff]
    %v67 = vld [vmem:[#allocation2 + $0x58] sm:$0xff]
    %v68 = vld [vmem:[#allocation2 + $0x60] sm:$0xff]
    %v69 = vld [vmem:[#allocation2 + $0x68] sm:$0xff]
    %v70 = vld [vmem:[#allocation2 + $0x70] sm:$0xff]
    %v71 = vld [vmem:[#allocation2 + $0x78] sm:$0xff]
    %v72 = vld [vmem:[#allocation2 + $0x80] sm:$0xff]
    %v73 = vld [vmem:[#allocation2 + $0x88] sm:$0xff]
    %v74 = vld [vmem:[#allocation2 + $0x90] sm:$0xff]
    %v75 = vld [vmem:[#allocation2 + $0x98] sm:$0xff]
    %v76 = vld [vmem:[#allocation2 + $0xa0] sm:$0xff]
    %v77 = vld [vmem:[#allocation2 + $0xa8] sm:$0xff]
    %v78 = vld [vmem:[#allocation2 + $0xb0] sm:$0xff]
    %v79 = vld [vmem:[#allocation2 + $0xb8] sm:$0xff]
    %v80 = vld [vmem:[#allocation2 + $0xc0] sm:$0xff]
    %v81 = vld [vmem:[#allocation2 + $0xc8] sm:$0xff]
    %v82 = vld [vmem:[#allocation2 + $0xd0] sm:$0xff]
    %v83 = vld [vmem:[#allocation2 + $0xd8] sm:$0xff]
    %v84 = vld [vmem:[#allocation2 + $0xe0] sm:$0xff]
    %v85 = vld [vmem:[#allocation2 + $0xe8] sm:$0xff]
    %v86 = vld [vmem:[#allocation2 + $0xf0] sm:$0xff]
    %v87 = vld [vmem:[#allocation2 + $0xf8] sm:$0xff]
    %v88 = vld [vmem:[#allocation2 + $0x100] sm:$0xff]
    %v89 = vld [vmem:[#allocation2 + $0x108] sm:$0xff]
    %v90 = vld [vmem:[#allocation2 + $0x110] sm:$0xff]
    %v91 = vld [vmem:[#allocation2 + $0x118] sm:$0xff]
    %v92 = vld [vmem:[#allocation2 + $0x120] sm:$0xff]
    %v93 = vld [vmem:[#allocation2 + $0x128] sm:$0xff]
    %v94 = vld [vmem:[#allocation2 + $0x130] sm:$0xff]
    %v95 = vld [vmem:[#allocation2 + $0x138] sm:$0xff]
    %v96 = vld [vmem:[#allocation2 + $0x140] sm:$0xff]
    %v97 = vld [vmem:[#allocation2 + $0x148] sm:$0xff]
    %v98 = vld [vmem:[#allocation2 + $0x150] sm:$0xff]
    %v99 = vld [vmem:[#allocation2 + $0x158] sm:$0xff]
    %v100 = vld [vmem:[#allocation2 + $0x160] sm:$0xff]
    %v101 = vld [vmem:[#allocation2 + $0x168] sm:$0xff]
    %v102 = vld [vmem:[#allocation2 + $0x170] sm:$0xff]
    %v103 = vld [vmem:[#allocation2 + $0x178] sm:$0xff]
    %v104 = vld [vmem:[#allocation2 + $0x180] sm:$0xff]
    %v105 = vld [vmem:[#allocation2 + $0x188] sm:$0xff]
    %v106 = vld [vmem:[#allocation2 + $0x190] sm:$0xff]
    %v107 = vld [vmem:[#allocation2 + $0x198] sm:$0xff]
    %v108 = vld [vmem:[#allocation2 + $0x1a0] sm:$0xff]
    %v109 = vld [vmem:[#allocation2 + $0x1a8] sm:$0xff]
    %v110 = vld [vmem:[#allocation2 + $0x1b0] sm:$0xff]
    %v111 = vld [vmem:[#allocation2 + $0x1b8] sm:$0xff]
    %v112 = vld [vmem:[#allocation2 + $0x1c0] sm:$0xff]
    %v113 = vld [vmem:[#allocation2 + $0x1c8] sm:$0xff]
    %v114 = vld [vmem:[#allocation2 + $0x1d0] sm:$0xff]
    %v115 = vld [vmem:[#allocation2 + $0x1d8] sm:$0xff]
    %v116 = vld [vmem:[#allocation2 + $0x1e0] sm:$0xff]
    %v117 = vld [vmem:[#allocation2 + $0x1e8] sm:$0xff]
    %v118 = vld [vmem:[#allocation2 + $0x1f0] sm:$0xff]
    %v119 = vld [vmem:[#allocation2 + $0x1f8] sm:$0xff]
    %v120 = vld [vmem:[#allocation5] sm:$0xff]
    %v121 = vld [vmem:[#allocation5 + $0x8] sm:$0xff]
    %vm122 = vcmask 130048
    %v124 = vsel %vm122, %v56, 0
    %v127 = vsel %vm122, %v57, 0
    %v130 = vsel %vm122, %v58, 0
    %v133 = vsel %vm122, %v59, 0
    %v136 = vsel %vm122, %v60, 0
    %v139 = vsel %vm122, %v61, 0
    %v142 = vsel %vm122, %v62, 0
    %v145 = vsel %vm122, %v63, 0
    %v148 = vsel %vm122, %v64, 0
    %v151 = vsel %vm122, %v65, 0
    %v154 = vsel %vm122, %v66, 0
    %v157 = vsel %vm122, %v67, 0
    %v160 = vsel %vm122, %v68, 0
    %v163 = vsel %vm122, %v69, 0
    %v166 = vsel %vm122, %v70, 0
    %v169 = vsel %vm122, %v71, 0
    %v172 = vsel %vm122, %v72, 0
    %v175 = vsel %vm122, %v73, 0
    %v178 = vsel %vm122, %v74, 0
    %v181 = vsel %vm122, %v75, 0
    %v184 = vsel %vm122, %v76, 0
    %v187 = vsel %vm122, %v77, 0
    %v190 = vsel %vm122, %v78, 0
    %v193 = vsel %vm122, %v79, 0
    %v196 = vsel %vm122, %v80, 0
    %v199 = vsel %vm122, %v81, 0
    %v202 = vsel %vm122, %v82, 0
    %v205 = vsel %vm122, %v83, 0
    %v208 = vsel %vm122, %v84, 0
    %v211 = vsel %vm122, %v85, 0
    %v214 = vsel %vm122, %v86, 0
    %v217 = vsel %vm122, %v87, 0
    %v220 = vsel %vm122, %v88, 0
    %v223 = vsel %vm122, %v89, 0
    %v226 = vsel %vm122, %v90, 0
    %v229 = vsel %vm122, %v91, 0
    %v232 = vsel %vm122, %v92, 0
    %v235 = vsel %vm122, %v93, 0
    %v238 = vsel %vm122, %v94, 0
    %v241 = vsel %vm122, %v95, 0
    %v244 = vsel %vm122, %v96, 0
    %v247 = vsel %vm122, %v97, 0
    %v250 = vsel %vm122, %v98, 0
    %v253 = vsel %vm122, %v99, 0
    %v256 = vsel %vm122, %v100, 0
    %v259 = vsel %vm122, %v101, 0
    %v262 = vsel %vm122, %v102, 0
    %v265 = vsel %vm122, %v103, 0
    %v268 = vsel %vm122, %v104, 0
    %v271 = vsel %vm122, %v105, 0
    %v274 = vsel %vm122, %v106, 0
    %v277 = vsel %vm122, %v107, 0
    %v280 = vsel %vm122, %v108, 0
    %v283 = vsel %vm122, %v109, 0
    %v286 = vsel %vm122, %v110, 0
    %v289 = vsel %vm122, %v111, 0
    %v292 = vsel %vm122, %v112, 0
    %v295 = vsel %vm122, %v113, 0
    %v298 = vsel %vm122, %v114, 0
    %v301 = vsel %vm122, %v115, 0
    %v304 = vsel %vm122, %v116, 0
    %v307 = vsel %vm122, %v117, 0
    %v310 = vsel %vm122, %v118, 0
    %v313 = vsel %vm122, %v119, 0
    %315 = vmatprep.subr.mxu0 0.0
    %316 = vmatpush1.msra.mxu0 %v120
    %317 = vmatprep.subr.mxu0 0.0
    %318 = vmatpush1.msra.mxu0 %v121
    %319 = vmatprep.subr.mxu0 0.0
    %320 = vmatpush1.msra.mxu0 0.0
    %321 = vmatprep.subr.mxu0 0.0
    %322 = vmatpush1.msra.mxu0 0.0
    %323 = vmatprep.subr.mxu0 0.0
    %324 = vmatpush1.msra.mxu0 0.0
    %325 = vmatprep.subr.mxu0 0.0
    %326 = vmatpush1.msra.mxu0 0.0
    %327 = vmatprep.subr.mxu0 0.0
    %328 = vmatpush1.msra.mxu0 0.0
    %329 = vmatprep.subr.mxu0 0.0
    %330 = vmatpush1.msra.mxu0 0.0
    %331 = vmatprep.subr.mxu0 0.0
    %332 = vmatpush1.msra.mxu0 0.0
    %333 = vmatprep.subr.mxu0 0.0
    %334 = vmatpush1.msra.mxu0 0.0
    %335 = vmatprep.subr.mxu0 0.0
    %336 = vmatpush1.msra.mxu0 0.0
    %337 = vmatprep.subr.mxu0 0.0
    %338 = vmatpush1.msra.mxu0 0.0
    %339 = vmatprep.subr.mxu0 0.0
    %340 = vmatpush1.msra.mxu0 0.0
    %341 = vmatprep.subr.mxu0 0.0
    %342 = vmatpush1.msra.mxu0 0.0
    %343 = vmatprep.subr.mxu0 0.0
    %344 = vmatpush1.msra.mxu0 0.0
    %345 = vmatprep.subr.mxu0 0.0
    %346 = vmatpush1.msra.mxu0 0.0
    %347 = vmatprep.subr.mxu0 0.0
    %348 = vmatpush1.msra.mxu0 0.0
    %349 = vmatprep.subr.mxu0 0.0
    %350 = vmatpush1.msra.mxu0 0.0
    %351 = vmatprep.subr.mxu0 0.0
    %352 = vmatpush1.msra.mxu0 0.0
    %353 = vmatprep.subr.mxu0 0.0
    %354 = vmatpush1.msra.mxu0 0.0
    %355 = vmatprep.subr.mxu0 0.0
    %356 = vmatpush1.msra.mxu0 0.0
    %357 = vmatprep.subr.mxu0 0.0
    %358 = vmatpush1.msra.mxu0 0.0
    %359 = vmatprep.subr.mxu0 0.0
    %360 = vmatpush1.msra.mxu0 0.0
    %361 = vmatprep.subr.mxu0 0.0
    %362 = vmatpush1.msra.mxu0 0.0
    %363 = vmatprep.subr.mxu0 0.0
    %364 = vmatpush1.msra.mxu0 0.0
    %365 = vmatprep.subr.mxu0 0.0
    %366 = vmatpush1.msra.mxu0 0.0
    %367 = vmatprep.subr.mxu0 0.0
    %368 = vmatpush1.msra.mxu0 0.0
    %369 = vmatprep.subr.mxu0 0.0
    %370 = vmatpush1.msra.mxu0 0.0
    %371 = vmatprep.subr.mxu0 0.0
    %372 = vmatpush1.msra.mxu0 0.0
    %373 = vmatprep.subr.mxu0 0.0
    %374 = vmatpush1.msra.mxu0 0.0
    %375 = vmatprep.subr.mxu0 0.0
    %376 = vmatpush1.msra.mxu0 0.0
    %377 = vmatprep.subr.mxu0 0.0
    %378 = vmatpush1.msra.mxu0 0.0
    %379 = vmatprep.mubr.f32.mxu0 0.0
    %380 = vmatmul.mubr.f32.gmra.mrb[0].mxu0 %v124
    %v381 = vpop.f32.mrb[0].mxu0
    %v382 = vadd.f32 0.0, %v381
    %v383 = vpop.f32.mrb[0].mxu0
    %384 = vmatprep.mubr.f32.mxu0 0.0
    %385 = vmatmul.mubr.f32.gmra.mrb[0].mxu0 %v127
    %v386 = vpop.f32.mrb[0].mxu0
    %v387 = vadd.f32 0.0, %v386
    %v388 = vpop.f32.mrb[0].mxu0
    %389 = vmatprep.mubr.f32.mxu0 0.0
    %390 = vmatmul.mubr.f32.gmra.mrb[0].mxu0 %v130
    %v391 = vpop.f32.mrb[0].mxu0
    %v392 = vadd.f32 0.0, %v391
    %v393 = vpop.f32.mrb[0].mxu0
    %394 = vmatprep.mubr.f32.mxu0 0.0
    %395 = vmatmul.mubr.f32.gmra.mrb[0].mxu0 %v133
    %v396 = vpop.f32.mrb[0].mxu0
    %v397 = vadd.f32 0.0, %v396
    %v398 = vpop.f32.mrb[0].mxu0
    %399 = vmatprep.mubr.f32.mxu0 0.0
    %400 = vmatmul.mubr.f32.gmra.mrb[0].mxu0 %v136
    %v401 = vpop.f32.mrb[0].mxu0
    %v402 = vadd.f32 0.0, %v401
    %v403 = vpop.f32.mrb[0].mxu0
    %404 = vmatprep.mubr.f32.mxu0 0.0
    %405 = vmatmul.mubr.f32.gmra.mrb[0].mxu0 %v139
    %v406 = vpop.f32.mrb[0].mxu0
    %v407 = vadd.f32 0.0, %v406
    %v408 = vpop.f32.mrb[0].mxu0
    %409 = vmatprep.mubr.f32.mxu0 0.0
    %410 = vmatmul.mubr.f32.gmra.mrb[0].mxu0 %v142
    %v411 = vpop.f32.mrb[0].mxu0
    %v412 = vadd.f32 0.0, %v411
    %v413 = vpop.f32.mrb[0].mxu0
    %414 = vmatprep.mubr.f32.mxu0 0.0
    %415 = vmatmul.mubr.f32.gmra.mrb[0].mxu0 %v145
    %v416 = vpop.f32.mrb[0].mxu0
    %v417 = vadd.f32 0.0, %v416
    %v418 = vpop.f32.mrb[0].mxu0
    %419 = vmatprep.mubr.f32.mxu0 0.0
    %420 = vmatmul.mubr.f32.gmra.mrb[0].mxu0 %v148
    %v421 = vpop.f32.mrb[0].mxu0
    %v422 = vadd.f32 0.0, %v421
    %v423 = vpop.f32.mrb[0].mxu0
    %424 = vmatprep.mubr.f32.mxu0 0.0
    %425 = vmatmul.mubr.f32.gmra.mrb[0].mxu0 %v151
    %v426 = vpop.f32.mrb[0].mxu0
    %v427 = vadd.f32 0.0, %v426
    %v428 = vpop.f32.mrb[0].mxu0
    %429 = vmatprep.mubr.f32.mxu0 0.0
    %430 = vmatmul.mubr.f32.gmra.mrb[0].mxu0 %v154
    %v431 = vpop.f32.mrb[0].mxu0
    %v432 = vadd.f32 0.0, %v431
    %v433 = vpop.f32.mrb[0].mxu0
    %434 = vmatprep.mubr.f32.mxu0 0.0
    %435 = vmatmul.mubr.f32.gmra.mrb[0].mxu0 %v157
    %v436 = vpop.f32.mrb[0].mxu0
    %v437 = vadd.f32 0.0, %v436
    %v438 = vpop.f32.mrb[0].mxu0
    %439 = vmatprep.mubr.f32.mxu0 0.0
    %440 = vmatmul.mubr.f32.gmra.mrb[0].mxu0 %v160
    %v441 = vpop.f32.mrb[0].mxu0
    %v442 = vadd.f32 0.0, %v441
    %v443 = vpop.f32.mrb[0].mxu0
    %444 = vmatprep.mubr.f32.mxu0 0.0
    %445 = vmatmul.mubr.f32.gmra.mrb[0].mxu0 %v163
    %v446 = vpop.f32.mrb[0].mxu0
    %v447 = vadd.f32 0.0, %v446
    %v448 = vpop.f32.mrb[0].mxu0
    %449 = vmatprep.mubr.f32.mxu0 0.0
    %450 = vmatmul.mubr.f32.gmra.mrb[0].mxu0 %v166
    %v451 = vpop.f32.mrb[0].mxu0
    %v452 = vadd.f32 0.0, %v451
    %v453 = vpop.f32.mrb[0].mxu0
    %454 = vmatprep.mubr.f32.mxu0 0.0
    %455 = vmatmul.mubr.f32.gmra.mrb[0].mxu0 %v169
    %v456 = vpop.f32.mrb[0].mxu0
    %v457 = vadd.f32 0.0, %v456
    %v458 = vpop.f32.mrb[0].mxu0
    %459 = vmatprep.mubr.f32.mxu0 0.0
    %460 = vmatmul.mubr.f32.gmra.mrb[0].mxu0 %v172
    %v461 = vpop.f32.mrb[0].mxu0
    %v462 = vadd.f32 0.0, %v461
    %v463 = vpop.f32.mrb[0].mxu0
    %464 = vmatprep.mubr.f32.mxu0 0.0
    %465 = vmatmul.mubr.f32.gmra.mrb[0].mxu0 %v175
    %v466 = vpop.f32.mrb[0].mxu0
    %v467 = vadd.f32 0.0, %v466
    %v468 = vpop.f32.mrb[0].mxu0
    %469 = vmatprep.mubr.f32.mxu0 0.0
    %470 = vmatmul.mubr.f32.gmra.mrb[0].mxu0 %v178
    %v471 = vpop.f32.mrb[0].mxu0
    %v472 = vadd.f32 0.0, %v471
    %v473 = vpop.f32.mrb[0].mxu0
    %474 = vmatprep.mubr.f32.mxu0 0.0
    %475 = vmatmul.mubr.f32.gmra.mrb[0].mxu0 %v181
    %v476 = vpop.f32.mrb[0].mxu0
    %v477 = vadd.f32 0.0, %v476
    %v478 = vpop.f32.mrb[0].mxu0
    %479 = vmatprep.mubr.f32.mxu0 0.0
    %480 = vmatmul.mubr.f32.gmra.mrb[0].mxu0 %v184
    %v481 = vpop.f32.mrb[0].mxu0
    %v482 = vadd.f32 0.0, %v481
    %v483 = vpop.f32.mrb[0].mxu0
    %484 = vmatprep.mubr.f32.mxu0 0.0
    %485 = vmatmul.mubr.f32.gmra.mrb[0].mxu0 %v187
    %v486 = vpop.f32.mrb[0].mxu0
    %v487 = vadd.f32 0.0, %v486
    %v488 = vpop.f32.mrb[0].mxu0
    %489 = vmatprep.mubr.f32.mxu0 0.0
    %490 = vmatmul.mubr.f32.gmra.mrb[0].mxu0 %v190
    %v491 = vpop.f32.mrb[0].mxu0
    %v492 = vadd.f32 0.0, %v491
    %v493 = vpop.f32.mrb[0].mxu0
    %494 = vmatprep.mubr.f32.mxu0 0.0
    %495 = vmatmul.mubr.f32.gmra.mrb[0].mxu0 %v193
    %v496 = vpop.f32.mrb[0].mxu0
    %v497 = vadd.f32 0.0, %v496
    %v498 = vpop.f32.mrb[0].mxu0
    %499 = vmatprep.mubr.f32.mxu0 0.0
    %500 = vmatmul.mubr.f32.gmra.mrb[0].mxu0 %v196
    %v501 = vpop.f32.mrb[0].mxu0
    %v502 = vadd.f32 0.0, %v501
    %v503 = vpop.f32.mrb[0].mxu0
    %504 = vmatprep.mubr.f32.mxu0 0.0
    %505 = vmatmul.mubr.f32.gmra.mrb[0].mxu0 %v199
    %v506 = vpop.f32.mrb[0].mxu0
    %v507 = vadd.f32 0.0, %v506
    %v508 = vpop.f32.mrb[0].mxu0
    %509 = vmatprep.mubr.f32.mxu0 0.0
    %510 = vmatmul.mubr.f32.gmra.mrb[0].mxu0 %v202
    %v511 = vpop.f32.mrb[0].mxu0
    %v512 = vadd.f32 0.0, %v511
    %v513 = vpop.f32.mrb[0].mxu0
    %514 = vmatprep.mubr.f32.mxu0 0.0
    %515 = vmatmul.mubr.f32.gmra.mrb[0].mxu0 %v205
    %v516 = vpop.f32.mrb[0].mxu0
    %v517 = vadd.f32 0.0, %v516
    %v518 = vpop.f32.mrb[0].mxu0
    %519 = vmatprep.mubr.f32.mxu0 0.0
    %520 = vmatmul.mubr.f32.gmra.mrb[0].mxu0 %v208
    %v521 = vpop.f32.mrb[0].mxu0
    %v522 = vadd.f32 0.0, %v521
    %v523 = vpop.f32.mrb[0].mxu0
    %524 = vmatprep.mubr.f32.mxu0 0.0
    %525 = vmatmul.mubr.f32.gmra.mrb[0].mxu0 %v211
    %v526 = vpop.f32.mrb[0].mxu0
    %v527 = vadd.f32 0.0, %v526
    %v528 = vpop.f32.mrb[0].mxu0
    %529 = vmatprep.mubr.f32.mxu0 0.0
    %530 = vmatmul.mubr.f32.gmra.mrb[0].mxu0 %v214
    %v531 = vpop.f32.mrb[0].mxu0
    %v532 = vadd.f32 0.0, %v531
    %v533 = vpop.f32.mrb[0].mxu0
    %534 = vmatprep.mubr.f32.mxu0 0.0
    %535 = vmatmul.mubr.f32.gmra.mrb[0].mxu0 %v217
    %v536 = vpop.f32.mrb[0].mxu0
    %v537 = vadd.f32 0.0, %v536
    %v538 = vpop.f32.mrb[0].mxu0
    %539 = vmatprep.mubr.f32.mxu0 0.0
    %540 = vmatmul.mubr.f32.gmra.mrb[0].mxu0 %v220
    %v541 = vpop.f32.mrb[0].mxu0
    %v542 = vadd.f32 0.0, %v541
    %v543 = vpop.f32.mrb[0].mxu0
    %544 = vmatprep.mubr.f32.mxu0 0.0
    %545 = vmatmul.mubr.f32.gmra.mrb[0].mxu0 %v223
    %v546 = vpop.f32.mrb[0].mxu0
    %v547 = vadd.f32 0.0, %v546
    %v548 = vpop.f32.mrb[0].mxu0
    %549 = vmatprep.mubr.f32.mxu0 0.0
    %550 = vmatmul.mubr.f32.gmra.mrb[0].mxu0 %v226
    %v551 = vpop.f32.mrb[0].mxu0
    %v552 = vadd.f32 0.0, %v551
    %v553 = vpop.f32.mrb[0].mxu0
    %554 = vmatprep.mubr.f32.mxu0 0.0
    %555 = vmatmul.mubr.f32.gmra.mrb[0].mxu0 %v229
    %v556 = vpop.f32.mrb[0].mxu0
    %v557 = vadd.f32 0.0, %v556
    %v558 = vpop.f32.mrb[0].mxu0
    %559 = vmatprep.mubr.f32.mxu0 0.0
    %560 = vmatmul.mubr.f32.gmra.mrb[0].mxu0 %v232
    %v561 = vpop.f32.mrb[0].mxu0
    %v562 = vadd.f32 0.0, %v561
    %v563 = vpop.f32.mrb[0].mxu0
    %564 = vmatprep.mubr.f32.mxu0 0.0
    %565 = vmatmul.mubr.f32.gmra.mrb[0].mxu0 %v235
    %v566 = vpop.f32.mrb[0].mxu0
    %v567 = vadd.f32 0.0, %v566
    %v568 = vpop.f32.mrb[0].mxu0
    %569 = vmatprep.mubr.f32.mxu0 0.0
    %570 = vmatmul.mubr.f32.gmra.mrb[0].mxu0 %v238
    %v571 = vpop.f32.mrb[0].mxu0
    %v572 = vadd.f32 0.0, %v571
    %v573 = vpop.f32.mrb[0].mxu0
    %574 = vmatprep.mubr.f32.mxu0 0.0
    %575 = vmatmul.mubr.f32.gmra.mrb[0].mxu0 %v241
    %v576 = vpop.f32.mrb[0].mxu0
    %v577 = vadd.f32 0.0, %v576
    %v578 = vpop.f32.mrb[0].mxu0
    %579 = vmatprep.mubr.f32.mxu0 0.0
    %580 = vmatmul.mubr.f32.gmra.mrb[0].mxu0 %v244
    %v581 = vpop.f32.mrb[0].mxu0
    %v582 = vadd.f32 0.0, %v581
    %v583 = vpop.f32.mrb[0].mxu0
    %584 = vmatprep.mubr.f32.mxu0 0.0
    %585 = vmatmul.mubr.f32.gmra.mrb[0].mxu0 %v247
    %v586 = vpop.f32.mrb[0].mxu0
    %v587 = vadd.f32 0.0, %v586
    %v588 = vpop.f32.mrb[0].mxu0
    %589 = vmatprep.mubr.f32.mxu0 0.0
    %590 = vmatmul.mubr.f32.gmra.mrb[0].mxu0 %v250
    %v591 = vpop.f32.mrb[0].mxu0
    %v592 = vadd.f32 0.0, %v591
    %v593 = vpop.f32.mrb[0].mxu0
    %594 = vmatprep.mubr.f32.mxu0 0.0
    %595 = vmatmul.mubr.f32.gmra.mrb[0].mxu0 %v253
    %v596 = vpop.f32.mrb[0].mxu0
    %v597 = vadd.f32 0.0, %v596
    %v598 = vpop.f32.mrb[0].mxu0
    %599 = vmatprep.mubr.f32.mxu0 0.0
    %600 = vmatmul.mubr.f32.gmra.mrb[0].mxu0 %v256
    %v601 = vpop.f32.mrb[0].mxu0
    %v602 = vadd.f32 0.0, %v601
    %v603 = vpop.f32.mrb[0].mxu0
    %604 = vmatprep.mubr.f32.mxu0 0.0
    %605 = vmatmul.mubr.f32.gmra.mrb[0].mxu0 %v259
    %v606 = vpop.f32.mrb[0].mxu0
    %v607 = vadd.f32 0.0, %v606
    %v608 = vpop.f32.mrb[0].mxu0
    %609 = vmatprep.mubr.f32.mxu0 0.0
    %610 = vmatmul.mubr.f32.gmra.mrb[0].mxu0 %v262
    %v611 = vpop.f32.mrb[0].mxu0
    %v612 = vadd.f32 0.0, %v611
    %v613 = vpop.f32.mrb[0].mxu0
    %614 = vmatprep.mubr.f32.mxu0 0.0
    %615 = vmatmul.mubr.f32.gmra.mrb[0].mxu0 %v265
    %v616 = vpop.f32.mrb[0].mxu0
    %v617 = vadd.f32 0.0, %v616
    %v618 = vpop.f32.mrb[0].mxu0
    %619 = vmatprep.mubr.f32.mxu0 0.0
    %620 = vmatmul.mubr.f32.gmra.mrb[0].mxu0 %v268
    %v621 = vpop.f32.mrb[0].mxu0
    %v622 = vadd.f32 0.0, %v621
    %v623 = vpop.f32.mrb[0].mxu0
    %624 = vmatprep.mubr.f32.mxu0 0.0
    %625 = vmatmul.mubr.f32.gmra.mrb[0].mxu0 %v271
    %v626 = vpop.f32.mrb[0].mxu0
    %v627 = vadd.f32 0.0, %v626
    %v628 = vpop.f32.mrb[0].mxu0
    %629 = vmatprep.mubr.f32.mxu0 0.0
    %630 = vmatmul.mubr.f32.gmra.mrb[0].mxu0 %v274
    %v631 = vpop.f32.mrb[0].mxu0
    %v632 = vadd.f32 0.0, %v631
    %v633 = vpop.f32.mrb[0].mxu0
    %634 = vmatprep.mubr.f32.mxu0 0.0
    %635 = vmatmul.mubr.f32.gmra.mrb[0].mxu0 %v277
    %v636 = vpop.f32.mrb[0].mxu0
    %v637 = vadd.f32 0.0, %v636
    %v638 = vpop.f32.mrb[0].mxu0
    %639 = vmatprep.mubr.f32.mxu0 0.0
    %640 = vmatmul.mubr.f32.gmra.mrb[0].mxu0 %v280
    %v641 = vpop.f32.mrb[0].mxu0
    %v642 = vadd.f32 0.0, %v641
    %v643 = vpop.f32.mrb[0].mxu0
    %644 = vmatprep.mubr.f32.mxu0 0.0
    %645 = vmatmul.mubr.f32.gmra.mrb[0].mxu0 %v283
    %v646 = vpop.f32.mrb[0].mxu0
    %v647 = vadd.f32 0.0, %v646
    %v648 = vpop.f32.mrb[0].mxu0
    %649 = vmatprep.mubr.f32.mxu0 0.0
    %650 = vmatmul.mubr.f32.gmra.mrb[0].mxu0 %v286
    %v651 = vpop.f32.mrb[0].mxu0
    %v652 = vadd.f32 0.0, %v651
    %v653 = vpop.f32.mrb[0].mxu0
    %654 = vmatprep.mubr.f32.mxu0 0.0
    %655 = vmatmul.mubr.f32.gmra.mrb[0].mxu0 %v289
    %v656 = vpop.f32.mrb[0].mxu0
    %v657 = vadd.f32 0.0, %v656
    %v658 = vpop.f32.mrb[0].mxu0
    %659 = vmatprep.mubr.f32.mxu0 0.0
    %660 = vmatmul.mubr.f32.gmra.mrb[0].mxu0 %v292
    %v661 = vpop.f32.mrb[0].mxu0
    %v662 = vadd.f32 0.0, %v661
    %v663 = vpop.f32.mrb[0].mxu0
    %664 = vmatprep.mubr.f32.mxu0 0.0
    %665 = vmatmul.mubr.f32.gmra.mrb[0].mxu0 %v295
    %v666 = vpop.f32.mrb[0].mxu0
    %v667 = vadd.f32 0.0, %v666
    %v668 = vpop.f32.mrb[0].mxu0
    %669 = vmatprep.mubr.f32.mxu0 0.0
    %670 = vmatmul.mubr.f32.gmra.mrb[0].mxu0 %v298
    %v671 = vpop.f32.mrb[0].mxu0
    %v672 = vadd.f32 0.0, %v671
    %v673 = vpop.f32.mrb[0].mxu0
    %674 = vmatprep.mubr.f32.mxu0 0.0
    %675 = vmatmul.mubr.f32.gmra.mrb[0].mxu0 %v301
    %v676 = vpop.f32.mrb[0].mxu0
    %v677 = vadd.f32 0.0, %v676
    %v678 = vpop.f32.mrb[0].mxu0
    %679 = vmatprep.mubr.f32.mxu0 0.0
    %680 = vmatmul.mubr.f32.gmra.mrb[0].mxu0 %v304
    %v681 = vpop.f32.mrb[0].mxu0
    %v682 = vadd.f32 0.0, %v681
    %v683 = vpop.f32.mrb[0].mxu0
    %684 = vmatprep.mubr.f32.mxu0 0.0
    %685 = vmatmul.mubr.f32.gmra.mrb[0].mxu0 %v307
    %v686 = vpop.f32.mrb[0].mxu0
    %v687 = vadd.f32 0.0, %v686
    %v688 = vpop.f32.mrb[0].mxu0
    %689 = vmatprep.mubr.f32.mxu0 0.0
    %690 = vmatmul.mubr.f32.gmra.mrb[0].mxu0 %v310
    %v691 = vpop.f32.mrb[0].mxu0
    %v692 = vadd.f32 0.0, %v691
    %v693 = vpop.f32.mrb[0].mxu0
    %694 = vmatprep.mubr.f32.mxu0 0.0
    %695 = vmatmul.mubr.f32.gmra.mrb[0].mxu0 %v313
    %v696 = vpop.f32.mrb[0].mxu0
    %v697 = vadd.f32 0.0, %v696
    %v698 = vpop.f32.mrb[0].mxu0
    %699 = vdwg.mxu0
    %v700 = vmul.f32 %v382, 0.5
    %v701 = vmul.f32 %v387, 0.5
    %v702 = vmul.f32 %v392, 0.5
    %v703 = vmul.f32 %v397, 0.5
    %v704 = vmul.f32 %v402, 0.5
    %v705 = vmul.f32 %v407, 0.5
    %v706 = vmul.f32 %v412, 0.5
    %v707 = vmul.f32 %v417, 0.5
    %v708 = vmul.f32 %v422, 0.5
    %v709 = vmul.f32 %v427, 0.5
    %v710 = vmul.f32 %v432, 0.5
    %v711 = vmul.f32 %v437, 0.5
    %v712 = vmul.f32 %v442, 0.5
    %v713 = vmul.f32 %v447, 0.5
    %v714 = vmul.f32 %v452, 0.5
    %v715 = vmul.f32 %v457, 0.5
    %v716 = vmul.f32 %v462, 0.5
    %v717 = vmul.f32 %v467, 0.5
    %v718 = vmul.f32 %v472, 0.5
    %v719 = vmul.f32 %v477, 0.5
    %v720 = vmul.f32 %v482, 0.5
    %v721 = vmul.f32 %v487, 0.5
    %v722 = vmul.f32 %v492, 0.5
    %v723 = vmul.f32 %v497, 0.5
    %v724 = vmul.f32 %v502, 0.5
    %v725 = vmul.f32 %v507, 0.5
    %v726 = vmul.f32 %v512, 0.5
    %v727 = vmul.f32 %v517, 0.5
    %v728 = vmul.f32 %v522, 0.5
    %v729 = vmul.f32 %v527, 0.5
    %v730 = vmul.f32 %v532, 0.5
    %v731 = vmul.f32 %v537, 0.5
    %v732 = vmul.f32 %v542, 0.5
    %v733 = vmul.f32 %v547, 0.5
    %v734 = vmul.f32 %v552, 0.5
    %v735 = vmul.f32 %v557, 0.5
    %v736 = vmul.f32 %v562, 0.5
    %v737 = vmul.f32 %v567, 0.5
    %v738 = vmul.f32 %v572, 0.5
    %v739 = vmul.f32 %v577, 0.5
    %v740 = vmul.f32 %v582, 0.5
    %v741 = vmul.f32 %v587, 0.5
    %v742 = vmul.f32 %v592, 0.5
    %v743 = vmul.f32 %v597, 0.5
    %v744 = vmul.f32 %v602, 0.5
    %v745 = vmul.f32 %v607, 0.5
    %v746 = vmul.f32 %v612, 0.5
    %v747 = vmul.f32 %v617, 0.5
    %v748 = vmul.f32 %v622, 0.5
    %v749 = vmul.f32 %v627, 0.5
    %v750 = vmul.f32 %v632, 0.5
    %v751 = vmul.f32 %v637, 0.5
    %v752 = vmul.f32 %v642, 0.5
    %v753 = vmul.f32 %v647, 0.5
    %v754 = vmul.f32 %v652, 0.5
    %v755 = vmul.f32 %v657, 0.5
    %v756 = vmul.f32 %v662, 0.5
    %v757 = vmul.f32 %v667, 0.5
    %v758 = vmul.f32 %v672, 0.5
    %v759 = vmul.f32 %v677, 0.5
    %v760 = vmul.f32 %v682, 0.5
    %v761 = vmul.f32 %v687, 0.5
    %v762 = vmul.f32 %v692, 0.5
    %v763 = vmul.f32 %v697, 0.5
    %v764 = vmul.f32 %v382, 0.70710677
    %v765 = vmul.f32 %v387, 0.70710677
    %v766 = vmul.f32 %v392, 0.70710677
    %v767 = vmul.f32 %v397, 0.70710677
    %v768 = vmul.f32 %v402, 0.70710677
    %v769 = vmul.f32 %v407, 0.70710677
    %v770 = vmul.f32 %v412, 0.70710677
    %v771 = vmul.f32 %v417, 0.70710677
    %v772 = vmul.f32 %v422, 0.70710677
    %v773 = vmul.f32 %v427, 0.70710677
    %v774 = vmul.f32 %v432, 0.70710677
    %v775 = vmul.f32 %v437, 0.70710677
    %v776 = vmul.f32 %v442, 0.70710677
    %v777 = vmul.f32 %v447, 0.70710677
    %v778 = vmul.f32 %v452, 0.70710677
    %v779 = vmul.f32 %v457, 0.70710677
    %v780 = vmul.f32 %v462, 0.70710677
    %v781 = vmul.f32 %v467, 0.70710677
    %v782 = vmul.f32 %v472, 0.70710677
    %v783 = vmul.f32 %v477, 0.70710677
    %v784 = vmul.f32 %v482, 0.70710677
    %v785 = vmul.f32 %v487, 0.70710677
    %v786 = vmul.f32 %v492, 0.70710677
    %v787 = vmul.f32 %v497, 0.70710677
    %v788 = vmul.f32 %v502, 0.70710677
    %v789 = vmul.f32 %v507, 0.70710677
    %v790 = vmul.f32 %v512, 0.70710677
    %v791 = vmul.f32 %v517, 0.70710677
    %v792 = vmul.f32 %v522, 0.70710677
    %v793 = vmul.f32 %v527, 0.70710677
    %v794 = vmul.f32 %v532, 0.70710677
    %v795 = vmul.f32 %v537, 0.70710677
    %v796 = vmul.f32 %v542, 0.70710677
    %v797 = vmul.f32 %v547, 0.70710677
    %v798 = vmul.f32 %v552, 0.70710677
    %v799 = vmul.f32 %v557, 0.70710677
    %v800 = vmul.f32 %v562, 0.70710677
    %v801 = vmul.f32 %v567, 0.70710677
    %v802 = vmul.f32 %v572, 0.70710677
    %v803 = vmul.f32 %v577, 0.70710677
    %v804 = vmul.f32 %v582, 0.70710677
    %v805 = vmul.f32 %v587, 0.70710677
    %v806 = vmul.f32 %v592, 0.70710677
    %v807 = vmul.f32 %v597, 0.70710677
    %v808 = vmul.f32 %v602, 0.70710677
    %v809 = vmul.f32 %v607, 0.70710677
    %v810 = vmul.f32 %v612, 0.70710677
    %v811 = vmul.f32 %v617, 0.70710677
    %v812 = vmul.f32 %v622, 0.70710677
    %v813 = vmul.f32 %v627, 0.70710677
    %v814 = vmul.f32 %v632, 0.70710677
    %v815 = vmul.f32 %v637, 0.70710677
    %v816 = vmul.f32 %v642, 0.70710677
    %v817 = vmul.f32 %v647, 0.70710677
    %v818 = vmul.f32 %v652, 0.70710677
    %v819 = vmul.f32 %v657, 0.70710677
    %v820 = vmul.f32 %v662, 0.70710677
    %v821 = vmul.f32 %v667, 0.70710677
    %v822 = vmul.f32 %v672, 0.70710677
    %v823 = vmul.f32 %v677, 0.70710677
    %v824 = vmul.f32 %v682, 0.70710677
    %v825 = vmul.f32 %v687, 0.70710677
    %v826 = vmul.f32 %v692, 0.70710677
    %v827 = vmul.f32 %v697, 0.70710677
    %vm828 = vcmp.ge.f32.partialorder %v764, 0.0
    %vm829 = vcmp.ge.f32.partialorder %v765, 0.0
    %vm830 = vcmp.ge.f32.partialorder %v766, 0.0
    %vm831 = vcmp.ge.f32.partialorder %v767, 0.0
    %vm832 = vcmp.ge.f32.partialorder %v768, 0.0
    %vm833 = vcmp.ge.f32.partialorder %v769, 0.0
    %vm834 = vcmp.ge.f32.partialorder %v770, 0.0
    %vm835 = vcmp.ge.f32.partialorder %v771, 0.0
    %vm836 = vcmp.ge.f32.partialorder %v772, 0.0
    %vm837 = vcmp.ge.f32.partialorder %v773, 0.0
    %vm838 = vcmp.ge.f32.partialorder %v774, 0.0
    %vm839 = vcmp.ge.f32.partialorder %v775, 0.0
    %vm840 = vcmp.ge.f32.partialorder %v776, 0.0
    %vm841 = vcmp.ge.f32.partialorder %v777, 0.0
    %vm842 = vcmp.ge.f32.partialorder %v778, 0.0
    %vm843 = vcmp.ge.f32.partialorder %v779, 0.0
    %vm844 = vcmp.ge.f32.partialorder %v780, 0.0
    %vm845 = vcmp.ge.f32.partialorder %v781, 0.0
    %vm846 = vcmp.ge.f32.partialorder %v782, 0.0
    %vm847 = vcmp.ge.f32.partialorder %v783, 0.0
    %vm848 = vcmp.ge.f32.partialorder %v784, 0.0
    %vm849 = vcmp.ge.f32.partialorder %v785, 0.0
    %vm850 = vcmp.ge.f32.partialorder %v786, 0.0
    %vm851 = vcmp.ge.f32.partialorder %v787, 0.0
    %vm852 = vcmp.ge.f32.partialorder %v788, 0.0
    %vm853 = vcmp.ge.f32.partialorder %v789, 0.0
    %vm854 = vcmp.ge.f32.partialorder %v790, 0.0
    %vm855 = vcmp.ge.f32.partialorder %v791, 0.0
    %vm856 = vcmp.ge.f32.partialorder %v792, 0.0
    %vm857 = vcmp.ge.f32.partialorder %v793, 0.0
    %vm858 = vcmp.ge.f32.partialorder %v794, 0.0
    %vm859 = vcmp.ge.f32.partialorder %v795, 0.0
    %vm860 = vcmp.ge.f32.partialorder %v796, 0.0
    %vm861 = vcmp.ge.f32.partialorder %v797, 0.0
    %vm862 = vcmp.ge.f32.partialorder %v798, 0.0
    %vm863 = vcmp.ge.f32.partialorder %v799, 0.0
    %vm864 = vcmp.ge.f32.partialorder %v800, 0.0
    %vm865 = vcmp.ge.f32.partialorder %v801, 0.0
    %vm866 = vcmp.ge.f32.partialorder %v802, 0.0
    %vm867 = vcmp.ge.f32.partialorder %v803, 0.0
    %vm868 = vcmp.ge.f32.partialorder %v804, 0.0
    %vm869 = vcmp.ge.f32.partialorder %v805, 0.0
    %vm870 = vcmp.ge.f32.partialorder %v806, 0.0
    %vm871 = vcmp.ge.f32.partialorder %v807, 0.0
    %vm872 = vcmp.ge.f32.partialorder %v808, 0.0
    %vm873 = vcmp.ge.f32.partialorder %v809, 0.0
    %vm874 = vcmp.ge.f32.partialorder %v810, 0.0
    %vm875 = vcmp.ge.f32.partialorder %v811, 0.0
    %vm876 = vcmp.ge.f32.partialorder %v812, 0.0
    %vm877 = vcmp.ge.f32.partialorder %v813, 0.0
    %vm878 = vcmp.ge.f32.partialorder %v814, 0.0
    %vm879 = vcmp.ge.f32.partialorder %v815, 0.0
    %vm880 = vcmp.ge.f32.partialorder %v816, 0.0
    %vm881 = vcmp.ge.f32.partialorder %v817, 0.0
    %vm882 = vcmp.ge.f32.partialorder %v818, 0.0
    %vm883 = vcmp.ge.f32.partialorder %v819, 0.0
    %vm884 = vcmp.ge.f32.partialorder %v820, 0.0
    %vm885 = vcmp.ge.f32.partialorder %v821, 0.0
    %vm886 = vcmp.ge.f32.partialorder %v822, 0.0
    %vm887 = vcmp.ge.f32.partialorder %v823, 0.0
    %vm888 = vcmp.ge.f32.partialorder %v824, 0.0
    %vm889 = vcmp.ge.f32.partialorder %v825, 0.0
    %vm890 = vcmp.ge.f32.partialorder %v826, 0.0
    %vm891 = vcmp.ge.f32.partialorder %v827, 0.0
    %v892 = vsel %vm828, 1.0, -1.0
    %v893 = vsel %vm829, 1.0, -1.0
    %v894 = vsel %vm830, 1.0, -1.0
    %v895 = vsel %vm831, 1.0, -1.0
    %v896 = vsel %vm832, 1.0, -1.0
    %v897 = vsel %vm833, 1.0, -1.0
    %v898 = vsel %vm834, 1.0, -1.0
    %v899 = vsel %vm835, 1.0, -1.0
    %v900 = vsel %vm836, 1.0, -1.0
    %v901 = vsel %vm837, 1.0, -1.0
    %v902 = vsel %vm838, 1.0, -1.0
    %v903 = vsel %vm839, 1.0, -1.0
    %v904 = vsel %vm840, 1.0, -1.0
    %v905 = vsel %vm841, 1.0, -1.0
    %v906 = vsel %vm842, 1.0, -1.0
    %v907 = vsel %vm843, 1.0, -1.0
    %v908 = vsel %vm844, 1.0, -1.0
    %v909 = vsel %vm845, 1.0, -1.0
    %v910 = vsel %vm846, 1.0, -1.0
    %v911 = vsel %vm847, 1.0, -1.0
    %v912 = vsel %vm848, 1.0, -1.0
    %v913 = vsel %vm849, 1.0, -1.0
    %v914 = vsel %vm850, 1.0, -1.0
    %v915 = vsel %vm851, 1.0, -1.0
    %v916 = vsel %vm852, 1.0, -1.0
    %v917 = vsel %vm853, 1.0, -1.0
    %v918 = vsel %vm854, 1.0, -1.0
    %v919 = vsel %vm855, 1.0, -1.0
    %v920 = vsel %vm856, 1.0, -1.0
    %v921 = vsel %vm857, 1.0, -1.0
    %v922 = vsel %vm858, 1.0, -1.0
    %v923 = vsel %vm859, 1.0, -1.0
    %v924 = vsel %vm860, 1.0, -1.0
    %v925 = vsel %vm861, 1.0, -1.0
    %v926 = vsel %vm862, 1.0, -1.0
    %v927 = vsel %vm863, 1.0, -1.0
    %v928 = vsel %vm864, 1.0, -1.0
    %v929 = vsel %vm865, 1.0, -1.0
    %v930 = vsel %vm866, 1.0, -1.0
    %v931 = vsel %vm867, 1.0, -1.0
    %v932 = vsel %vm868, 1.0, -1.0
    %v933 = vsel %vm869, 1.0, -1.0
    %v934 = vsel %vm870, 1.0, -1.0
    %v935 = vsel %vm871, 1.0, -1.0
    %v936 = vsel %vm872, 1.0, -1.0
    %v937 = vsel %vm873, 1.0, -1.0
    %v938 = vsel %vm874, 1.0, -1.0
    %v939 = vsel %vm875, 1.0, -1.0
    %v940 = vsel %vm876, 1.0, -1.0
    %v941 = vsel %vm877, 1.0, -1.0
    %v942 = vsel %vm878, 1.0, -1.0
    %v943 = vsel %vm879, 1.0, -1.0
    %v944 = vsel %vm880, 1.0, -1.0
    %v945 = vsel %vm881, 1.0, -1.0
    %v946 = vsel %vm882, 1.0, -1.0
    %v947 = vsel %vm883, 1.0, -1.0
    %v948 = vsel %vm884, 1.0, -1.0
    %v949 = vsel %vm885, 1.0, -1.0
    %v950 = vsel %vm886, 1.0, -1.0
    %v951 = vsel %vm887, 1.0, -1.0
    %v952 = vsel %vm888, 1.0, -1.0
    %v953 = vsel %vm889, 1.0, -1.0
    %v954 = vsel %vm890, 1.0, -1.0
    %v955 = vsel %vm891, 1.0, -1.0
    %v956 = vand.u32 2147483647, %v764
    %v957 = vand.u32 2147483647, %v765
    %v958 = vand.u32 2147483647, %v766
    %v959 = vand.u32 2147483647, %v767
    %v960 = vand.u32 2147483647, %v768
    %v961 = vand.u32 2147483647, %v769
    %v962 = vand.u32 2147483647, %v770
    %v963 = vand.u32 2147483647, %v771
    %v964 = vand.u32 2147483647, %v772
    %v965 = vand.u32 2147483647, %v773
    %v966 = vand.u32 2147483647, %v774
    %v967 = vand.u32 2147483647, %v775
    %v968 = vand.u32 2147483647, %v776
    %v969 = vand.u32 2147483647, %v777
    %v970 = vand.u32 2147483647, %v778
    %v971 = vand.u32 2147483647, %v779
    %v972 = vand.u32 2147483647, %v780
    %v973 = vand.u32 2147483647, %v781
    %v974 = vand.u32 2147483647, %v782
    %v975 = vand.u32 2147483647, %v783
    %v976 = vand.u32 2147483647, %v784
    %v977 = vand.u32 2147483647, %v785
    %v978 = vand.u32 2147483647, %v786
    %v979 = vand.u32 2147483647, %v787
    %v980 = vand.u32 2147483647, %v788
    %v981 = vand.u32 2147483647, %v789
    %v982 = vand.u32 2147483647, %v790
    %v983 = vand.u32 2147483647, %v791
    %v984 = vand.u32 2147483647, %v792
    %v985 = vand.u32 2147483647, %v793
    %v986 = vand.u32 2147483647, %v794
    %v987 = vand.u32 2147483647, %v795
    %v988 = vand.u32 2147483647, %v796
    %v989 = vand.u32 2147483647, %v797
    %v990 = vand.u32 2147483647, %v798
    %v991 = vand.u32 2147483647, %v799
    %v992 = vand.u32 2147483647, %v800
    %v993 = vand.u32 2147483647, %v801
    %v994 = vand.u32 2147483647, %v802
    %v995 = vand.u32 2147483647, %v803
    %v996 = vand.u32 2147483647, %v804
    %v997 = vand.u32 2147483647, %v805
    %v998 = vand.u32 2147483647, %v806
    %v999 = vand.u32 2147483647, %v807
    %v1000 = vand.u32 2147483647, %v808
    %v1001 = vand.u32 2147483647, %v809
    %v1002 = vand.u32 2147483647, %v810
    %v1003 = vand.u32 2147483647, %v811
    %v1004 = vand.u32 2147483647, %v812
    %v1005 = vand.u32 2147483647, %v813
    %v1006 = vand.u32 2147483647, %v814
    %v1007 = vand.u32 2147483647, %v815
    %v1008 = vand.u32 2147483647, %v816
    %v1009 = vand.u32 2147483647, %v817
    %v1010 = vand.u32 2147483647, %v818
    %v1011 = vand.u32 2147483647, %v819
    %v1012 = vand.u32 2147483647, %v820
    %v1013 = vand.u32 2147483647, %v821
    %v1014 = vand.u32 2147483647, %v822
    %v1015 = vand.u32 2147483647, %v823
    %v1016 = vand.u32 2147483647, %v824
    %v1017 = vand.u32 2147483647, %v825
    %v1018 = vand.u32 2147483647, %v826
    %v1019 = vand.u32 2147483647, %v827
    %v1020 = vmul.f32 %v956, 0.3275911
    %v1021 = vmul.f32 %v957, 0.3275911
    %v1022 = vmul.f32 %v958, 0.3275911
    %v1023 = vmul.f32 %v959, 0.3275911
    %v1024 = vmul.f32 %v960, 0.3275911
    %v1025 = vmul.f32 %v961, 0.3275911
    %v1026 = vmul.f32 %v962, 0.3275911
    %v1027 = vmul.f32 %v963, 0.3275911
    %v1028 = vmul.f32 %v964, 0.3275911
    %v1029 = vmul.f32 %v965, 0.3275911
    %v1030 = vmul.f32 %v966, 0.3275911
    %v1031 = vmul.f32 %v967, 0.3275911
    %v1032 = vmul.f32 %v968, 0.3275911
    %v1033 = vmul.f32 %v969, 0.3275911
    %v1034 = vmul.f32 %v970, 0.3275911
    %v1035 = vmul.f32 %v971, 0.3275911
    %v1036 = vmul.f32 %v972, 0.3275911
    %v1037 = vmul.f32 %v973, 0.3275911
    %v1038 = vmul.f32 %v974, 0.3275911
    %v1039 = vmul.f32 %v975, 0.3275911
    %v1040 = vmul.f32 %v976, 0.3275911
    %v1041 = vmul.f32 %v977, 0.3275911
    %v1042 = vmul.f32 %v978, 0.3275911
    %v1043 = vmul.f32 %v979, 0.3275911
    %v1044 = vmul.f32 %v980, 0.3275911
    %v1045 = vmul.f32 %v981, 0.3275911
    %v1046 = vmul.f32 %v982, 0.3275911
    %v1047 = vmul.f32 %v983, 0.3275911
    %v1048 = vmul.f32 %v984, 0.3275911
    %v1049 = vmul.f32 %v985, 0.3275911
    %v1050 = vmul.f32 %v986, 0.3275911
    %v1051 = vmul.f32 %v987, 0.3275911
    %v1052 = vmul.f32 %v988, 0.3275911
    %v1053 = vmul.f32 %v989, 0.3275911
    %v1054 = vmul.f32 %v990, 0.3275911
    %v1055 = vmul.f32 %v991, 0.3275911
    %v1056 = vmul.f32 %v992, 0.3275911
    %v1057 = vmul.f32 %v993, 0.3275911
    %v1058 = vmul.f32 %v994, 0.3275911
    %v1059 = vmul.f32 %v995, 0.3275911
    %v1060 = vmul.f32 %v996, 0.3275911
    %v1061 = vmul.f32 %v997, 0.3275911
    %v1062 = vmul.f32 %v998, 0.3275911
    %v1063 = vmul.f32 %v999, 0.3275911
    %v1064 = vmul.f32 %v1000, 0.3275911
    %v1065 = vmul.f32 %v1001, 0.3275911
    %v1066 = vmul.f32 %v1002, 0.3275911
    %v1067 = vmul.f32 %v1003, 0.3275911
    %v1068 = vmul.f32 %v1004, 0.3275911
    %v1069 = vmul.f32 %v1005, 0.3275911
    %v1070 = vmul.f32 %v1006, 0.3275911
    %v1071 = vmul.f32 %v1007, 0.3275911
    %v1072 = vmul.f32 %v1008, 0.3275911
    %v1073 = vmul.f32 %v1009, 0.3275911
    %v1074 = vmul.f32 %v1010, 0.3275911
    %v1075 = vmul.f32 %v1011, 0.3275911
    %v1076 = vmul.f32 %v1012, 0.3275911
    %v1077 = vmul.f32 %v1013, 0.3275911
    %v1078 = vmul.f32 %v1014, 0.3275911
    %v1079 = vmul.f32 %v1015, 0.3275911
    %v1080 = vmul.f32 %v1016, 0.3275911
    %v1081 = vmul.f32 %v1017, 0.3275911
    %v1082 = vmul.f32 %v1018, 0.3275911
    %v1083 = vmul.f32 %v1019, 0.3275911
    %v1084 = vadd.f32 %v1020, 1.0
    %v1085 = vadd.f32 %v1021, 1.0
    %v1086 = vadd.f32 %v1022, 1.0
    %v1087 = vadd.f32 %v1023, 1.0
    %v1088 = vadd.f32 %v1024, 1.0
    %v1089 = vadd.f32 %v1025, 1.0
    %v1090 = vadd.f32 %v1026, 1.0
    %v1091 = vadd.f32 %v1027, 1.0
    %v1092 = vadd.f32 %v1028, 1.0
    %v1093 = vadd.f32 %v1029, 1.0
    %v1094 = vadd.f32 %v1030, 1.0
    %v1095 = vadd.f32 %v1031, 1.0
    %v1096 = vadd.f32 %v1032, 1.0
    %v1097 = vadd.f32 %v1033, 1.0
    %v1098 = vadd.f32 %v1034, 1.0
    %v1099 = vadd.f32 %v1035, 1.0
    %v1100 = vadd.f32 %v1036, 1.0
    %v1101 = vadd.f32 %v1037, 1.0
    %v1102 = vadd.f32 %v1038, 1.0
    %v1103 = vadd.f32 %v1039, 1.0
    %v1104 = vadd.f32 %v1040, 1.0
    %v1105 = vadd.f32 %v1041, 1.0
    %v1106 = vadd.f32 %v1042, 1.0
    %v1107 = vadd.f32 %v1043, 1.0
    %v1108 = vadd.f32 %v1044, 1.0
    %v1109 = vadd.f32 %v1045, 1.0
    %v1110 = vadd.f32 %v1046, 1.0
    %v1111 = vadd.f32 %v1047, 1.0
    %v1112 = vadd.f32 %v1048, 1.0
    %v1113 = vadd.f32 %v1049, 1.0
    %v1114 = vadd.f32 %v1050, 1.0
    %v1115 = vadd.f32 %v1051, 1.0
    %v1116 = vadd.f32 %v1052, 1.0
    %v1117 = vadd.f32 %v1053, 1.0
    %v1118 = vadd.f32 %v1054, 1.0
    %v1119 = vadd.f32 %v1055, 1.0
    %v1120 = vadd.f32 %v1056, 1.0
    %v1121 = vadd.f32 %v1057, 1.0
    %v1122 = vadd.f32 %v1058, 1.0
    %v1123 = vadd.f32 %v1059, 1.0
    %v1124 = vadd.f32 %v1060, 1.0
    %v1125 = vadd.f32 %v1061, 1.0
    %v1126 = vadd.f32 %v1062, 1.0
    %v1127 = vadd.f32 %v1063, 1.0
    %v1128 = vadd.f32 %v1064, 1.0
    %v1129 = vadd.f32 %v1065, 1.0
    %v1130 = vadd.f32 %v1066, 1.0
    %v1131 = vadd.f32 %v1067, 1.0
    %v1132 = vadd.f32 %v1068, 1.0
    %v1133 = vadd.f32 %v1069, 1.0
    %v1134 = vadd.f32 %v1070, 1.0
    %v1135 = vadd.f32 %v1071, 1.0
    %v1136 = vadd.f32 %v1072, 1.0
    %v1137 = vadd.f32 %v1073, 1.0
    %v1138 = vadd.f32 %v1074, 1.0
    %v1139 = vadd.f32 %v1075, 1.0
    %v1140 = vadd.f32 %v1076, 1.0
    %v1141 = vadd.f32 %v1077, 1.0
    %v1142 = vadd.f32 %v1078, 1.0
    %v1143 = vadd.f32 %v1079, 1.0
    %v1144 = vadd.f32 %v1080, 1.0
    %v1145 = vadd.f32 %v1081, 1.0
    %v1146 = vadd.f32 %v1082, 1.0
    %v1147 = vadd.f32 %v1083, 1.0
    %v1148 = vrcp.pop %v1084
    %v1149 = vmul.f32 1.0, %v1148
    %v1150 = vrcp.pop %v1085
    %v1151 = vmul.f32 1.0, %v1150
    %v1152 = vrcp.pop %v1086
    %v1153 = vmul.f32 1.0, %v1152
    %v1154 = vrcp.pop %v1087
    %v1155 = vmul.f32 1.0, %v1154
    %v1156 = vrcp.pop %v1088
    %v1157 = vmul.f32 1.0, %v1156
    %v1158 = vrcp.pop %v1089
    %v1159 = vmul.f32 1.0, %v1158
    %v1160 = vrcp.pop %v1090
    %v1161 = vmul.f32 1.0, %v1160
    %v1162 = vrcp.pop %v1091
    %v1163 = vmul.f32 1.0, %v1162
    %v1164 = vrcp.pop %v1092
    %v1165 = vmul.f32 1.0, %v1164
    %v1166 = vrcp.pop %v1093
    %v1167 = vmul.f32 1.0, %v1166
    %v1168 = vrcp.pop %v1094
    %v1169 = vmul.f32 1.0, %v1168
    %v1170 = vrcp.pop %v1095
    %v1171 = vmul.f32 1.0, %v1170
    %v1172 = vrcp.pop %v1096
    %v1173 = vmul.f32 1.0, %v1172
    %v1174 = vrcp.pop %v1097
    %v1175 = vmul.f32 1.0, %v1174
    %v1176 = vrcp.pop %v1098
    %v1177 = vmul.f32 1.0, %v1176
    %v1178 = vrcp.pop %v1099
    %v1179 = vmul.f32 1.0, %v1178
    %v1180 = vrcp.pop %v1100
    %v1181 = vmul.f32 1.0, %v1180
    %v1182 = vrcp.pop %v1101
    %v1183 = vmul.f32 1.0, %v1182
    %v1184 = vrcp.pop %v1102
    %v1185 = vmul.f32 1.0, %v1184
    %v1186 = vrcp.pop %v1103
    %v1187 = vmul.f32 1.0, %v1186
    %v1188 = vrcp.pop %v1104
    %v1189 = vmul.f32 1.0, %v1188
    %v1190 = vrcp.pop %v1105
    %v1191 = vmul.f32 1.0, %v1190
    %v1192 = vrcp.pop %v1106
    %v1193 = vmul.f32 1.0, %v1192
    %v1194 = vrcp.pop %v1107
    %v1195 = vmul.f32 1.0, %v1194
    %v1196 = vrcp.pop %v1108
    %v1197 = vmul.f32 1.0, %v1196
    %v1198 = vrcp.pop %v1109
    %v1199 = vmul.f32 1.0, %v1198
    %v1200 = vrcp.pop %v1110
    %v1201 = vmul.f32 1.0, %v1200
    %v1202 = vrcp.pop %v1111
    %v1203 = vmul.f32 1.0, %v1202
    %v1204 = vrcp.pop %v1112
    %v1205 = vmul.f32 1.0, %v1204
    %v1206 = vrcp.pop %v1113
    %v1207 = vmul.f32 1.0, %v1206
    %v1208 = vrcp.pop %v1114
    %v1209 = vmul.f32 1.0, %v1208
    %v1210 = vrcp.pop %v1115
    %v1211 = vmul.f32 1.0, %v1210
    %v1212 = vrcp.pop %v1116
    %v1213 = vmul.f32 1.0, %v1212
    %v1214 = vrcp.pop %v1117
    %v1215 = vmul.f32 1.0, %v1214
    %v1216 = vrcp.pop %v1118
    %v1217 = vmul.f32 1.0, %v1216
    %v1218 = vrcp.pop %v1119
    %v1219 = vmul.f32 1.0, %v1218
    %v1220 = vrcp.pop %v1120
    %v1221 = vmul.f32 1.0, %v1220
    %v1222 = vrcp.pop %v1121
    %v1223 = vmul.f32 1.0, %v1222
    %v1224 = vrcp.pop %v1122
    %v1225 = vmul.f32 1.0, %v1224
    %v1226 = vrcp.pop %v1123
    %v1227 = vmul.f32 1.0, %v1226
    %v1228 = vrcp.pop %v1124
    %v1229 = vmul.f32 1.0, %v1228
    %v1230 = vrcp.pop %v1125
    %v1231 = vmul.f32 1.0, %v1230
    %v1232 = vrcp.pop %v1126
    %v1233 = vmul.f32 1.0, %v1232
    %v1234 = vrcp.pop %v1127
    %v1235 = vmul.f32 1.0, %v1234
    %v1236 = vrcp.pop %v1128
    %v1237 = vmul.f32 1.0, %v1236
    %v1238 = vrcp.pop %v1129
    %v1239 = vmul.f32 1.0, %v1238
    %v1240 = vrcp.pop %v1130
    %v1241 = vmul.f32 1.0, %v1240
    %v1242 = vrcp.pop %v1131
    %v1243 = vmul.f32 1.0, %v1242
    %v1244 = vrcp.pop %v1132
    %v1245 = vmul.f32 1.0, %v1244
    %v1246 = vrcp.pop %v1133
    %v1247 = vmul.f32 1.0, %v1246
    %v1248 = vrcp.pop %v1134
    %v1249 = vmul.f32 1.0, %v1248
    %v1250 = vrcp.pop %v1135
    %v1251 = vmul.f32 1.0, %v1250
    %v1252 = vrcp.pop %v1136
    %v1253 = vmul.f32 1.0, %v1252
    %v1254 = vrcp.pop %v1137
    %v1255 = vmul.f32 1.0, %v1254
    %v1256 = vrcp.pop %v1138
    %v1257 = vmul.f32 1.0, %v1256
    %v1258 = vrcp.pop %v1139
    %v1259 = vmul.f32 1.0, %v1258
    %v1260 = vrcp.pop %v1140
    %v1261 = vmul.f32 1.0, %v1260
    %v1262 = vrcp.pop %v1141
    %v1263 = vmul.f32 1.0, %v1262
    %v1264 = vrcp.pop %v1142
    %v1265 = vmul.f32 1.0, %v1264
    %v1266 = vrcp.pop %v1143
    %v1267 = vmul.f32 1.0, %v1266
    %v1268 = vrcp.pop %v1144
    %v1269 = vmul.f32 1.0, %v1268
    %v1270 = vrcp.pop %v1145
    %v1271 = vmul.f32 1.0, %v1270
    %v1272 = vrcp.pop %v1146
    %v1273 = vmul.f32 1.0, %v1272
    %v1274 = vrcp.pop %v1147
    %v1275 = vmul.f32 1.0, %v1274
    %v1276 = vmul.f32 %v1149, 1.0614054
    %v1277 = vmul.f32 %v1151, 1.0614054
    %v1278 = vmul.f32 %v1153, 1.0614054
    %v1279 = vmul.f32 %v1155, 1.0614054
    %v1280 = vmul.f32 %v1157, 1.0614054
    %v1281 = vmul.f32 %v1159, 1.0614054
    %v1282 = vmul.f32 %v1161, 1.0614054
    %v1283 = vmul.f32 %v1163, 1.0614054
    %v1284 = vmul.f32 %v1165, 1.0614054
    %v1285 = vmul.f32 %v1167, 1.0614054
    %v1286 = vmul.f32 %v1169, 1.0614054
    %v1287 = vmul.f32 %v1171, 1.0614054
    %v1288 = vmul.f32 %v1173, 1.0614054
    %v1289 = vmul.f32 %v1175, 1.0614054
    %v1290 = vmul.f32 %v1177, 1.0614054
    %v1291 = vmul.f32 %v1179, 1.0614054
    %v1292 = vmul.f32 %v1181, 1.0614054
    %v1293 = vmul.f32 %v1183, 1.0614054
    %v1294 = vmul.f32 %v1185, 1.0614054
    %v1295 = vmul.f32 %v1187, 1.0614054
    %v1296 = vmul.f32 %v1189, 1.0614054
    %v1297 = vmul.f32 %v1191, 1.0614054
    %v1298 = vmul.f32 %v1193, 1.0614054
    %v1299 = vmul.f32 %v1195, 1.0614054
    %v1300 = vmul.f32 %v1197, 1.0614054
    %v1301 = vmul.f32 %v1199, 1.0614054
    %v1302 = vmul.f32 %v1201, 1.0614054
    %v1303 = vmul.f32 %v1203, 1.0614054
    %v1304 = vmul.f32 %v1205, 1.0614054
    %v1305 = vmul.f32 %v1207, 1.0614054
    %v1306 = vmul.f32 %v1209, 1.0614054
    %v1307 = vmul.f32 %v1211, 1.0614054
    %v1308 = vmul.f32 %v1213, 1.0614054
    %v1309 = vmul.f32 %v1215, 1.0614054
    %v1310 = vmul.f32 %v1217, 1.0614054
    %v1311 = vmul.f32 %v1219, 1.0614054
    %v1312 = vmul.f32 %v1221, 1.0614054
    %v1313 = vmul.f32 %v1223, 1.0614054
    %v1314 = vmul.f32 %v1225, 1.0614054
    %v1315 = vmul.f32 %v1227, 1.0614054
    %v1316 = vmul.f32 %v1229, 1.0614054
    %v1317 = vmul.f32 %v1231, 1.0614054
    %v1318 = vmul.f32 %v1233, 1.0614054
    %v1319 = vmul.f32 %v1235, 1.0614054
    %v1320 = vmul.f32 %v1237, 1.0614054
    %v1321 = vmul.f32 %v1239, 1.0614054
    %v1322 = vmul.f32 %v1241, 1.0614054
    %v1323 = vmul.f32 %v1243, 1.0614054
    %v1324 = vmul.f32 %v1245, 1.0614054
    %v1325 = vmul.f32 %v1247, 1.0614054
    %v1326 = vmul.f32 %v1249, 1.0614054
    %v1327 = vmul.f32 %v1251, 1.0614054
    %v1328 = vmul.f32 %v1253, 1.0614054
    %v1329 = vmul.f32 %v1255, 1.0614054
    %v1330 = vmul.f32 %v1257, 1.0614054
    %v1331 = vmul.f32 %v1259, 1.0614054
    %v1332 = vmul.f32 %v1261, 1.0614054
    %v1333 = vmul.f32 %v1263, 1.0614054
    %v1334 = vmul.f32 %v1265, 1.0614054
    %v1335 = vmul.f32 %v1267, 1.0614054
    %v1336 = vmul.f32 %v1269, 1.0614054
    %v1337 = vmul.f32 %v1271, 1.0614054
    %v1338 = vmul.f32 %v1273, 1.0614054
    %v1339 = vmul.f32 %v1275, 1.0614054
    %v1340 = vadd.f32 %v1276, -1.4531521
    %v1341 = vadd.f32 %v1277, -1.4531521
    %v1342 = vadd.f32 %v1278, -1.4531521
    %v1343 = vadd.f32 %v1279, -1.4531521
    %v1344 = vadd.f32 %v1280, -1.4531521
    %v1345 = vadd.f32 %v1281, -1.4531521
    %v1346 = vadd.f32 %v1282, -1.4531521
    %v1347 = vadd.f32 %v1283, -1.4531521
    %v1348 = vadd.f32 %v1284, -1.4531521
    %v1349 = vadd.f32 %v1285, -1.4531521
    %v1350 = vadd.f32 %v1286, -1.4531521
    %v1351 = vadd.f32 %v1287, -1.4531521
    %v1352 = vadd.f32 %v1288, -1.4531521
    %v1353 = vadd.f32 %v1289, -1.4531521
    %v1354 = vadd.f32 %v1290, -1.4531521
    %v1355 = vadd.f32 %v1291, -1.4531521
    %v1356 = vadd.f32 %v1292, -1.4531521
    %v1357 = vadd.f32 %v1293, -1.4531521
    %v1358 = vadd.f32 %v1294, -1.4531521
    %v1359 = vadd.f32 %v1295, -1.4531521
    %v1360 = vadd.f32 %v1296, -1.4531521
    %v1361 = vadd.f32 %v1297, -1.4531521
    %v1362 = vadd.f32 %v1298, -1.4531521
    %v1363 = vadd.f32 %v1299, -1.4531521
    %v1364 = vadd.f32 %v1300, -1.4531521
    %v1365 = vadd.f32 %v1301, -1.4531521
    %v1366 = vadd.f32 %v1302, -1.4531521
    %v1367 = vadd.f32 %v1303, -1.4531521
    %v1368 = vadd.f32 %v1304, -1.4531521
    %v1369 = vadd.f32 %v1305, -1.4531521
    %v1370 = vadd.f32 %v1306, -1.4531521
    %v1371 = vadd.f32 %v1307, -1.4531521
    %v1372 = vadd.f32 %v1308, -1.4531521
    %v1373 = vadd.f32 %v1309, -1.4531521
    %v1374 = vadd.f32 %v1310, -1.4531521
    %v1375 = vadd.f32 %v1311, -1.4531521
    %v1376 = vadd.f32 %v1312, -1.4531521
    %v1377 = vadd.f32 %v1313, -1.4531521
    %v1378 = vadd.f32 %v1314, -1.4531521
    %v1379 = vadd.f32 %v1315, -1.4531521
    %v1380 = vadd.f32 %v1316, -1.4531521
    %v1381 = vadd.f32 %v1317, -1.4531521
    %v1382 = vadd.f32 %v1318, -1.4531521
    %v1383 = vadd.f32 %v1319, -1.4531521
    %v1384 = vadd.f32 %v1320, -1.4531521
    %v1385 = vadd.f32 %v1321, -1.4531521
    %v1386 = vadd.f32 %v1322, -1.4531521
    %v1387 = vadd.f32 %v1323, -1.4531521
    %v1388 = vadd.f32 %v1324, -1.4531521
    %v1389 = vadd.f32 %v1325, -1.4531521
    %v1390 = vadd.f32 %v1326, -1.4531521
    %v1391 = vadd.f32 %v1327, -1.4531521
    %v1392 = vadd.f32 %v1328, -1.4531521
    %v1393 = vadd.f32 %v1329, -1.4531521
    %v1394 = vadd.f32 %v1330, -1.4531521
    %v1395 = vadd.f32 %v1331, -1.4531521
    %v1396 = vadd.f32 %v1332, -1.4531521
    %v1397 = vadd.f32 %v1333, -1.4531521
    %v1398 = vadd.f32 %v1334, -1.4531521
    %v1399 = vadd.f32 %v1335, -1.4531521
    %v1400 = vadd.f32 %v1336, -1.4531521
    %v1401 = vadd.f32 %v1337, -1.4531521
    %v1402 = vadd.f32 %v1338, -1.4531521
    %v1403 = vadd.f32 %v1339, -1.4531521
    %v1404 = vmul.f32 %v1340, %v1149
    %v1405 = vmul.f32 %v1341, %v1151
    %v1406 = vmul.f32 %v1342, %v1153
    %v1407 = vmul.f32 %v1343, %v1155
    %v1408 = vmul.f32 %v1344, %v1157
    %v1409 = vmul.f32 %v1345, %v1159
    %v1410 = vmul.f32 %v1346, %v1161
    %v1411 = vmul.f32 %v1347, %v1163
    %v1412 = vmul.f32 %v1348, %v1165
    %v1413 = vmul.f32 %v1349, %v1167
    %v1414 = vmul.f32 %v1350, %v1169
    %v1415 = vmul.f32 %v1351, %v1171
    %v1416 = vmul.f32 %v1352, %v1173
    %v1417 = vmul.f32 %v1353, %v1175
    %v1418 = vmul.f32 %v1354, %v1177
    %v1419 = vmul.f32 %v1355, %v1179
    %v1420 = vmul.f32 %v1356, %v1181
    %v1421 = vmul.f32 %v1357, %v1183
    %v1422 = vmul.f32 %v1358, %v1185
    %v1423 = vmul.f32 %v1359, %v1187
    %v1424 = vmul.f32 %v1360, %v1189
    %v1425 = vmul.f32 %v1361, %v1191
    %v1426 = vmul.f32 %v1362, %v1193
    %v1427 = vmul.f32 %v1363, %v1195
    %v1428 = vmul.f32 %v1364, %v1197
    %v1429 = vmul.f32 %v1365, %v1199
    %v1430 = vmul.f32 %v1366, %v1201
    %v1431 = vmul.f32 %v1367, %v1203
    %v1432 = vmul.f32 %v1368, %v1205
    %v1433 = vmul.f32 %v1369, %v1207
    %v1434 = vmul.f32 %v1370, %v1209
    %v1435 = vmul.f32 %v1371, %v1211
    %v1436 = vmul.f32 %v1372, %v1213
    %v1437 = vmul.f32 %v1373, %v1215
    %v1438 = vmul.f32 %v1374, %v1217
    %v1439 = vmul.f32 %v1375, %v1219
    %v1440 = vmul.f32 %v1376, %v1221
    %v1441 = vmul.f32 %v1377, %v1223
    %v1442 = vmul.f32 %v1378, %v1225
    %v1443 = vmul.f32 %v1379, %v1227
    %v1444 = vmul.f32 %v1380, %v1229
    %v1445 = vmul.f32 %v1381, %v1231
    %v1446 = vmul.f32 %v1382, %v1233
    %v1447 = vmul.f32 %v1383, %v1235
    %v1448 = vmul.f32 %v1384, %v1237
    %v1449 = vmul.f32 %v1385, %v1239
    %v1450 = vmul.f32 %v1386, %v1241
    %v1451 = vmul.f32 %v1387, %v1243
    %v1452 = vmul.f32 %v1388, %v1245
    %v1453 = vmul.f32 %v1389, %v1247
    %v1454 = vmul.f32 %v1390, %v1249
    %v1455 = vmul.f32 %v1391, %v1251
    %v1456 = vmul.f32 %v1392, %v1253
    %v1457 = vmul.f32 %v1393, %v1255
    %v1458 = vmul.f32 %v1394, %v1257
    %v1459 = vmul.f32 %v1395, %v1259
    %v1460 = vmul.f32 %v1396, %v1261
    %v1461 = vmul.f32 %v1397, %v1263
    %v1462 = vmul.f32 %v1398, %v1265
    %v1463 = vmul.f32 %v1399, %v1267
    %v1464 = vmul.f32 %v1400, %v1269
    %v1465 = vmul.f32 %v1401, %v1271
    %v1466 = vmul.f32 %v1402, %v1273
    %v1467 = vmul.f32 %v1403, %v1275
    %v1468 = vadd.f32 %v1404, 1.4214138
    %v1469 = vadd.f32 %v1405, 1.4214138
    %v1470 = vadd.f32 %v1406, 1.4214138
    %v1471 = vadd.f32 %v1407, 1.4214138
    %v1472 = vadd.f32 %v1408, 1.4214138
    %v1473 = vadd.f32 %v1409, 1.4214138
    %v1474 = vadd.f32 %v1410, 1.4214138
    %v1475 = vadd.f32 %v1411, 1.4214138
    %v1476 = vadd.f32 %v1412, 1.4214138
    %v1477 = vadd.f32 %v1413, 1.4214138
    %v1478 = vadd.f32 %v1414, 1.4214138
    %v1479 = vadd.f32 %v1415, 1.4214138
    %v1480 = vadd.f32 %v1416, 1.4214138
    %v1481 = vadd.f32 %v1417, 1.4214138
    %v1482 = vadd.f32 %v1418, 1.4214138
    %v1483 = vadd.f32 %v1419, 1.4214138
    %v1484 = vadd.f32 %v1420, 1.4214138
    %v1485 = vadd.f32 %v1421, 1.4214138
    %v1486 = vadd.f32 %v1422, 1.4214138
    %v1487 = vadd.f32 %v1423, 1.4214138
    %v1488 = vadd.f32 %v1424, 1.4214138
    %v1489 = vadd.f32 %v1425, 1.4214138
    %v1490 = vadd.f32 %v1426, 1.4214138
    %v1491 = vadd.f32 %v1427, 1.4214138
    %v1492 = vadd.f32 %v1428, 1.4214138
    %v1493 = vadd.f32 %v1429, 1.4214138
    %v1494 = vadd.f32 %v1430, 1.4214138
    %v1495 = vadd.f32 %v1431, 1.4214138
    %v1496 = vadd.f32 %v1432, 1.4214138
    %v1497 = vadd.f32 %v1433, 1.4214138
    %v1498 = vadd.f32 %v1434, 1.4214138
    %v1499 = vadd.f32 %v1435, 1.4214138
    %v1500 = vadd.f32 %v1436, 1.4214138
    %v1501 = vadd.f32 %v1437, 1.4214138
    %v1502 = vadd.f32 %v1438, 1.4214138
    %v1503 = vadd.f32 %v1439, 1.4214138
    %v1504 = vadd.f32 %v1440, 1.4214138
    %v1505 = vadd.f32 %v1441, 1.4214138
    %v1506 = vadd.f32 %v1442, 1.4214138
    %v1507 = vadd.f32 %v1443, 1.4214138
    %v1508 = vadd.f32 %v1444, 1.4214138
    %v1509 = vadd.f32 %v1445, 1.4214138
    %v1510 = vadd.f32 %v1446, 1.4214138
    %v1511 = vadd.f32 %v1447, 1.4214138
    %v1512 = vadd.f32 %v1448, 1.4214138
    %v1513 = vadd.f32 %v1449, 1.4214138
    %v1514 = vadd.f32 %v1450, 1.4214138
    %v1515 = vadd.f32 %v1451, 1.4214138
    %v1516 = vadd.f32 %v1452, 1.4214138
    %v1517 = vadd.f32 %v1453, 1.4214138
    %v1518 = vadd.f32 %v1454, 1.4214138
    %v1519 = vadd.f32 %v1455, 1.4214138
    %v1520 = vadd.f32 %v1456, 1.4214138
    %v1521 = vadd.f32 %v1457, 1.4214138
    %v1522 = vadd.f32 %v1458, 1.4214138
    %v1523 = vadd.f32 %v1459, 1.4214138
    %v1524 = vadd.f32 %v1460, 1.4214138
    %v1525 = vadd.f32 %v1461, 1.4214138
    %v1526 = vadd.f32 %v1462, 1.4214138
    %v1527 = vadd.f32 %v1463, 1.4214138
    %v1528 = vadd.f32 %v1464, 1.4214138
    %v1529 = vadd.f32 %v1465, 1.4214138
    %v1530 = vadd.f32 %v1466, 1.4214138
    %v1531 = vadd.f32 %v1467, 1.4214138
    %v1532 = vmul.f32 %v1468, %v1149
    %v1533 = vmul.f32 %v1469, %v1151
    %v1534 = vmul.f32 %v1470, %v1153
    %v1535 = vmul.f32 %v1471, %v1155
    %v1536 = vmul.f32 %v1472, %v1157
    %v1537 = vmul.f32 %v1473, %v1159
    %v1538 = vmul.f32 %v1474, %v1161
    %v1539 = vmul.f32 %v1475, %v1163
    %v1540 = vmul.f32 %v1476, %v1165
    %v1541 = vmul.f32 %v1477, %v1167
    %v1542 = vmul.f32 %v1478, %v1169
    %v1543 = vmul.f32 %v1479, %v1171
    %v1544 = vmul.f32 %v1480, %v1173
    %v1545 = vmul.f32 %v1481, %v1175
    %v1546 = vmul.f32 %v1482, %v1177
    %v1547 = vmul.f32 %v1483, %v1179
    %v1548 = vmul.f32 %v1484, %v1181
    %v1549 = vmul.f32 %v1485, %v1183
    %v1550 = vmul.f32 %v1486, %v1185
    %v1551 = vmul.f32 %v1487, %v1187
    %v1552 = vmul.f32 %v1488, %v1189
    %v1553 = vmul.f32 %v1489, %v1191
    %v1554 = vmul.f32 %v1490, %v1193
    %v1555 = vmul.f32 %v1491, %v1195
    %v1556 = vmul.f32 %v1492, %v1197
    %v1557 = vmul.f32 %v1493, %v1199
    %v1558 = vmul.f32 %v1494, %v1201
    %v1559 = vmul.f32 %v1495, %v1203
    %v1560 = vmul.f32 %v1496, %v1205
    %v1561 = vmul.f32 %v1497, %v1207
    %v1562 = vmul.f32 %v1498, %v1209
    %v1563 = vmul.f32 %v1499, %v1211
    %v1564 = vmul.f32 %v1500, %v1213
    %v1565 = vmul.f32 %v1501, %v1215
    %v1566 = vmul.f32 %v1502, %v1217
    %v1567 = vmul.f32 %v1503, %v1219
    %v1568 = vmul.f32 %v1504, %v1221
    %v1569 = vmul.f32 %v1505, %v1223
    %v1570 = vmul.f32 %v1506, %v1225
    %v1571 = vmul.f32 %v1507, %v1227
    %v1572 = vmul.f32 %v1508, %v1229
    %v1573 = vmul.f32 %v1509, %v1231
    %v1574 = vmul.f32 %v1510, %v1233
    %v1575 = vmul.f32 %v1511, %v1235
    %v1576 = vmul.f32 %v1512, %v1237
    %v1577 = vmul.f32 %v1513, %v1239
    %v1578 = vmul.f32 %v1514, %v1241
    %v1579 = vmul.f32 %v1515, %v1243
    %v1580 = vmul.f32 %v1516, %v1245
    %v1581 = vmul.f32 %v1517, %v1247
    %v1582 = vmul.f32 %v1518, %v1249
    %v1583 = vmul.f32 %v1519, %v1251
    %v1584 = vmul.f32 %v1520, %v1253
    %v1585 = vmul.f32 %v1521, %v1255
    %v1586 = vmul.f32 %v1522, %v1257
    %v1587 = vmul.f32 %v1523, %v1259
    %v1588 = vmul.f32 %v1524, %v1261
    %v1589 = vmul.f32 %v1525, %v1263
    %v1590 = vmul.f32 %v1526, %v1265
    %v1591 = vmul.f32 %v1527, %v1267
    %v1592 = vmul.f32 %v1528, %v1269
    %v1593 = vmul.f32 %v1529, %v1271
    %v1594 = vmul.f32 %v1530, %v1273
    %v1595 = vmul.f32 %v1531, %v1275
    %v1596 = vadd.f32 %v1532, -0.28449672
    %v1597 = vadd.f32 %v1533, -0.28449672
    %v1598 = vadd.f32 %v1534, -0.28449672
    %v1599 = vadd.f32 %v1535, -0.28449672
    %v1600 = vadd.f32 %v1536, -0.28449672
    %v1601 = vadd.f32 %v1537, -0.28449672
    %v1602 = vadd.f32 %v1538, -0.28449672
    %v1603 = vadd.f32 %v1539, -0.28449672
    %v1604 = vadd.f32 %v1540, -0.28449672
    %v1605 = vadd.f32 %v1541, -0.28449672
    %v1606 = vadd.f32 %v1542, -0.28449672
    %v1607 = vadd.f32 %v1543, -0.28449672
    %v1608 = vadd.f32 %v1544, -0.28449672
    %v1609 = vadd.f32 %v1545, -0.28449672
    %v1610 = vadd.f32 %v1546, -0.28449672
    %v1611 = vadd.f32 %v1547, -0.28449672
    %v1612 = vadd.f32 %v1548, -0.28449672
    %v1613 = vadd.f32 %v1549, -0.28449672
    %v1614 = vadd.f32 %v1550, -0.28449672
    %v1615 = vadd.f32 %v1551, -0.28449672
    %v1616 = vadd.f32 %v1552, -0.28449672
    %v1617 = vadd.f32 %v1553, -0.28449672
    %v1618 = vadd.f32 %v1554, -0.28449672
    %v1619 = vadd.f32 %v1555, -0.28449672
    %v1620 = vadd.f32 %v1556, -0.28449672
    %v1621 = vadd.f32 %v1557, -0.28449672
    %v1622 = vadd.f32 %v1558, -0.28449672
    %v1623 = vadd.f32 %v1559, -0.28449672
    %v1624 = vadd.f32 %v1560, -0.28449672
    %v1625 = vadd.f32 %v1561, -0.28449672
    %v1626 = vadd.f32 %v1562, -0.28449672
    %v1627 = vadd.f32 %v1563, -0.28449672
    %v1628 = vadd.f32 %v1564, -0.28449672
    %v1629 = vadd.f32 %v1565, -0.28449672
    %v1630 = vadd.f32 %v1566, -0.28449672
    %v1631 = vadd.f32 %v1567, -0.28449672
    %v1632 = vadd.f32 %v1568, -0.28449672
    %v1633 = vadd.f32 %v1569, -0.28449672
    %v1634 = vadd.f32 %v1570, -0.28449672
    %v1635 = vadd.f32 %v1571, -0.28449672
    %v1636 = vadd.f32 %v1572, -0.28449672
    %v1637 = vadd.f32 %v1573, -0.28449672
    %v1638 = vadd.f32 %v1574, -0.28449672
    %v1639 = vadd.f32 %v1575, -0.28449672
    %v1640 = vadd.f32 %v1576, -0.28449672
    %v1641 = vadd.f32 %v1577, -0.28449672
    %v1642 = vadd.f32 %v1578, -0.28449672
    %v1643 = vadd.f32 %v1579, -0.28449672
    %v1644 = vadd.f32 %v1580, -0.28449672
    %v1645 = vadd.f32 %v1581, -0.28449672
    %v1646 = vadd.f32 %v1582, -0.28449672
    %v1647 = vadd.f32 %v1583, -0.28449672
    %v1648 = vadd.f32 %v1584, -0.28449672
    %v1649 = vadd.f32 %v1585, -0.28449672
    %v1650 = vadd.f32 %v1586, -0.28449672
    %v1651 = vadd.f32 %v1587, -0.28449672
    %v1652 = vadd.f32 %v1588, -0.28449672
    %v1653 = vadd.f32 %v1589, -0.28449672
    %v1654 = vadd.f32 %v1590, -0.28449672
    %v1655 = vadd.f32 %v1591, -0.28449672
    %v1656 = vadd.f32 %v1592, -0.28449672
    %v1657 = vadd.f32 %v1593, -0.28449672
    %v1658 = vadd.f32 %v1594, -0.28449672
    %v1659 = vadd.f32 %v1595, -0.28449672
    %v1660 = vmul.f32 %v1596, %v1149
    %v1661 = vmul.f32 %v1597, %v1151
    %v1662 = vmul.f32 %v1598, %v1153
    %v1663 = vmul.f32 %v1599, %v1155
    %v1664 = vmul.f32 %v1600, %v1157
    %v1665 = vmul.f32 %v1601, %v1159
    %v1666 = vmul.f32 %v1602, %v1161
    %v1667 = vmul.f32 %v1603, %v1163
    %v1668 = vmul.f32 %v1604, %v1165
    %v1669 = vmul.f32 %v1605, %v1167
    %v1670 = vmul.f32 %v1606, %v1169
    %v1671 = vmul.f32 %v1607, %v1171
    %v1672 = vmul.f32 %v1608, %v1173
    %v1673 = vmul.f32 %v1609, %v1175
    %v1674 = vmul.f32 %v1610, %v1177
    %v1675 = vmul.f32 %v1611, %v1179
    %v1676 = vmul.f32 %v1612, %v1181
    %v1677 = vmul.f32 %v1613, %v1183
    %v1678 = vmul.f32 %v1614, %v1185
    %v1679 = vmul.f32 %v1615, %v1187
    %v1680 = vmul.f32 %v1616, %v1189
    %v1681 = vmul.f32 %v1617, %v1191
    %v1682 = vmul.f32 %v1618, %v1193
    %v1683 = vmul.f32 %v1619, %v1195
    %v1684 = vmul.f32 %v1620, %v1197
    %v1685 = vmul.f32 %v1621, %v1199
    %v1686 = vmul.f32 %v1622, %v1201
    %v1687 = vmul.f32 %v1623, %v1203
    %v1688 = vmul.f32 %v1624, %v1205
    %v1689 = vmul.f32 %v1625, %v1207
    %v1690 = vmul.f32 %v1626, %v1209
    %v1691 = vmul.f32 %v1627, %v1211
    %v1692 = vmul.f32 %v1628, %v1213
    %v1693 = vmul.f32 %v1629, %v1215
    %v1694 = vmul.f32 %v1630, %v1217
    %v1695 = vmul.f32 %v1631, %v1219
    %v1696 = vmul.f32 %v1632, %v1221
    %v1697 = vmul.f32 %v1633, %v1223
    %v1698 = vmul.f32 %v1634, %v1225
    %v1699 = vmul.f32 %v1635, %v1227
    %v1700 = vmul.f32 %v1636, %v1229
    %v1701 = vmul.f32 %v1637, %v1231
    %v1702 = vmul.f32 %v1638, %v1233
    %v1703 = vmul.f32 %v1639, %v1235
    %v1704 = vmul.f32 %v1640, %v1237
    %v1705 = vmul.f32 %v1641, %v1239
    %v1706 = vmul.f32 %v1642, %v1241
    %v1707 = vmul.f32 %v1643, %v1243
    %v1708 = vmul.f32 %v1644, %v1245
    %v1709 = vmul.f32 %v1645, %v1247
    %v1710 = vmul.f32 %v1646, %v1249
    %v1711 = vmul.f32 %v1647, %v1251
    %v1712 = vmul.f32 %v1648, %v1253
    %v1713 = vmul.f32 %v1649, %v1255
    %v1714 = vmul.f32 %v1650, %v1257
    %v1715 = vmul.f32 %v1651, %v1259
    %v1716 = vmul.f32 %v1652, %v1261
    %v1717 = vmul.f32 %v1653, %v1263
    %v1718 = vmul.f32 %v1654, %v1265
    %v1719 = vmul.f32 %v1655, %v1267
    %v1720 = vmul.f32 %v1656, %v1269
    %v1721 = vmul.f32 %v1657, %v1271
    %v1722 = vmul.f32 %v1658, %v1273
    %v1723 = vmul.f32 %v1659, %v1275
    %v1724 = vadd.f32 %v1660, 0.2548296
    %v1725 = vadd.f32 %v1661, 0.2548296
    %v1726 = vadd.f32 %v1662, 0.2548296
    %v1727 = vadd.f32 %v1663, 0.2548296
    %v1728 = vadd.f32 %v1664, 0.2548296
    %v1729 = vadd.f32 %v1665, 0.2548296
    %v1730 = vadd.f32 %v1666, 0.2548296
    %v1731 = vadd.f32 %v1667, 0.2548296
    %v1732 = vadd.f32 %v1668, 0.2548296
    %v1733 = vadd.f32 %v1669, 0.2548296
    %v1734 = vadd.f32 %v1670, 0.2548296
    %v1735 = vadd.f32 %v1671, 0.2548296
    %v1736 = vadd.f32 %v1672, 0.2548296
    %v1737 = vadd.f32 %v1673, 0.2548296
    %v1738 = vadd.f32 %v1674, 0.2548296
    %v1739 = vadd.f32 %v1675, 0.2548296
    %v1740 = vadd.f32 %v1676, 0.2548296
    %v1741 = vadd.f32 %v1677, 0.2548296
    %v1742 = vadd.f32 %v1678, 0.2548296
    %v1743 = vadd.f32 %v1679, 0.2548296
    %v1744 = vadd.f32 %v1680, 0.2548296
    %v1745 = vadd.f32 %v1681, 0.2548296
    %v1746 = vadd.f32 %v1682, 0.2548296
    %v1747 = vadd.f32 %v1683, 0.2548296
    %v1748 = vadd.f32 %v1684, 0.2548296
    %v1749 = vadd.f32 %v1685, 0.2548296
    %v1750 = vadd.f32 %v1686, 0.2548296
    %v1751 = vadd.f32 %v1687, 0.2548296
    %v1752 = vadd.f32 %v1688, 0.2548296
    %v1753 = vadd.f32 %v1689, 0.2548296
    %v1754 = vadd.f32 %v1690, 0.2548296
    %v1755 = vadd.f32 %v1691, 0.2548296
    %v1756 = vadd.f32 %v1692, 0.2548296
    %v1757 = vadd.f32 %v1693, 0.2548296
    %v1758 = vadd.f32 %v1694, 0.2548296
    %v1759 = vadd.f32 %v1695, 0.2548296
    %v1760 = vadd.f32 %v1696, 0.2548296
    %v1761 = vadd.f32 %v1697, 0.2548296
    %v1762 = vadd.f32 %v1698, 0.2548296
    %v1763 = vadd.f32 %v1699, 0.2548296
    %v1764 = vadd.f32 %v1700, 0.2548296
    %v1765 = vadd.f32 %v1701, 0.2548296
    %v1766 = vadd.f32 %v1702, 0.2548296
    %v1767 = vadd.f32 %v1703, 0.2548296
    %v1768 = vadd.f32 %v1704, 0.2548296
    %v1769 = vadd.f32 %v1705, 0.2548296
    %v1770 = vadd.f32 %v1706, 0.2548296
    %v1771 = vadd.f32 %v1707, 0.2548296
    %v1772 = vadd.f32 %v1708, 0.2548296
    %v1773 = vadd.f32 %v1709, 0.2548296
    %v1774 = vadd.f32 %v1710, 0.2548296
    %v1775 = vadd.f32 %v1711, 0.2548296
    %v1776 = vadd.f32 %v1712, 0.2548296
    %v1777 = vadd.f32 %v1713, 0.2548296
    %v1778 = vadd.f32 %v1714, 0.2548296
    %v1779 = vadd.f32 %v1715, 0.2548296
    %v1780 = vadd.f32 %v1716, 0.2548296
    %v1781 = vadd.f32 %v1717, 0.2548296
    %v1782 = vadd.f32 %v1718, 0.2548296
    %v1783 = vadd.f32 %v1719, 0.2548296
    %v1784 = vadd.f32 %v1720, 0.2548296
    %v1785 = vadd.f32 %v1721, 0.2548296
    %v1786 = vadd.f32 %v1722, 0.2548296
    %v1787 = vadd.f32 %v1723, 0.2548296
    %v1788 = vmul.f32 %v1724, %v1149
    %v1789 = vmul.f32 %v1725, %v1151
    %v1790 = vmul.f32 %v1726, %v1153
    %v1791 = vmul.f32 %v1727, %v1155
    %v1792 = vmul.f32 %v1728, %v1157
    %v1793 = vmul.f32 %v1729, %v1159
    %v1794 = vmul.f32 %v1730, %v1161
    %v1795 = vmul.f32 %v1731, %v1163
    %v1796 = vmul.f32 %v1732, %v1165
    %v1797 = vmul.f32 %v1733, %v1167
    %v1798 = vmul.f32 %v1734, %v1169
    %v1799 = vmul.f32 %v1735, %v1171
    %v1800 = vmul.f32 %v1736, %v1173
    %v1801 = vmul.f32 %v1737, %v1175
    %v1802 = vmul.f32 %v1738, %v1177
    %v1803 = vmul.f32 %v1739, %v1179
    %v1804 = vmul.f32 %v1740, %v1181
    %v1805 = vmul.f32 %v1741, %v1183
    %v1806 = vmul.f32 %v1742, %v1185
    %v1807 = vmul.f32 %v1743, %v1187
    %v1808 = vmul.f32 %v1744, %v1189
    %v1809 = vmul.f32 %v1745, %v1191
    %v1810 = vmul.f32 %v1746, %v1193
    %v1811 = vmul.f32 %v1747, %v1195
    %v1812 = vmul.f32 %v1748, %v1197
    %v1813 = vmul.f32 %v1749, %v1199
    %v1814 = vmul.f32 %v1750, %v1201
    %v1815 = vmul.f32 %v1751, %v1203
    %v1816 = vmul.f32 %v1752, %v1205
    %v1817 = vmul.f32 %v1753, %v1207
    %v1818 = vmul.f32 %v1754, %v1209
    %v1819 = vmul.f32 %v1755, %v1211
    %v1820 = vmul.f32 %v1756, %v1213
    %v1821 = vmul.f32 %v1757, %v1215
    %v1822 = vmul.f32 %v1758, %v1217
    %v1823 = vmul.f32 %v1759, %v1219
    %v1824 = vmul.f32 %v1760, %v1221
    %v1825 = vmul.f32 %v1761, %v1223
    %v1826 = vmul.f32 %v1762, %v1225
    %v1827 = vmul.f32 %v1763, %v1227
    %v1828 = vmul.f32 %v1764, %v1229
    %v1829 = vmul.f32 %v1765, %v1231
    %v1830 = vmul.f32 %v1766, %v1233
    %v1831 = vmul.f32 %v1767, %v1235
    %v1832 = vmul.f32 %v1768, %v1237
    %v1833 = vmul.f32 %v1769, %v1239
    %v1834 = vmul.f32 %v1770, %v1241
    %v1835 = vmul.f32 %v1771, %v1243
    %v1836 = vmul.f32 %v1772, %v1245
    %v1837 = vmul.f32 %v1773, %v1247
    %v1838 = vmul.f32 %v1774, %v1249
    %v1839 = vmul.f32 %v1775, %v1251
    %v1840 = vmul.f32 %v1776, %v1253
    %v1841 = vmul.f32 %v1777, %v1255
    %v1842 = vmul.f32 %v1778, %v1257
    %v1843 = vmul.f32 %v1779, %v1259
    %v1844 = vmul.f32 %v1780, %v1261
    %v1845 = vmul.f32 %v1781, %v1263
    %v1846 = vmul.f32 %v1782, %v1265
    %v1847 = vmul.f32 %v1783, %v1267
    %v1848 = vmul.f32 %v1784, %v1269
    %v1849 = vmul.f32 %v1785, %v1271
    %v1850 = vmul.f32 %v1786, %v1273
    %v1851 = vmul.f32 %v1787, %v1275
    %v1852 = vsub.f32 0.0, %v956
    %v1853 = vsub.f32 0.0, %v957
    %v1854 = vsub.f32 0.0, %v958
    %v1855 = vsub.f32 0.0, %v959
    %v1856 = vsub.f32 0.0, %v960
    %v1857 = vsub.f32 0.0, %v961
    %v1858 = vsub.f32 0.0, %v962
    %v1859 = vsub.f32 0.0, %v963
    %v1860 = vsub.f32 0.0, %v964
    %v1861 = vsub.f32 0.0, %v965
    %v1862 = vsub.f32 0.0, %v966
    %v1863 = vsub.f32 0.0, %v967
    %v1864 = vsub.f32 0.0, %v968
    %v1865 = vsub.f32 0.0, %v969
    %v1866 = vsub.f32 0.0, %v970
    %v1867 = vsub.f32 0.0, %v971
    %v1868 = vsub.f32 0.0, %v972
    %v1869 = vsub.f32 0.0, %v973
    %v1870 = vsub.f32 0.0, %v974
    %v1871 = vsub.f32 0.0, %v975
    %v1872 = vsub.f32 0.0, %v976
    %v1873 = vsub.f32 0.0, %v977
    %v1874 = vsub.f32 0.0, %v978
    %v1875 = vsub.f32 0.0, %v979
    %v1876 = vsub.f32 0.0, %v980
    %v1877 = vsub.f32 0.0, %v981
    %v1878 = vsub.f32 0.0, %v982
    %v1879 = vsub.f32 0.0, %v983
    %v1880 = vsub.f32 0.0, %v984
    %v1881 = vsub.f32 0.0, %v985
    %v1882 = vsub.f32 0.0, %v986
    %v1883 = vsub.f32 0.0, %v987
    %v1884 = vsub.f32 0.0, %v988
    %v1885 = vsub.f32 0.0, %v989
    %v1886 = vsub.f32 0.0, %v990
    %v1887 = vsub.f32 0.0, %v991
    %v1888 = vsub.f32 0.0, %v992
    %v1889 = vsub.f32 0.0, %v993
    %v1890 = vsub.f32 0.0, %v994
    %v1891 = vsub.f32 0.0, %v995
    %v1892 = vsub.f32 0.0, %v996
    %v1893 = vsub.f32 0.0, %v997
    %v1894 = vsub.f32 0.0, %v998
    %v1895 = vsub.f32 0.0, %v999
    %v1896 = vsub.f32 0.0, %v1000
    %v1897 = vsub.f32 0.0, %v1001
    %v1898 = vsub.f32 0.0, %v1002
    %v1899 = vsub.f32 0.0, %v1003
    %v1900 = vsub.f32 0.0, %v1004
    %v1901 = vsub.f32 0.0, %v1005
    %v1902 = vsub.f32 0.0, %v1006
    %v1903 = vsub.f32 0.0, %v1007
    %v1904 = vsub.f32 0.0, %v1008
    %v1905 = vsub.f32 0.0, %v1009
    %v1906 = vsub.f32 0.0, %v1010
    %v1907 = vsub.f32 0.0, %v1011
    %v1908 = vsub.f32 0.0, %v1012
    %v1909 = vsub.f32 0.0, %v1013
    %v1910 = vsub.f32 0.0, %v1014
    %v1911 = vsub.f32 0.0, %v1015
    %v1912 = vsub.f32 0.0, %v1016
    %v1913 = vsub.f32 0.0, %v1017
    %v1914 = vsub.f32 0.0, %v1018
    %v1915 = vsub.f32 0.0, %v1019
    %v1916 = vmul.f32 %v1852, %v956
    %v1917 = vmul.f32 %v1853, %v957
    %v1918 = vmul.f32 %v1854, %v958
    %v1919 = vmul.f32 %v1855, %v959
    %v1920 = vmul.f32 %v1856, %v960
    %v1921 = vmul.f32 %v1857, %v961
    %v1922 = vmul.f32 %v1858, %v962
    %v1923 = vmul.f32 %v1859, %v963
    %v1924 = vmul.f32 %v1860, %v964
    %v1925 = vmul.f32 %v1861, %v965
    %v1926 = vmul.f32 %v1862, %v966
    %v1927 = vmul.f32 %v1863, %v967
    %v1928 = vmul.f32 %v1864, %v968
    %v1929 = vmul.f32 %v1865, %v969
    %v1930 = vmul.f32 %v1866, %v970
    %v1931 = vmul.f32 %v1867, %v971
    %v1932 = vmul.f32 %v1868, %v972
    %v1933 = vmul.f32 %v1869, %v973
    %v1934 = vmul.f32 %v1870, %v974
    %v1935 = vmul.f32 %v1871, %v975
    %v1936 = vmul.f32 %v1872, %v976
    %v1937 = vmul.f32 %v1873, %v977
    %v1938 = vmul.f32 %v1874, %v978
    %v1939 = vmul.f32 %v1875, %v979
    %v1940 = vmul.f32 %v1876, %v980
    %v1941 = vmul.f32 %v1877, %v981
    %v1942 = vmul.f32 %v1878, %v982
    %v1943 = vmul.f32 %v1879, %v983
    %v1944 = vmul.f32 %v1880, %v984
    %v1945 = vmul.f32 %v1881, %v985
    %v1946 = vmul.f32 %v1882, %v986
    %v1947 = vmul.f32 %v1883, %v987
    %v1948 = vmul.f32 %v1884, %v988
    %v1949 = vmul.f32 %v1885, %v989
    %v1950 = vmul.f32 %v1886, %v990
    %v1951 = vmul.f32 %v1887, %v991
    %v1952 = vmul.f32 %v1888, %v992
    %v1953 = vmul.f32 %v1889, %v993
    %v1954 = vmul.f32 %v1890, %v994
    %v1955 = vmul.f32 %v1891, %v995
    %v1956 = vmul.f32 %v1892, %v996
    %v1957 = vmul.f32 %v1893, %v997
    %v1958 = vmul.f32 %v1894, %v998
    %v1959 = vmul.f32 %v1895, %v999
    %v1960 = vmul.f32 %v1896, %v1000
    %v1961 = vmul.f32 %v1897, %v1001
    %v1962 = vmul.f32 %v1898, %v1002
    %v1963 = vmul.f32 %v1899, %v1003
    %v1964 = vmul.f32 %v1900, %v1004
    %v1965 = vmul.f32 %v1901, %v1005
    %v1966 = vmul.f32 %v1902, %v1006
    %v1967 = vmul.f32 %v1903, %v1007
    %v1968 = vmul.f32 %v1904, %v1008
    %v1969 = vmul.f32 %v1905, %v1009
    %v1970 = vmul.f32 %v1906, %v1010
    %v1971 = vmul.f32 %v1907, %v1011
    %v1972 = vmul.f32 %v1908, %v1012
    %v1973 = vmul.f32 %v1909, %v1013
    %v1974 = vmul.f32 %v1910, %v1014
    %v1975 = vmul.f32 %v1911, %v1015
    %v1976 = vmul.f32 %v1912, %v1016
    %v1977 = vmul.f32 %v1913, %v1017
    %v1978 = vmul.f32 %v1914, %v1018
    %v1979 = vmul.f32 %v1915, %v1019
    %v1980 = vmul.f32 %v1916, 1.442695
    %v1981 = vpow.pop %v1980
    %v1982 = vmul.f32 %v1917, 1.442695
    %v1983 = vpow.pop %v1982
    %v1984 = vmul.f32 %v1918, 1.442695
    %v1985 = vpow.pop %v1984
    %v1986 = vmul.f32 %v1919, 1.442695
    %v1987 = vpow.pop %v1986
    %v1988 = vmul.f32 %v1920, 1.442695
    %v1989 = vpow.pop %v1988
    %v1990 = vmul.f32 %v1921, 1.442695
    %v1991 = vpow.pop %v1990
    %v1992 = vmul.f32 %v1922, 1.442695
    %v1993 = vpow.pop %v1992
    %v1994 = vmul.f32 %v1923, 1.442695
    %v1995 = vpow.pop %v1994
    %v1996 = vmul.f32 %v1924, 1.442695
    %v1997 = vpow.pop %v1996
    %v1998 = vmul.f32 %v1925, 1.442695
    %v1999 = vpow.pop %v1998
    %v2000 = vmul.f32 %v1926, 1.442695
    %v2001 = vpow.pop %v2000
    %v2002 = vmul.f32 %v1927, 1.442695
    %v2003 = vpow.pop %v2002
    %v2004 = vmul.f32 %v1928, 1.442695
    %v2005 = vpow.pop %v2004
    %v2006 = vmul.f32 %v1929, 1.442695
    %v2007 = vpow.pop %v2006
    %v2008 = vmul.f32 %v1930, 1.442695
    %v2009 = vpow.pop %v2008
    %v2010 = vmul.f32 %v1931, 1.442695
    %v2011 = vpow.pop %v2010
    %v2012 = vmul.f32 %v1932, 1.442695
    %v2013 = vpow.pop %v2012
    %v2014 = vmul.f32 %v1933, 1.442695
    %v2015 = vpow.pop %v2014
    %v2016 = vmul.f32 %v1934, 1.442695
    %v2017 = vpow.pop %v2016
    %v2018 = vmul.f32 %v1935, 1.442695
    %v2019 = vpow.pop %v2018
    %v2020 = vmul.f32 %v1936, 1.442695
    %v2021 = vpow.pop %v2020
    %v2022 = vmul.f32 %v1937, 1.442695
    %v2023 = vpow.pop %v2022
    %v2024 = vmul.f32 %v1938, 1.442695
    %v2025 = vpow.pop %v2024
    %v2026 = vmul.f32 %v1939, 1.442695
    %v2027 = vpow.pop %v2026
    %v2028 = vmul.f32 %v1940, 1.442695
    %v2029 = vpow.pop %v2028
    %v2030 = vmul.f32 %v1941, 1.442695
    %v2031 = vpow.pop %v2030
    %v2032 = vmul.f32 %v1942, 1.442695
    %v2033 = vpow.pop %v2032
    %v2034 = vmul.f32 %v1943, 1.442695
    %v2035 = vpow.pop %v2034
    %v2036 = vmul.f32 %v1944, 1.442695
    %v2037 = vpow.pop %v2036
    %v2038 = vmul.f32 %v1945, 1.442695
    %v2039 = vpow.pop %v2038
    %v2040 = vmul.f32 %v1946, 1.442695
    %v2041 = vpow.pop %v2040
    %v2042 = vmul.f32 %v1947, 1.442695
    %v2043 = vpow.pop %v2042
    %v2044 = vmul.f32 %v1948, 1.442695
    %v2045 = vpow.pop %v2044
    %v2046 = vmul.f32 %v1949, 1.442695
    %v2047 = vpow.pop %v2046
    %v2048 = vmul.f32 %v1950, 1.442695
    %v2049 = vpow.pop %v2048
    %v2050 = vmul.f32 %v1951, 1.442695
    %v2051 = vpow.pop %v2050
    %v2052 = vmul.f32 %v1952, 1.442695
    %v2053 = vpow.pop %v2052
    %v2054 = vmul.f32 %v1953, 1.442695
    %v2055 = vpow.pop %v2054
    %v2056 = vmul.f32 %v1954, 1.442695
    %v2057 = vpow.pop %v2056
    %v2058 = vmul.f32 %v1955, 1.442695
    %v2059 = vpow.pop %v2058
    %v2060 = vmul.f32 %v1956, 1.442695
    %v2061 = vpow.pop %v2060
    %v2062 = vmul.f32 %v1957, 1.442695
    %v2063 = vpow.pop %v2062
    %v2064 = vmul.f32 %v1958, 1.442695
    %v2065 = vpow.pop %v2064
    %v2066 = vmul.f32 %v1959, 1.442695
    %v2067 = vpow.pop %v2066
    %v2068 = vmul.f32 %v1960, 1.442695
    %v2069 = vpow.pop %v2068
    %v2070 = vmul.f32 %v1961, 1.442695
    %v2071 = vpow.pop %v2070
    %v2072 = vmul.f32 %v1962, 1.442695
    %v2073 = vpow.pop %v2072
    %v2074 = vmul.f32 %v1963, 1.442695
    %v2075 = vpow.pop %v2074
    %v2076 = vmul.f32 %v1964, 1.442695
    %v2077 = vpow.pop %v2076
    %v2078 = vmul.f32 %v1965, 1.442695
    %v2079 = vpow.pop %v2078
    %v2080 = vmul.f32 %v1966, 1.442695
    %v2081 = vpow.pop %v2080
    %v2082 = vmul.f32 %v1967, 1.442695
    %v2083 = vpow.pop %v2082
    %v2084 = vmul.f32 %v1968, 1.442695
    %v2085 = vpow.pop %v2084
    %v2086 = vmul.f32 %v1969, 1.442695
    %v2087 = vpow.pop %v2086
    %v2088 = vmul.f32 %v1970, 1.442695
    %v2089 = vpow.pop %v2088
    %v2090 = vmul.f32 %v1971, 1.442695
    %v2091 = vpow.pop %v2090
    %v2092 = vmul.f32 %v1972, 1.442695
    %v2093 = vpow.pop %v2092
    %v2094 = vmul.f32 %v1973, 1.442695
    %v2095 = vpow.pop %v2094
    %v2096 = vmul.f32 %v1974, 1.442695
    %v2097 = vpow.pop %v2096
    %v2098 = vmul.f32 %v1975, 1.442695
    %v2099 = vpow.pop %v2098
    %v2100 = vmul.f32 %v1976, 1.442695
    %v2101 = vpow.pop %v2100
    %v2102 = vmul.f32 %v1977, 1.442695
    %v2103 = vpow.pop %v2102
    %v2104 = vmul.f32 %v1978, 1.442695
    %v2105 = vpow.pop %v2104
    %v2106 = vmul.f32 %v1979, 1.442695
    %v2107 = vpow.pop %v2106
    %v2108 = vmul.f32 %v1788, %v1981
    %v2109 = vmul.f32 %v1789, %v1983
    %v2110 = vmul.f32 %v1790, %v1985
    %v2111 = vmul.f32 %v1791, %v1987
    %v2112 = vmul.f32 %v1792, %v1989
    %v2113 = vmul.f32 %v1793, %v1991
    %v2114 = vmul.f32 %v1794, %v1993
    %v2115 = vmul.f32 %v1795, %v1995
    %v2116 = vmul.f32 %v1796, %v1997
    %v2117 = vmul.f32 %v1797, %v1999
    %v2118 = vmul.f32 %v1798, %v2001
    %v2119 = vmul.f32 %v1799, %v2003
    %v2120 = vmul.f32 %v1800, %v2005
    %v2121 = vmul.f32 %v1801, %v2007
    %v2122 = vmul.f32 %v1802, %v2009
    %v2123 = vmul.f32 %v1803, %v2011
    %v2124 = vmul.f32 %v1804, %v2013
    %v2125 = vmul.f32 %v1805, %v2015
    %v2126 = vmul.f32 %v1806, %v2017
    %v2127 = vmul.f32 %v1807, %v2019
    %v2128 = vmul.f32 %v1808, %v2021
    %v2129 = vmul.f32 %v1809, %v2023
    %v2130 = vmul.f32 %v1810, %v2025
    %v2131 = vmul.f32 %v1811, %v2027
    %v2132 = vmul.f32 %v1812, %v2029
    %v2133 = vmul.f32 %v1813, %v2031
    %v2134 = vmul.f32 %v1814, %v2033
    %v2135 = vmul.f32 %v1815, %v2035
    %v2136 = vmul.f32 %v1816, %v2037
    %v2137 = vmul.f32 %v1817, %v2039
    %v2138 = vmul.f32 %v1818, %v2041
    %v2139 = vmul.f32 %v1819, %v2043
    %v2140 = vmul.f32 %v1820, %v2045
    %v2141 = vmul.f32 %v1821, %v2047
    %v2142 = vmul.f32 %v1822, %v2049
    %v2143 = vmul.f32 %v1823, %v2051
    %v2144 = vmul.f32 %v1824, %v2053
    %v2145 = vmul.f32 %v1825, %v2055
    %v2146 = vmul.f32 %v1826, %v2057
    %v2147 = vmul.f32 %v1827, %v2059
    %v2148 = vmul.f32 %v1828, %v2061
    %v2149 = vmul.f32 %v1829, %v2063
    %v2150 = vmul.f32 %v1830, %v2065
    %v2151 = vmul.f32 %v1831, %v2067
    %v2152 = vmul.f32 %v1832, %v2069
    %v2153 = vmul.f32 %v1833, %v2071
    %v2154 = vmul.f32 %v1834, %v2073
    %v2155 = vmul.f32 %v1835, %v2075
    %v2156 = vmul.f32 %v1836, %v2077
    %v2157 = vmul.f32 %v1837, %v2079
    %v2158 = vmul.f32 %v1838, %v2081
    %v2159 = vmul.f32 %v1839, %v2083
    %v2160 = vmul.f32 %v1840, %v2085
    %v2161 = vmul.f32 %v1841, %v2087
    %v2162 = vmul.f32 %v1842, %v2089
    %v2163 = vmul.f32 %v1843, %v2091
    %v2164 = vmul.f32 %v1844, %v2093
    %v2165 = vmul.f32 %v1845, %v2095
    %v2166 = vmul.f32 %v1846, %v2097
    %v2167 = vmul.f32 %v1847, %v2099
    %v2168 = vmul.f32 %v1848, %v2101
    %v2169 = vmul.f32 %v1849, %v2103
    %v2170 = vmul.f32 %v1850, %v2105
    %v2171 = vmul.f32 %v1851, %v2107
    %v2172 = vsub.f32 1.0, %v2108
    %v2173 = vsub.f32 1.0, %v2109
    %v2174 = vsub.f32 1.0, %v2110
    %v2175 = vsub.f32 1.0, %v2111
    %v2176 = vsub.f32 1.0, %v2112
    %v2177 = vsub.f32 1.0, %v2113
    %v2178 = vsub.f32 1.0, %v2114
    %v2179 = vsub.f32 1.0, %v2115
    %v2180 = vsub.f32 1.0, %v2116
    %v2181 = vsub.f32 1.0, %v2117
    %v2182 = vsub.f32 1.0, %v2118
    %v2183 = vsub.f32 1.0, %v2119
    %v2184 = vsub.f32 1.0, %v2120
    %v2185 = vsub.f32 1.0, %v2121
    %v2186 = vsub.f32 1.0, %v2122
    %v2187 = vsub.f32 1.0, %v2123
    %v2188 = vsub.f32 1.0, %v2124
    %v2189 = vsub.f32 1.0, %v2125
    %v2190 = vsub.f32 1.0, %v2126
    %v2191 = vsub.f32 1.0, %v2127
    %v2192 = vsub.f32 1.0, %v2128
    %v2193 = vsub.f32 1.0, %v2129
    %v2194 = vsub.f32 1.0, %v2130
    %v2195 = vsub.f32 1.0, %v2131
    %v2196 = vsub.f32 1.0, %v2132
    %v2197 = vsub.f32 1.0, %v2133
    %v2198 = vsub.f32 1.0, %v2134
    %v2199 = vsub.f32 1.0, %v2135
    %v2200 = vsub.f32 1.0, %v2136
    %v2201 = vsub.f32 1.0, %v2137
    %v2202 = vsub.f32 1.0, %v2138
    %v2203 = vsub.f32 1.0, %v2139
    %v2204 = vsub.f32 1.0, %v2140
    %v2205 = vsub.f32 1.0, %v2141
    %v2206 = vsub.f32 1.0, %v2142
    %v2207 = vsub.f32 1.0, %v2143
    %v2208 = vsub.f32 1.0, %v2144
    %v2209 = vsub.f32 1.0, %v2145
    %v2210 = vsub.f32 1.0, %v2146
    %v2211 = vsub.f32 1.0, %v2147
    %v2212 = vsub.f32 1.0, %v2148
    %v2213 = vsub.f32 1.0, %v2149
    %v2214 = vsub.f32 1.0, %v2150
    %v2215 = vsub.f32 1.0, %v2151
    %v2216 = vsub.f32 1.0, %v2152
    %v2217 = vsub.f32 1.0, %v2153
    %v2218 = vsub.f32 1.0, %v2154
    %v2219 = vsub.f32 1.0, %v2155
    %v2220 = vsub.f32 1.0, %v2156
    %v2221 = vsub.f32 1.0, %v2157
    %v2222 = vsub.f32 1.0, %v2158
    %v2223 = vsub.f32 1.0, %v2159
    %v2224 = vsub.f32 1.0, %v2160
    %v2225 = vsub.f32 1.0, %v2161
    %v2226 = vsub.f32 1.0, %v2162
    %v2227 = vsub.f32 1.0, %v2163
    %v2228 = vsub.f32 1.0, %v2164
    %v2229 = vsub.f32 1.0, %v2165
    %v2230 = vsub.f32 1.0, %v2166
    %v2231 = vsub.f32 1.0, %v2167
    %v2232 = vsub.f32 1.0, %v2168
    %v2233 = vsub.f32 1.0, %v2169
    %v2234 = vsub.f32 1.0, %v2170
    %v2235 = vsub.f32 1.0, %v2171
    %v2236 = vmul.f32 %v892, %v2172
    %v2237 = vmul.f32 %v893, %v2173
    %v2238 = vmul.f32 %v894, %v2174
    %v2239 = vmul.f32 %v895, %v2175
    %v2240 = vmul.f32 %v896, %v2176
    %v2241 = vmul.f32 %v897, %v2177
    %v2242 = vmul.f32 %v898, %v2178
    %v2243 = vmul.f32 %v899, %v2179
    %v2244 = vmul.f32 %v900, %v2180
    %v2245 = vmul.f32 %v901, %v2181
    %v2246 = vmul.f32 %v902, %v2182
    %v2247 = vmul.f32 %v903, %v2183
    %v2248 = vmul.f32 %v904, %v2184
    %v2249 = vmul.f32 %v905, %v2185
    %v2250 = vmul.f32 %v906, %v2186
    %v2251 = vmul.f32 %v907, %v2187
    %v2252 = vmul.f32 %v908, %v2188
    %v2253 = vmul.f32 %v909, %v2189
    %v2254 = vmul.f32 %v910, %v2190
    %v2255 = vmul.f32 %v911, %v2191
    %v2256 = vmul.f32 %v912, %v2192
    %v2257 = vmul.f32 %v913, %v2193
    %v2258 = vmul.f32 %v914, %v2194
    %v2259 = vmul.f32 %v915, %v2195
    %v2260 = vmul.f32 %v916, %v2196
    %v2261 = vmul.f32 %v917, %v2197
    %v2262 = vmul.f32 %v918, %v2198
    %v2263 = vmul.f32 %v919, %v2199
    %v2264 = vmul.f32 %v920, %v2200
    %v2265 = vmul.f32 %v921, %v2201
    %v2266 = vmul.f32 %v922, %v2202
    %v2267 = vmul.f32 %v923, %v2203
    %v2268 = vmul.f32 %v924, %v2204
    %v2269 = vmul.f32 %v925, %v2205
    %v2270 = vmul.f32 %v926, %v2206
    %v2271 = vmul.f32 %v927, %v2207
    %v2272 = vmul.f32 %v928, %v2208
    %v2273 = vmul.f32 %v929, %v2209
    %v2274 = vmul.f32 %v930, %v2210
    %v2275 = vmul.f32 %v931, %v2211
    %v2276 = vmul.f32 %v932, %v2212
    %v2277 = vmul.f32 %v933, %v2213
    %v2278 = vmul.f32 %v934, %v2214
    %v2279 = vmul.f32 %v935, %v2215
    %v2280 = vmul.f32 %v936, %v2216
    %v2281 = vmul.f32 %v937, %v2217
    %v2282 = vmul.f32 %v938, %v2218
    %v2283 = vmul.f32 %v939, %v2219
    %v2284 = vmul.f32 %v940, %v2220
    %v2285 = vmul.f32 %v941, %v2221
    %v2286 = vmul.f32 %v942, %v2222
    %v2287 = vmul.f32 %v943, %v2223
    %v2288 = vmul.f32 %v944, %v2224
    %v2289 = vmul.f32 %v945, %v2225
    %v2290 = vmul.f32 %v946, %v2226
    %v2291 = vmul.f32 %v947, %v2227
    %v2292 = vmul.f32 %v948, %v2228
    %v2293 = vmul.f32 %v949, %v2229
    %v2294 = vmul.f32 %v950, %v2230
    %v2295 = vmul.f32 %v951, %v2231
    %v2296 = vmul.f32 %v952, %v2232
    %v2297 = vmul.f32 %v953, %v2233
    %v2298 = vmul.f32 %v954, %v2234
    %v2299 = vmul.f32 %v955, %v2235
    %v2300 = vadd.f32 %v2236, 1.0
    %v2301 = vadd.f32 %v2237, 1.0
    %v2302 = vadd.f32 %v2238, 1.0
    %v2303 = vadd.f32 %v2239, 1.0
    %v2304 = vadd.f32 %v2240, 1.0
    %v2305 = vadd.f32 %v2241, 1.0
    %v2306 = vadd.f32 %v2242, 1.0
    %v2307 = vadd.f32 %v2243, 1.0
    %v2308 = vadd.f32 %v2244, 1.0
    %v2309 = vadd.f32 %v2245, 1.0
    %v2310 = vadd.f32 %v2246, 1.0
    %v2311 = vadd.f32 %v2247, 1.0
    %v2312 = vadd.f32 %v2248, 1.0
    %v2313 = vadd.f32 %v2249, 1.0
    %v2314 = vadd.f32 %v2250, 1.0
    %v2315 = vadd.f32 %v2251, 1.0
    %v2316 = vadd.f32 %v2252, 1.0
    %v2317 = vadd.f32 %v2253, 1.0
    %v2318 = vadd.f32 %v2254, 1.0
    %v2319 = vadd.f32 %v2255, 1.0
    %v2320 = vadd.f32 %v2256, 1.0
    %v2321 = vadd.f32 %v2257, 1.0
    %v2322 = vadd.f32 %v2258, 1.0
    %v2323 = vadd.f32 %v2259, 1.0
    %v2324 = vadd.f32 %v2260, 1.0
    %v2325 = vadd.f32 %v2261, 1.0
    %v2326 = vadd.f32 %v2262, 1.0
    %v2327 = vadd.f32 %v2263, 1.0
    %v2328 = vadd.f32 %v2264, 1.0
    %v2329 = vadd.f32 %v2265, 1.0
    %v2330 = vadd.f32 %v2266, 1.0
    %v2331 = vadd.f32 %v2267, 1.0
    %v2332 = vadd.f32 %v2268, 1.0
    %v2333 = vadd.f32 %v2269, 1.0
    %v2334 = vadd.f32 %v2270, 1.0
    %v2335 = vadd.f32 %v2271, 1.0
    %v2336 = vadd.f32 %v2272, 1.0
    %v2337 = vadd.f32 %v2273, 1.0
    %v2338 = vadd.f32 %v2274, 1.0
    %v2339 = vadd.f32 %v2275, 1.0
    %v2340 = vadd.f32 %v2276, 1.0
    %v2341 = vadd.f32 %v2277, 1.0
    %v2342 = vadd.f32 %v2278, 1.0
    %v2343 = vadd.f32 %v2279, 1.0
    %v2344 = vadd.f32 %v2280, 1.0
    %v2345 = vadd.f32 %v2281, 1.0
    %v2346 = vadd.f32 %v2282, 1.0
    %v2347 = vadd.f32 %v2283, 1.0
    %v2348 = vadd.f32 %v2284, 1.0
    %v2349 = vadd.f32 %v2285, 1.0
    %v2350 = vadd.f32 %v2286, 1.0
    %v2351 = vadd.f32 %v2287, 1.0
    %v2352 = vadd.f32 %v2288, 1.0
    %v2353 = vadd.f32 %v2289, 1.0
    %v2354 = vadd.f32 %v2290, 1.0
    %v2355 = vadd.f32 %v2291, 1.0
    %v2356 = vadd.f32 %v2292, 1.0
    %v2357 = vadd.f32 %v2293, 1.0
    %v2358 = vadd.f32 %v2294, 1.0
    %v2359 = vadd.f32 %v2295, 1.0
    %v2360 = vadd.f32 %v2296, 1.0
    %v2361 = vadd.f32 %v2297, 1.0
    %v2362 = vadd.f32 %v2298, 1.0
    %v2363 = vadd.f32 %v2299, 1.0
    %v2364 = vmul.f32 %v700, %v2300
    %v2365 = vmul.f32 %v701, %v2301
    %v2366 = vmul.f32 %v702, %v2302
    %v2367 = vmul.f32 %v703, %v2303
    %v2368 = vmul.f32 %v704, %v2304
    %v2369 = vmul.f32 %v705, %v2305
    %v2370 = vmul.f32 %v706, %v2306
    %v2371 = vmul.f32 %v707, %v2307
    %v2372 = vmul.f32 %v708, %v2308
    %v2373 = vmul.f32 %v709, %v2309
    %v2374 = vmul.f32 %v710, %v2310
    %v2375 = vmul.f32 %v711, %v2311
    %v2376 = vmul.f32 %v712, %v2312
    %v2377 = vmul.f32 %v713, %v2313
    %v2378 = vmul.f32 %v714, %v2314
    %v2379 = vmul.f32 %v715, %v2315
    %v2380 = vmul.f32 %v716, %v2316
    %v2381 = vmul.f32 %v717, %v2317
    %v2382 = vmul.f32 %v718, %v2318
    %v2383 = vmul.f32 %v719, %v2319
    %v2384 = vmul.f32 %v720, %v2320
    %v2385 = vmul.f32 %v721, %v2321
    %v2386 = vmul.f32 %v722, %v2322
    %v2387 = vmul.f32 %v723, %v2323
    %v2388 = vmul.f32 %v724, %v2324
    %v2389 = vmul.f32 %v725, %v2325
    %v2390 = vmul.f32 %v726, %v2326
    %v2391 = vmul.f32 %v727, %v2327
    %v2392 = vmul.f32 %v728, %v2328
    %v2393 = vmul.f32 %v729, %v2329
    %v2394 = vmul.f32 %v730, %v2330
    %v2395 = vmul.f32 %v731, %v2331
    %v2396 = vmul.f32 %v732, %v2332
    %v2397 = vmul.f32 %v733, %v2333
    %v2398 = vmul.f32 %v734, %v2334
    %v2399 = vmul.f32 %v735, %v2335
    %v2400 = vmul.f32 %v736, %v2336
    %v2401 = vmul.f32 %v737, %v2337
    %v2402 = vmul.f32 %v738, %v2338
    %v2403 = vmul.f32 %v739, %v2339
    %v2404 = vmul.f32 %v740, %v2340
    %v2405 = vmul.f32 %v741, %v2341
    %v2406 = vmul.f32 %v742, %v2342
    %v2407 = vmul.f32 %v743, %v2343
    %v2408 = vmul.f32 %v744, %v2344
    %v2409 = vmul.f32 %v745, %v2345
    %v2410 = vmul.f32 %v746, %v2346
    %v2411 = vmul.f32 %v747, %v2347
    %v2412 = vmul.f32 %v748, %v2348
    %v2413 = vmul.f32 %v749, %v2349
    %v2414 = vmul.f32 %v750, %v2350
    %v2415 = vmul.f32 %v751, %v2351
    %v2416 = vmul.f32 %v752, %v2352
    %v2417 = vmul.f32 %v753, %v2353
    %v2418 = vmul.f32 %v754, %v2354
    %v2419 = vmul.f32 %v755, %v2355
    %v2420 = vmul.f32 %v756, %v2356
    %v2421 = vmul.f32 %v757, %v2357
    %v2422 = vmul.f32 %v758, %v2358
    %v2423 = vmul.f32 %v759, %v2359
    %v2424 = vmul.f32 %v760, %v2360
    %v2425 = vmul.f32 %v761, %v2361
    %v2426 = vmul.f32 %v762, %v2362
    %v2427 = vmul.f32 %v763, %v2363
    %v2428 = vld [vmem:[#allocation7] sm:$0xff]
    %v2429 = vld [vmem:[#allocation7 + $0x8] sm:$0xff]
    %v2431 = vsel %vm122, %v2364, 0
    %v2434 = vsel %vm122, %v2365, 0
    %v2437 = vsel %vm122, %v2366, 0
    %v2440 = vsel %vm122, %v2367, 0
    %v2443 = vsel %vm122, %v2368, 0
    %v2446 = vsel %vm122, %v2369, 0
    %v2449 = vsel %vm122, %v2370, 0
    %v2452 = vsel %vm122, %v2371, 0
    %v2455 = vsel %vm122, %v2372, 0
    %v2458 = vsel %vm122, %v2373, 0
    %v2461 = vsel %vm122, %v2374, 0
    %v2464 = vsel %vm122, %v2375, 0
    %v2467 = vsel %vm122, %v2376, 0
    %v2470 = vsel %vm122, %v2377, 0
    %v2473 = vsel %vm122, %v2378, 0
    %v2476 = vsel %vm122, %v2379, 0
    %v2479 = vsel %vm122, %v2380, 0
    %v2482 = vsel %vm122, %v2381, 0
    %v2485 = vsel %vm122, %v2382, 0
    %v2488 = vsel %vm122, %v2383, 0
    %v2491 = vsel %vm122, %v2384, 0
    %v2494 = vsel %vm122, %v2385, 0
    %v2497 = vsel %vm122, %v2386, 0
    %v2500 = vsel %vm122, %v2387, 0
    %v2503 = vsel %vm122, %v2388, 0
    %v2506 = vsel %vm122, %v2389, 0
    %v2509 = vsel %vm122, %v2390, 0
    %v2512 = vsel %vm122, %v2391, 0
    %v2515 = vsel %vm122, %v2392, 0
    %v2518 = vsel %vm122, %v2393, 0
    %v2521 = vsel %vm122, %v2394, 0
    %v2524 = vsel %vm122, %v2395, 0
    %v2527 = vsel %vm122, %v2396, 0
    %v2530 = vsel %vm122, %v2397, 0
    %v2533 = vsel %vm122, %v2398, 0
    %v2536 = vsel %vm122, %v2399, 0
    %v2539 = vsel %vm122, %v2400, 0
    %v2542 = vsel %vm122, %v2401, 0
    %v2545 = vsel %vm122, %v2402, 0
    %v2548 = vsel %vm122, %v2403, 0
    %v2551 = vsel %vm122, %v2404, 0
    %v2554 = vsel %vm122, %v2405, 0
    %v2557 = vsel %vm122, %v2406, 0
    %v2560 = vsel %vm122, %v2407, 0
    %v2563 = vsel %vm122, %v2408, 0
    %v2566 = vsel %vm122, %v2409, 0
    %v2569 = vsel %vm122, %v2410, 0
    %v2572 = vsel %vm122, %v2411, 0
    %v2575 = vsel %vm122, %v2412, 0
    %v2578 = vsel %vm122, %v2413, 0
    %v2581 = vsel %vm122, %v2414, 0
    %v2584 = vsel %vm122, %v2415, 0
    %v2587 = vsel %vm122, %v2416, 0
    %v2590 = vsel %vm122, %v2417, 0
    %v2593 = vsel %vm122, %v2418, 0
    %v2596 = vsel %vm122, %v2419, 0
    %v2599 = vsel %vm122, %v2420, 0
    %v2602 = vsel %vm122, %v2421, 0
    %v2605 = vsel %vm122, %v2422, 0
    %v2608 = vsel %vm122, %v2423, 0
    %v2611 = vsel %vm122, %v2424, 0
    %v2614 = vsel %vm122, %v2425, 0
    %v2617 = vsel %vm122, %v2426, 0
    %v2620 = vsel %vm122, %v2427, 0
    %2622 = vmatprep.subr.mxu0 0.0
    %2623 = vmatpush1.msra.mxu0 %v2428
    %2624 = vmatprep.subr.mxu0 0.0
    %2625 = vmatpush1.msra.mxu0 %v2429
    %2626 = vmatprep.subr.mxu0 0.0
    %2627 = vmatpush1.msra.mxu0 0.0
    %2628 = vmatprep.subr.mxu0 0.0
    %2629 = vmatpush1.msra.mxu0 0.0
    %2630 = vmatprep.subr.mxu0 0.0
    %2631 = vmatpush1.msra.mxu0 0.0
    %2632 = vmatprep.subr.mxu0 0.0
    %2633 = vmatpush1.msra.mxu0 0.0
    %2634 = vmatprep.subr.mxu0 0.0
    %2635 = vmatpush1.msra.mxu0 0.0
    %2636 = vmatprep.subr.mxu0 0.0
    %2637 = vmatpush1.msra.mxu0 0.0
    %2638 = vmatprep.subr.mxu0 0.0
    %2639 = vmatpush1.msra.mxu0 0.0
    %2640 = vmatprep.subr.mxu0 0.0
    %2641 = vmatpush1.msra.mxu0 0.0
    %2642 = vmatprep.subr.mxu0 0.0
    %2643 = vmatpush1.msra.mxu0 0.0
    %2644 = vmatprep.subr.mxu0 0.0
    %2645 = vmatpush1.msra.mxu0 0.0
    %2646 = vmatprep.subr.mxu0 0.0
    %2647 = vmatpush1.msra.mxu0 0.0
    %2648 = vmatprep.subr.mxu0 0.0
    %2649 = vmatpush1.msra.mxu0 0.0
    %2650 = vmatprep.subr.mxu0 0.0
    %2651 = vmatpush1.msra.mxu0 0.0
    %2652 = vmatprep.subr.mxu0 0.0
    %2653 = vmatpush1.msra.mxu0 0.0
    %2654 = vmatprep.subr.mxu0 0.0
    %2655 = vmatpush1.msra.mxu0 0.0
    %2656 = vmatprep.subr.mxu0 0.0
    %2657 = vmatpush1.msra.mxu0 0.0
    %2658 = vmatprep.subr.mxu0 0.0
    %2659 = vmatpush1.msra.mxu0 0.0
    %2660 = vmatprep.subr.mxu0 0.0
    %2661 = vmatpush1.msra.mxu0 0.0
    %2662 = vmatprep.subr.mxu0 0.0
    %2663 = vmatpush1.msra.mxu0 0.0
    %2664 = vmatprep.subr.mxu0 0.0
    %2665 = vmatpush1.msra.mxu0 0.0
    %2666 = vmatprep.subr.mxu0 0.0
    %2667 = vmatpush1.msra.mxu0 0.0
    %2668 = vmatprep.subr.mxu0 0.0
    %2669 = vmatpush1.msra.mxu0 0.0
    %2670 = vmatprep.subr.mxu0 0.0
    %2671 = vmatpush1.msra.mxu0 0.0
    %2672 = vmatprep.subr.mxu0 0.0
    %2673 = vmatpush1.msra.mxu0 0.0
    %2674 = vmatprep.subr.mxu0 0.0
    %2675 = vmatpush1.msra.mxu0 0.0
    %2676 = vmatprep.subr.mxu0 0.0
    %2677 = vmatpush1.msra.mxu0 0.0
    %2678 = vmatprep.subr.mxu0 0.0
    %2679 = vmatpush1.msra.mxu0 0.0
    %2680 = vmatprep.subr.mxu0 0.0
    %2681 = vmatpush1.msra.mxu0 0.0
    %2682 = vmatprep.subr.mxu0 0.0
    %2683 = vmatpush1.msra.mxu0 0.0
    %2684 = vmatprep.subr.mxu0 0.0
    %2685 = vmatpush1.msra.mxu0 0.0
    %2686 = vmatprep.mubr.f32.mxu0 0.0
    %2687 = vmatmul.mubr.f32.gmra.mrb[0].mxu0 %v2431
    %v2688 = vpop.f32.mrb[0].mxu0
    %v2689 = vadd.f32 0.0, %v2688
    %v2690 = vpop.f32.mrb[0].mxu0
    %2691 = vmatprep.mubr.f32.mxu0 0.0
    %2692 = vmatmul.mubr.f32.gmra.mrb[0].mxu0 %v2434
    %v2693 = vpop.f32.mrb[0].mxu0
    %v2694 = vadd.f32 0.0, %v2693
    %v2695 = vpop.f32.mrb[0].mxu0
    %2696 = vmatprep.mubr.f32.mxu0 0.0
    %2697 = vmatmul.mubr.f32.gmra.mrb[0].mxu0 %v2437
    %v2698 = vpop.f32.mrb[0].mxu0
    %v2699 = vadd.f32 0.0, %v2698
    %v2700 = vpop.f32.mrb[0].mxu0
    %2701 = vmatprep.mubr.f32.mxu0 0.0
    %2702 = vmatmul.mubr.f32.gmra.mrb[0].mxu0 %v2440
    %v2703 = vpop.f32.mrb[0].mxu0
    %v2704 = vadd.f32 0.0, %v2703
    %v2705 = vpop.f32.mrb[0].mxu0
    %2706 = vmatprep.mubr.f32.mxu0 0.0
    %2707 = vmatmul.mubr.f32.gmra.mrb[0].mxu0 %v2443
    %v2708 = vpop.f32.mrb[0].mxu0
    %v2709 = vadd.f32 0.0, %v2708
    %v2710 = vpop.f32.mrb[0].mxu0
    %2711 = vmatprep.mubr.f32.mxu0 0.0
    %2712 = vmatmul.mubr.f32.gmra.mrb[0].mxu0 %v2446
    %v2713 = vpop.f32.mrb[0].mxu0
    %v2714 = vadd.f32 0.0, %v2713
    %v2715 = vpop.f32.mrb[0].mxu0
    %2716 = vmatprep.mubr.f32.mxu0 0.0
    %2717 = vmatmul.mubr.f32.gmra.mrb[0].mxu0 %v2449
    %v2718 = vpop.f32.mrb[0].mxu0
    %v2719 = vadd.f32 0.0, %v2718
    %v2720 = vpop.f32.mrb[0].mxu0
    %2721 = vmatprep.mubr.f32.mxu0 0.0
    %2722 = vmatmul.mubr.f32.gmra.mrb[0].mxu0 %v2452
    %v2723 = vpop.f32.mrb[0].mxu0
    %v2724 = vadd.f32 0.0, %v2723
    %v2725 = vpop.f32.mrb[0].mxu0
    %2726 = vmatprep.mubr.f32.mxu0 0.0
    %2727 = vmatmul.mubr.f32.gmra.mrb[0].mxu0 %v2455
    %v2728 = vpop.f32.mrb[0].mxu0
    %v2729 = vadd.f32 0.0, %v2728
    %v2730 = vpop.f32.mrb[0].mxu0
    %2731 = vmatprep.mubr.f32.mxu0 0.0
    %2732 = vmatmul.mubr.f32.gmra.mrb[0].mxu0 %v2458
    %v2733 = vpop.f32.mrb[0].mxu0
    %v2734 = vadd.f32 0.0, %v2733
    %v2735 = vpop.f32.mrb[0].mxu0
    %2736 = vmatprep.mubr.f32.mxu0 0.0
    %2737 = vmatmul.mubr.f32.gmra.mrb[0].mxu0 %v2461
    %v2738 = vpop.f32.mrb[0].mxu0
    %v2739 = vadd.f32 0.0, %v2738
    %v2740 = vpop.f32.mrb[0].mxu0
    %2741 = vmatprep.mubr.f32.mxu0 0.0
    %2742 = vmatmul.mubr.f32.gmra.mrb[0].mxu0 %v2464
    %v2743 = vpop.f32.mrb[0].mxu0
    %v2744 = vadd.f32 0.0, %v2743
    %v2745 = vpop.f32.mrb[0].mxu0
    %2746 = vmatprep.mubr.f32.mxu0 0.0
    %2747 = vmatmul.mubr.f32.gmra.mrb[0].mxu0 %v2467
    %v2748 = vpop.f32.mrb[0].mxu0
    %v2749 = vadd.f32 0.0, %v2748
    %v2750 = vpop.f32.mrb[0].mxu0
    %2751 = vmatprep.mubr.f32.mxu0 0.0
    %2752 = vmatmul.mubr.f32.gmra.mrb[0].mxu0 %v2470
    %v2753 = vpop.f32.mrb[0].mxu0
    %v2754 = vadd.f32 0.0, %v2753
    %v2755 = vpop.f32.mrb[0].mxu0
    %2756 = vmatprep.mubr.f32.mxu0 0.0
    %2757 = vmatmul.mubr.f32.gmra.mrb[0].mxu0 %v2473
    %v2758 = vpop.f32.mrb[0].mxu0
    %v2759 = vadd.f32 0.0, %v2758
    %v2760 = vpop.f32.mrb[0].mxu0
    %2761 = vmatprep.mubr.f32.mxu0 0.0
    %2762 = vmatmul.mubr.f32.gmra.mrb[0].mxu0 %v2476
    %v2763 = vpop.f32.mrb[0].mxu0
    %v2764 = vadd.f32 0.0, %v2763
    %v2765 = vpop.f32.mrb[0].mxu0
    %2766 = vmatprep.mubr.f32.mxu0 0.0
    %2767 = vmatmul.mubr.f32.gmra.mrb[0].mxu0 %v2479
    %v2768 = vpop.f32.mrb[0].mxu0
    %v2769 = vadd.f32 0.0, %v2768
    %v2770 = vpop.f32.mrb[0].mxu0
    %2771 = vmatprep.mubr.f32.mxu0 0.0
    %2772 = vmatmul.mubr.f32.gmra.mrb[0].mxu0 %v2482
    %v2773 = vpop.f32.mrb[0].mxu0
    %v2774 = vadd.f32 0.0, %v2773
    %v2775 = vpop.f32.mrb[0].mxu0
    %2776 = vmatprep.mubr.f32.mxu0 0.0
    %2777 = vmatmul.mubr.f32.gmra.mrb[0].mxu0 %v2485
    %v2778 = vpop.f32.mrb[0].mxu0
    %v2779 = vadd.f32 0.0, %v2778
    %v2780 = vpop.f32.mrb[0].mxu0
    %2781 = vmatprep.mubr.f32.mxu0 0.0
    %2782 = vmatmul.mubr.f32.gmra.mrb[0].mxu0 %v2488
    %v2783 = vpop.f32.mrb[0].mxu0
    %v2784 = vadd.f32 0.0, %v2783
    %v2785 = vpop.f32.mrb[0].mxu0
    %2786 = vmatprep.mubr.f32.mxu0 0.0
    %2787 = vmatmul.mubr.f32.gmra.mrb[0].mxu0 %v2491
    %v2788 = vpop.f32.mrb[0].mxu0
    %v2789 = vadd.f32 0.0, %v2788
    %v2790 = vpop.f32.mrb[0].mxu0
    %2791 = vmatprep.mubr.f32.mxu0 0.0
    %2792 = vmatmul.mubr.f32.gmra.mrb[0].mxu0 %v2494
    %v2793 = vpop.f32.mrb[0].mxu0
    %v2794 = vadd.f32 0.0, %v2793
    %v2795 = vpop.f32.mrb[0].mxu0
    %2796 = vmatprep.mubr.f32.mxu0 0.0
    %2797 = vmatmul.mubr.f32.gmra.mrb[0].mxu0 %v2497
    %v2798 = vpop.f32.mrb[0].mxu0
    %v2799 = vadd.f32 0.0, %v2798
    %v2800 = vpop.f32.mrb[0].mxu0
    %2801 = vmatprep.mubr.f32.mxu0 0.0
    %2802 = vmatmul.mubr.f32.gmra.mrb[0].mxu0 %v2500
    %v2803 = vpop.f32.mrb[0].mxu0
    %v2804 = vadd.f32 0.0, %v2803
    %v2805 = vpop.f32.mrb[0].mxu0
    %2806 = vmatprep.mubr.f32.mxu0 0.0
    %2807 = vmatmul.mubr.f32.gmra.mrb[0].mxu0 %v2503
    %v2808 = vpop.f32.mrb[0].mxu0
    %v2809 = vadd.f32 0.0, %v2808
    %v2810 = vpop.f32.mrb[0].mxu0
    %2811 = vmatprep.mubr.f32.mxu0 0.0
    %2812 = vmatmul.mubr.f32.gmra.mrb[0].mxu0 %v2506
    %v2813 = vpop.f32.mrb[0].mxu0
    %v2814 = vadd.f32 0.0, %v2813
    %v2815 = vpop.f32.mrb[0].mxu0
    %2816 = vmatprep.mubr.f32.mxu0 0.0
    %2817 = vmatmul.mubr.f32.gmra.mrb[0].mxu0 %v2509
    %v2818 = vpop.f32.mrb[0].mxu0
    %v2819 = vadd.f32 0.0, %v2818
    %v2820 = vpop.f32.mrb[0].mxu0
    %2821 = vmatprep.mubr.f32.mxu0 0.0
    %2822 = vmatmul.mubr.f32.gmra.mrb[0].mxu0 %v2512
    %v2823 = vpop.f32.mrb[0].mxu0
    %v2824 = vadd.f32 0.0, %v2823
    %v2825 = vpop.f32.mrb[0].mxu0
    %2826 = vmatprep.mubr.f32.mxu0 0.0
    %2827 = vmatmul.mubr.f32.gmra.mrb[0].mxu0 %v2515
    %v2828 = vpop.f32.mrb[0].mxu0
    %v2829 = vadd.f32 0.0, %v2828
    %v2830 = vpop.f32.mrb[0].mxu0
    %2831 = vmatprep.mubr.f32.mxu0 0.0
    %2832 = vmatmul.mubr.f32.gmra.mrb[0].mxu0 %v2518
    %v2833 = vpop.f32.mrb[0].mxu0
    %v2834 = vadd.f32 0.0, %v2833
    %v2835 = vpop.f32.mrb[0].mxu0
    %2836 = vmatprep.mubr.f32.mxu0 0.0
    %2837 = vmatmul.mubr.f32.gmra.mrb[0].mxu0 %v2521
    %v2838 = vpop.f32.mrb[0].mxu0
    %v2839 = vadd.f32 0.0, %v2838
    %v2840 = vpop.f32.mrb[0].mxu0
    %2841 = vmatprep.mubr.f32.mxu0 0.0
    %2842 = vmatmul.mubr.f32.gmra.mrb[0].mxu0 %v2524
    %v2843 = vpop.f32.mrb[0].mxu0
    %v2844 = vadd.f32 0.0, %v2843
    %v2845 = vpop.f32.mrb[0].mxu0
    %2846 = vmatprep.mubr.f32.mxu0 0.0
    %2847 = vmatmul.mubr.f32.gmra.mrb[0].mxu0 %v2527
    %v2848 = vpop.f32.mrb[0].mxu0
    %v2849 = vadd.f32 0.0, %v2848
    %v2850 = vpop.f32.mrb[0].mxu0
    %2851 = vmatprep.mubr.f32.mxu0 0.0
    %2852 = vmatmul.mubr.f32.gmra.mrb[0].mxu0 %v2530
    %v2853 = vpop.f32.mrb[0].mxu0
    %v2854 = vadd.f32 0.0, %v2853
    %v2855 = vpop.f32.mrb[0].mxu0
    %2856 = vmatprep.mubr.f32.mxu0 0.0
    %2857 = vmatmul.mubr.f32.gmra.mrb[0].mxu0 %v2533
    %v2858 = vpop.f32.mrb[0].mxu0
    %v2859 = vadd.f32 0.0, %v2858
    %v2860 = vpop.f32.mrb[0].mxu0
    %2861 = vmatprep.mubr.f32.mxu0 0.0
    %2862 = vmatmul.mubr.f32.gmra.mrb[0].mxu0 %v2536
    %v2863 = vpop.f32.mrb[0].mxu0
    %v2864 = vadd.f32 0.0, %v2863
    %v2865 = vpop.f32.mrb[0].mxu0
    %2866 = vmatprep.mubr.f32.mxu0 0.0
    %2867 = vmatmul.mubr.f32.gmra.mrb[0].mxu0 %v2539
    %v2868 = vpop.f32.mrb[0].mxu0
    %v2869 = vadd.f32 0.0, %v2868
    %v2870 = vpop.f32.mrb[0].mxu0
    %2871 = vmatprep.mubr.f32.mxu0 0.0
    %2872 = vmatmul.mubr.f32.gmra.mrb[0].mxu0 %v2542
    %v2873 = vpop.f32.mrb[0].mxu0
    %v2874 = vadd.f32 0.0, %v2873
    %v2875 = vpop.f32.mrb[0].mxu0
    %2876 = vmatprep.mubr.f32.mxu0 0.0
    %2877 = vmatmul.mubr.f32.gmra.mrb[0].mxu0 %v2545
    %v2878 = vpop.f32.mrb[0].mxu0
    %v2879 = vadd.f32 0.0, %v2878
    %v2880 = vpop.f32.mrb[0].mxu0
    %2881 = vmatprep.mubr.f32.mxu0 0.0
    %2882 = vmatmul.mubr.f32.gmra.mrb[0].mxu0 %v2548
    %v2883 = vpop.f32.mrb[0].mxu0
    %v2884 = vadd.f32 0.0, %v2883
    %v2885 = vpop.f32.mrb[0].mxu0
    %2886 = vmatprep.mubr.f32.mxu0 0.0
    %2887 = vmatmul.mubr.f32.gmra.mrb[0].mxu0 %v2551
    %v2888 = vpop.f32.mrb[0].mxu0
    %v2889 = vadd.f32 0.0, %v2888
    %v2890 = vpop.f32.mrb[0].mxu0
    %2891 = vmatprep.mubr.f32.mxu0 0.0
    %2892 = vmatmul.mubr.f32.gmra.mrb[0].mxu0 %v2554
    %v2893 = vpop.f32.mrb[0].mxu0
    %v2894 = vadd.f32 0.0, %v2893
    %v2895 = vpop.f32.mrb[0].mxu0
    %2896 = vmatprep.mubr.f32.mxu0 0.0
    %2897 = vmatmul.mubr.f32.gmra.mrb[0].mxu0 %v2557
    %v2898 = vpop.f32.mrb[0].mxu0
    %v2899 = vadd.f32 0.0, %v2898
    %v2900 = vpop.f32.mrb[0].mxu0
    %2901 = vmatprep.mubr.f32.mxu0 0.0
    %2902 = vmatmul.mubr.f32.gmra.mrb[0].mxu0 %v2560
    %v2903 = vpop.f32.mrb[0].mxu0
    %v2904 = vadd.f32 0.0, %v2903
    %v2905 = vpop.f32.mrb[0].mxu0
    %2906 = vmatprep.mubr.f32.mxu0 0.0
    %2907 = vmatmul.mubr.f32.gmra.mrb[0].mxu0 %v2563
    %v2908 = vpop.f32.mrb[0].mxu0
    %v2909 = vadd.f32 0.0, %v2908
    %v2910 = vpop.f32.mrb[0].mxu0
    %2911 = vmatprep.mubr.f32.mxu0 0.0
    %2912 = vmatmul.mubr.f32.gmra.mrb[0].mxu0 %v2566
    %v2913 = vpop.f32.mrb[0].mxu0
    %v2914 = vadd.f32 0.0, %v2913
    %v2915 = vpop.f32.mrb[0].mxu0
    %2916 = vmatprep.mubr.f32.mxu0 0.0
    %2917 = vmatmul.mubr.f32.gmra.mrb[0].mxu0 %v2569
    %v2918 = vpop.f32.mrb[0].mxu0
    %v2919 = vadd.f32 0.0, %v2918
    %v2920 = vpop.f32.mrb[0].mxu0
    %2921 = vmatprep.mubr.f32.mxu0 0.0
    %2922 = vmatmul.mubr.f32.gmra.mrb[0].mxu0 %v2572
    %v2923 = vpop.f32.mrb[0].mxu0
    %v2924 = vadd.f32 0.0, %v2923
    %v2925 = vpop.f32.mrb[0].mxu0
    %2926 = vmatprep.mubr.f32.mxu0 0.0
    %2927 = vmatmul.mubr.f32.gmra.mrb[0].mxu0 %v2575
    %v2928 = vpop.f32.mrb[0].mxu0
    %v2929 = vadd.f32 0.0, %v2928
    %v2930 = vpop.f32.mrb[0].mxu0
    %2931 = vmatprep.mubr.f32.mxu0 0.0
    %2932 = vmatmul.mubr.f32.gmra.mrb[0].mxu0 %v2578
    %v2933 = vpop.f32.mrb[0].mxu0
    %v2934 = vadd.f32 0.0, %v2933
    %v2935 = vpop.f32.mrb[0].mxu0
    %2936 = vmatprep.mubr.f32.mxu0 0.0
    %2937 = vmatmul.mubr.f32.gmra.mrb[0].mxu0 %v2581
    %v2938 = vpop.f32.mrb[0].mxu0
    %v2939 = vadd.f32 0.0, %v2938
    %v2940 = vpop.f32.mrb[0].mxu0
    %2941 = vmatprep.mubr.f32.mxu0 0.0
    %2942 = vmatmul.mubr.f32.gmra.mrb[0].mxu0 %v2584
    %v2943 = vpop.f32.mrb[0].mxu0
    %v2944 = vadd.f32 0.0, %v2943
    %v2945 = vpop.f32.mrb[0].mxu0
    %2946 = vmatprep.mubr.f32.mxu0 0.0
    %2947 = vmatmul.mubr.f32.gmra.mrb[0].mxu0 %v2587
    %v2948 = vpop.f32.mrb[0].mxu0
    %v2949 = vadd.f32 0.0, %v2948
    %v2950 = vpop.f32.mrb[0].mxu0
    %2951 = vmatprep.mubr.f32.mxu0 0.0
    %2952 = vmatmul.mubr.f32.gmra.mrb[0].mxu0 %v2590
    %v2953 = vpop.f32.mrb[0].mxu0
    %v2954 = vadd.f32 0.0, %v2953
    %v2955 = vpop.f32.mrb[0].mxu0
    %2956 = vmatprep.mubr.f32.mxu0 0.0
    %2957 = vmatmul.mubr.f32.gmra.mrb[0].mxu0 %v2593
    %v2958 = vpop.f32.mrb[0].mxu0
    %v2959 = vadd.f32 0.0, %v2958
    %v2960 = vpop.f32.mrb[0].mxu0
    %2961 = vmatprep.mubr.f32.mxu0 0.0
    %2962 = vmatmul.mubr.f32.gmra.mrb[0].mxu0 %v2596
    %v2963 = vpop.f32.mrb[0].mxu0
    %v2964 = vadd.f32 0.0, %v2963
    %v2965 = vpop.f32.mrb[0].mxu0
    %2966 = vmatprep.mubr.f32.mxu0 0.0
    %2967 = vmatmul.mubr.f32.gmra.mrb[0].mxu0 %v2599
    %v2968 = vpop.f32.mrb[0].mxu0
    %v2969 = vadd.f32 0.0, %v2968
    %v2970 = vpop.f32.mrb[0].mxu0
    %2971 = vmatprep.mubr.f32.mxu0 0.0
    %2972 = vmatmul.mubr.f32.gmra.mrb[0].mxu0 %v2602
    %v2973 = vpop.f32.mrb[0].mxu0
    %v2974 = vadd.f32 0.0, %v2973
    %v2975 = vpop.f32.mrb[0].mxu0
    %2976 = vmatprep.mubr.f32.mxu0 0.0
    %2977 = vmatmul.mubr.f32.gmra.mrb[0].mxu0 %v2605
    %v2978 = vpop.f32.mrb[0].mxu0
    %v2979 = vadd.f32 0.0, %v2978
    %v2980 = vpop.f32.mrb[0].mxu0
    %2981 = vmatprep.mubr.f32.mxu0 0.0
    %2982 = vmatmul.mubr.f32.gmra.mrb[0].mxu0 %v2608
    %v2983 = vpop.f32.mrb[0].mxu0
    %v2984 = vadd.f32 0.0, %v2983
    %v2985 = vpop.f32.mrb[0].mxu0
    %2986 = vmatprep.mubr.f32.mxu0 0.0
    %2987 = vmatmul.mubr.f32.gmra.mrb[0].mxu0 %v2611
    %v2988 = vpop.f32.mrb[0].mxu0
    %v2989 = vadd.f32 0.0, %v2988
    %v2990 = vpop.f32.mrb[0].mxu0
    %2991 = vmatprep.mubr.f32.mxu0 0.0
    %2992 = vmatmul.mubr.f32.gmra.mrb[0].mxu0 %v2614
    %v2993 = vpop.f32.mrb[0].mxu0
    %v2994 = vadd.f32 0.0, %v2993
    %v2995 = vpop.f32.mrb[0].mxu0
    %2996 = vmatprep.mubr.f32.mxu0 0.0
    %2997 = vmatmul.mubr.f32.gmra.mrb[0].mxu0 %v2617
    %v2998 = vpop.f32.mrb[0].mxu0
    %v2999 = vadd.f32 0.0, %v2998
    %v3000 = vpop.f32.mrb[0].mxu0
    %3001 = vmatprep.mubr.f32.mxu0 0.0
    %3002 = vmatmul.mubr.f32.gmra.mrb[0].mxu0 %v2620
    %v3003 = vpop.f32.mrb[0].mxu0
    %v3004 = vadd.f32 0.0, %v3003
    %v3005 = vpop.f32.mrb[0].mxu0
    %3006 = vdwg.mxu0
    %3007 = vst.msk [vmem:[#allocation8] sm:$0xff] %vm122, %v2689
    %3008 = vst.msk [vmem:[#allocation8 + $0x8] sm:$0xff] %vm122, %v2694
    %3009 = vst.msk [vmem:[#allocation8 + $0x10] sm:$0xff] %vm122, %v2699
    %3010 = vst.msk [vmem:[#allocation8 + $0x18] sm:$0xff] %vm122, %v2704
    %3011 = vst.msk [vmem:[#allocation8 + $0x20] sm:$0xff] %vm122, %v2709
    %3012 = vst.msk [vmem:[#allocation8 + $0x28] sm:$0xff] %vm122, %v2714
    %3013 = vst.msk [vmem:[#allocation8 + $0x30] sm:$0xff] %vm122, %v2719
    %3014 = vst.msk [vmem:[#allocation8 + $0x38] sm:$0xff] %vm122, %v2724
    %3015 = vst.msk [vmem:[#allocation8 + $0x40] sm:$0xff] %vm122, %v2729
    %3016 = vst.msk [vmem:[#allocation8 + $0x48] sm:$0xff] %vm122, %v2734
    %3017 = vst.msk [vmem:[#allocation8 + $0x50] sm:$0xff] %vm122, %v2739
    %3018 = vst.msk [vmem:[#allocation8 + $0x58] sm:$0xff] %vm122, %v2744
    %3019 = vst.msk [vmem:[#allocation8 + $0x60] sm:$0xff] %vm122, %v2749
    %3020 = vst.msk [vmem:[#allocation8 + $0x68] sm:$0xff] %vm122, %v2754
    %3021 = vst.msk [vmem:[#allocation8 + $0x70] sm:$0xff] %vm122, %v2759
    %3022 = vst.msk [vmem:[#allocation8 + $0x78] sm:$0xff] %vm122, %v2764
    %3023 = vst.msk [vmem:[#allocation8 + $0x80] sm:$0xff] %vm122, %v2769
    %3024 = vst.msk [vmem:[#allocation8 + $0x88] sm:$0xff] %vm122, %v2774
    %3025 = vst.msk [vmem:[#allocation8 + $0x90] sm:$0xff] %vm122, %v2779
    %3026 = vst.msk [vmem:[#allocation8 + $0x98] sm:$0xff] %vm122, %v2784
    %3027 = vst.msk [vmem:[#allocation8 + $0xa0] sm:$0xff] %vm122, %v2789
    %3028 = vst.msk [vmem:[#allocation8 + $0xa8] sm:$0xff] %vm122, %v2794
    %3029 = vst.msk [vmem:[#allocation8 + $0xb0] sm:$0xff] %vm122, %v2799
    %3030 = vst.msk [vmem:[#allocation8 + $0xb8] sm:$0xff] %vm122, %v2804
    %3031 = vst.msk [vmem:[#allocation8 + $0xc0] sm:$0xff] %vm122, %v2809
    %3032 = vst.msk [vmem:[#allocation8 + $0xc8] sm:$0xff] %vm122, %v2814
    %3033 = vst.msk [vmem:[#allocation8 + $0xd0] sm:$0xff] %vm122, %v2819
    %3034 = vst.msk [vmem:[#allocation8 + $0xd8] sm:$0xff] %vm122, %v2824
    %3035 = vst.msk [vmem:[#allocation8 + $0xe0] sm:$0xff] %vm122, %v2829
    %3036 = vst.msk [vmem:[#allocation8 + $0xe8] sm:$0xff] %vm122, %v2834
    %3037 = vst.msk [vmem:[#allocation8 + $0xf0] sm:$0xff] %vm122, %v2839
    %3038 = vst.msk [vmem:[#allocation8 + $0xf8] sm:$0xff] %vm122, %v2844
    %3039 = vst.msk [vmem:[#allocation8 + $0x100] sm:$0xff] %vm122, %v2849
    %3040 = vst.msk [vmem:[#allocation8 + $0x108] sm:$0xff] %vm122, %v2854
    %3041 = vst.msk [vmem:[#allocation8 + $0x110] sm:$0xff] %vm122, %v2859
    %3042 = vst.msk [vmem:[#allocation8 + $0x118] sm:$0xff] %vm122, %v2864
    %3043 = vst.msk [vmem:[#allocation8 + $0x120] sm:$0xff] %vm122, %v2869
    %3044 = vst.msk [vmem:[#allocation8 + $0x128] sm:$0xff] %vm122, %v2874
    %3045 = vst.msk [vmem:[#allocation8 + $0x130] sm:$0xff] %vm122, %v2879
    %3046 = vst.msk [vmem:[#allocation8 + $0x138] sm:$0xff] %vm122, %v2884
    %3047 = vst.msk [vmem:[#allocation8 + $0x140] sm:$0xff] %vm122, %v2889
    %3048 = vst.msk [vmem:[#allocation8 + $0x148] sm:$0xff] %vm122, %v2894
    %3049 = vst.msk [vmem:[#allocation8 + $0x150] sm:$0xff] %vm122, %v2899
    %3050 = vst.msk [vmem:[#allocation8 + $0x158] sm:$0xff] %vm122, %v2904
    %3051 = vst.msk [vmem:[#allocation8 + $0x160] sm:$0xff] %vm122, %v2909
    %3052 = vst.msk [vmem:[#allocation8 + $0x168] sm:$0xff] %vm122, %v2914
    %3053 = vst.msk [vmem:[#allocation8 + $0x170] sm:$0xff] %vm122, %v2919
    %3054 = vst.msk [vmem:[#allocation8 + $0x178] sm:$0xff] %vm122, %v2924
    %3055 = vst.msk [vmem:[#allocation8 + $0x180] sm:$0xff] %vm122, %v2929
    %3056 = vst.msk [vmem:[#allocation8 + $0x188] sm:$0xff] %vm122, %v2934
    %3057 = vst.msk [vmem:[#allocation8 + $0x190] sm:$0xff] %vm122, %v2939
    %3058 = vst.msk [vmem:[#allocation8 + $0x198] sm:$0xff] %vm122, %v2944
    %3059 = vst.msk [vmem:[#allocation8 + $0x1a0] sm:$0xff] %vm122, %v2949
    %3060 = vst.msk [vmem:[#allocation8 + $0x1a8] sm:$0xff] %vm122, %v2954
    %3061 = vst.msk [vmem:[#allocation8 + $0x1b0] sm:$0xff] %vm122, %v2959
    %3062 = vst.msk [vmem:[#allocation8 + $0x1b8] sm:$0xff] %vm122, %v2964
    %3063 = vst.msk [vmem:[#allocation8 + $0x1c0] sm:$0xff] %vm122, %v2969
    %3064 = vst.msk [vmem:[#allocation8 + $0x1c8] sm:$0xff] %vm122, %v2974
    %3065 = vst.msk [vmem:[#allocation8 + $0x1d0] sm:$0xff] %vm122, %v2979
    %3066 = vst.msk [vmem:[#allocation8 + $0x1d8] sm:$0xff] %vm122, %v2984
    %3067 = vst.msk [vmem:[#allocation8 + $0x1e0] sm:$0xff] %vm122, %v2989
    %3068 = vst.msk [vmem:[#allocation8 + $0x1e8] sm:$0xff] %vm122, %v2994
    %3069 = vst.msk [vmem:[#allocation8 + $0x1f0] sm:$0xff] %vm122, %v2999
    %3070 = vst.msk [vmem:[#allocation8 + $0x1f8] sm:$0xff] %vm122, %v3004
    // Predicated region
    $region26: #{tpu_custom_call.1} parent=1 // pred_check
      _
    $region27: #{tpu_custom_call.1} parent=1 // pred_check_branch
      %3072 = sbr.rel (0) target = $region29
    $region28: #{tpu_custom_call.1} parent=1 // pred_region
      %s3074 = ssub.s32 8192, 8192
      %3075 = vsyncadd [#allocation4], %s3074
      %s3076 = sshll.u32 [#allocation8], 4
      %s3077 = int_to_ptr.vmem [resolvable:$true] %s3076
      %3082 = dma.vmem_to_hbm [thread:$0]  %s3077, 8192, %s3, [#allocation4], 128, 128, 8
    $region29: #{tpu_custom_call.1} parent=1 // pred_fallthru
      _
    // Predicated region
    $region30: #{tpu_custom_call.1} parent=1 // pred_check
      _
    $region31: #{tpu_custom_call.1} parent=1 // pred_check_branch
      %3084 = sbr.rel (0) target = $region33
    $region32: #{tpu_custom_call.1} parent=1 // pred_region
      %3085 = dma.done [#allocation4], 8192
    $region33: #{tpu_custom_call.1} parent=1 // pred_fallthru
      _
    %3086 = vsyncpa [#allocation3], 1
    %3087 = vsyncpa [#allocation6], 1
    %3088 = vsyncpa [#allocation4], 1

// kernel: tpu_custom_call.1
$region0: #{tpu_custom_call.1}
  #allocation0 [shape = 'u32[]', space=smem, size = 0x4, offset = 0x4, fixed_abs, tag = 'smem constant byte address 0x4 - core index']
  #allocation1 [shape = 'u32[144,128]{1,0:T(1,128)}', space=vmem, size = 0x12000, scoped, tag = 'internal scratch']
  %s0 = inlined_call_operand.hbm [shape: f32[512,16], index: 0, kind: input, shape index: {}]
  %s1 = inlined_call_operand.hbm [shape: f32[16,16], index: 1, kind: input, shape index: {}]
  %s2 = inlined_call_operand.hbm [shape: f32[16,16], index: 2, kind: input, shape index: {}]
  %s3 = inlined_call_operand.hbm [shape: f32[512,16], index: 3, kind: output, shape index: {}]
  %s4 = sld [smem:[#allocation0]]
  $region34: #{tpu_custom_call.1} parent=0
    _
  %s6 = ssub.s32 1, %s4
  %s7 = scalar_select 0, %s6, %s4
  $region1: #{tpu_custom_call.1} parent=0
    #allocation2 [shape = 'u8[262144]{0}', space=vmem, size = 0x40000, scoped, tag = 'input window, operand 0, single buffered']
    #allocation3 [shape = 's32[1]{0}', space=sflag, size = 0x4, scoped, tag = 'scoped memory for tpu_custom_call.1']
    #allocation4 [shape = 's32[1]{0}', space=sflag, size = 0x4, scoped, tag = 'scoped memory for tpu_custom_call.1']
    #allocation5 [shape = 'u8[8192]{0}', space=vmem, size = 0x2000, scoped, tag = 'input window, operand 1, single buffered']
    #allocation6 [shape = 's32[1]{0}', space=sflag, size = 0x4, scoped, tag = 'scoped memory for tpu_custom_call.1']
    #allocation7 [shape = 'u8[8192]{0}', space=vmem, size = 0x2000, scoped, tag = 'input window, operand 2, single buffered']
    #allocation8 [shape = 'u8[262144]{0}', space=vmem, size = 0x40000, scoped, tag = 'output window, operand 0, single buffered']
    %8 = vsyncpa [#allocation3], 0
    %9 = vsyncpa [#allocation6], 0
    %10 = vsyncpa [#allocation4], 0
    // Predicated region
    $region2: #{tpu_custom_call.1} parent=1 // pred_check
      _
    $region3: #{tpu_custom_call.1} parent=1 // pred_check_branch
      %12 = sbr.rel (0) target = $region5
    $region4: #{tpu_custom_call.1} parent=1 // pred_region
      %s14 = ssub.s32 8192, 8192
      %15 = vsyncadd [#allocation3], %s14
      %s16 = sshll.u32 [#allocation2], 4
      %s17 = int_to_ptr.vmem [resolvable:$true] %s16
      %22 = dma.hbm_to_vmem [thread:$0]  %s0, 8192, %s17, [#allocation3], 128, 128, 8
    $region5: #{tpu_custom_call.1} parent=1 // pred_fallthru
      _
    // Predicated region
    $region6: #{tpu_custom_call.1} parent=1 // pred_check
      _
    $region7: #{tpu_custom_call.1} parent=1 // pred_check_branch
      %24 = sbr.rel (0) target = $region9
    $region8: #{tpu_custom_call.1} parent=1 // pred_region
      %s26 = ssub.s32 256, 256
      %27 = vsyncadd [#allocation6], %s26
      %s28 = sshll.u32 [#allocation5], 4
      %s29 = int_to_ptr.vmem [resolvable:$true] %s28
      %34 = dma.hbm_to_vmem [thread:$0]  %s1, 256, %s29, [#allocation6], 128, 128, 8
    $region9: #{tpu_custom_call.1} parent=1 // pred_fallthru
      _
    // Predicated region
    $region10: #{tpu_custom_call.1} parent=1 // pred_check
      _
    $region11: #{tpu_custom_call.1} parent=1 // pred_check_branch
      %36 = sbr.rel (0) target = $region13
    $region12: #{tpu_custom_call.1} parent=1 // pred_region
      %s38 = ssub.s32 256, 256
      %39 = vsyncadd [#allocation6], %s38
      %s40 = sshll.u32 [#allocation7], 4
      %s41 = int_to_ptr.vmem [resolvable:$true] %s40
      %46 = dma.hbm_to_vmem [thread:$0]  %s2, 256, %s41, [#allocation6], 128, 128, 8
    $region13: #{tpu_custom_call.1} parent=1 // pred_fallthru
      _
    // Predicated region
    $region14: #{tpu_custom_call.1} parent=1 // pred_check
      _
    $region15: #{tpu_custom_call.1} parent=1 // pred_check_branch
      %48 = sbr.rel (0) target = $region17
    $region16: #{tpu_custom_call.1} parent=1 // pred_region
      %49 = dma.done [#allocation3], 8192
    $region17: #{tpu_custom_call.1} parent=1 // pred_fallthru
      _
    // Predicated region
    $region18: #{tpu_custom_call.1} parent=1 // pred_check
      _
    $region19: #{tpu_custom_call.1} parent=1 // pred_check_branch
      %51 = sbr.rel (0) target = $region21
    $region20: #{tpu_custom_call.1} parent=1 // pred_region
      %52 = dma.done [#allocation6], 256
    $region21: #{tpu_custom_call.1} parent=1 // pred_fallthru
      _
    // Predicated region
    $region22: #{tpu_custom_call.1} parent=1 // pred_check
      _
    $region23: #{tpu_custom_call.1} parent=1 // pred_check_branch
      %54 = sbr.rel (0) target = $region25
    $region24: #{tpu_custom_call.1} parent=1 // pred_region
      %55 = dma.done [#allocation6], 256
    $region25: #{tpu_custom_call.1} parent=1 // pred_fallthru
      _
    %v56 = vld [vmem:[#allocation2] sm:$0xff]
    %v57 = vld [vmem:[#allocation2 + $0x8] sm:$0xff]
    %v58 = vld [vmem:[#allocation2 + $0x10] sm:$0xff]
    %v59 = vld [vmem:[#allocation2 + $0x18] sm:$0xff]
    %v60 = vld [vmem:[#allocation2 + $0x20] sm:$0xff]
    %v61 = vld [vmem:[#allocation2 + $0x28] sm:$0xff]
    %v62 = vld [vmem:[#allocation2 + $0x30] sm:$0xff]
    %v63 = vld [vmem:[#allocation2 + $0x38] sm:$0xff]
    %v64 = vld [vmem:[#allocation2 + $0x40] sm:$0xff]
    %v65 = vld [vmem:[#allocation2 + $0x48] sm:$0xff]
    %v66 = vld [vmem:[#allocation2 + $0x50] sm:$0xff]
    %v67 = vld [vmem:[#allocation2 + $0x58] sm:$0xff]
    %v68 = vld [vmem:[#allocation2 + $0x60] sm:$0xff]
    %v69 = vld [vmem:[#allocation2 + $0x68] sm:$0xff]
    %v70 = vld [vmem:[#allocation2 + $0x70] sm:$0xff]
    %v71 = vld [vmem:[#allocation2 + $0x78] sm:$0xff]
    %v72 = vld [vmem:[#allocation2 + $0x80] sm:$0xff]
    %v73 = vld [vmem:[#allocation2 + $0x88] sm:$0xff]
    %v74 = vld [vmem:[#allocation2 + $0x90] sm:$0xff]
    %v75 = vld [vmem:[#allocation2 + $0x98] sm:$0xff]
    %v76 = vld [vmem:[#allocation2 + $0xa0] sm:$0xff]
    %v77 = vld [vmem:[#allocation2 + $0xa8] sm:$0xff]
    %v78 = vld [vmem:[#allocation2 + $0xb0] sm:$0xff]
    %v79 = vld [vmem:[#allocation2 + $0xb8] sm:$0xff]
    %v80 = vld [vmem:[#allocation2 + $0xc0] sm:$0xff]
    %v81 = vld [vmem:[#allocation2 + $0xc8] sm:$0xff]
    %v82 = vld [vmem:[#allocation2 + $0xd0] sm:$0xff]
    %v83 = vld [vmem:[#allocation2 + $0xd8] sm:$0xff]
    %v84 = vld [vmem:[#allocation2 + $0xe0] sm:$0xff]
    %v85 = vld [vmem:[#allocation2 + $0xe8] sm:$0xff]
    %v86 = vld [vmem:[#allocation2 + $0xf0] sm:$0xff]
    %v87 = vld [vmem:[#allocation2 + $0xf8] sm:$0xff]
    %v88 = vld [vmem:[#allocation2 + $0x100] sm:$0xff]
    %v89 = vld [vmem:[#allocation2 + $0x108] sm:$0xff]
    %v90 = vld [vmem:[#allocation2 + $0x110] sm:$0xff]
    %v91 = vld [vmem:[#allocation2 + $0x118] sm:$0xff]
    %v92 = vld [vmem:[#allocation2 + $0x120] sm:$0xff]
    %v93 = vld [vmem:[#allocation2 + $0x128] sm:$0xff]
    %v94 = vld [vmem:[#allocation2 + $0x130] sm:$0xff]
    %v95 = vld [vmem:[#allocation2 + $0x138] sm:$0xff]
    %v96 = vld [vmem:[#allocation2 + $0x140] sm:$0xff]
    %v97 = vld [vmem:[#allocation2 + $0x148] sm:$0xff]
    %v98 = vld [vmem:[#allocation2 + $0x150] sm:$0xff]
    %v99 = vld [vmem:[#allocation2 + $0x158] sm:$0xff]
    %v100 = vld [vmem:[#allocation2 + $0x160] sm:$0xff]
    %v101 = vld [vmem:[#allocation2 + $0x168] sm:$0xff]
    %v102 = vld [vmem:[#allocation2 + $0x170] sm:$0xff]
    %v103 = vld [vmem:[#allocation2 + $0x178] sm:$0xff]
    %v104 = vld [vmem:[#allocation2 + $0x180] sm:$0xff]
    %v105 = vld [vmem:[#allocation2 + $0x188] sm:$0xff]
    %v106 = vld [vmem:[#allocation2 + $0x190] sm:$0xff]
    %v107 = vld [vmem:[#allocation2 + $0x198] sm:$0xff]
    %v108 = vld [vmem:[#allocation2 + $0x1a0] sm:$0xff]
    %v109 = vld [vmem:[#allocation2 + $0x1a8] sm:$0xff]
    %v110 = vld [vmem:[#allocation2 + $0x1b0] sm:$0xff]
    %v111 = vld [vmem:[#allocation2 + $0x1b8] sm:$0xff]
    %v112 = vld [vmem:[#allocation2 + $0x1c0] sm:$0xff]
    %v113 = vld [vmem:[#allocation2 + $0x1c8] sm:$0xff]
    %v114 = vld [vmem:[#allocation2 + $0x1d0] sm:$0xff]
    %v115 = vld [vmem:[#allocation2 + $0x1d8] sm:$0xff]
    %v116 = vld [vmem:[#allocation2 + $0x1e0] sm:$0xff]
    %v117 = vld [vmem:[#allocation2 + $0x1e8] sm:$0xff]
    %v118 = vld [vmem:[#allocation2 + $0x1f0] sm:$0xff]
    %v119 = vld [vmem:[#allocation2 + $0x1f8] sm:$0xff]
    %v120 = vld [vmem:[#allocation5] sm:$0xff]
    %v121 = vld [vmem:[#allocation5 + $0x8] sm:$0xff]
    %vm122 = vcmask 130048
    %v124 = vsel %vm122, %v56, 0
    %v127 = vsel %vm122, %v57, 0
    %v130 = vsel %vm122, %v58, 0
    %v133 = vsel %vm122, %v59, 0
    %v136 = vsel %vm122, %v60, 0
    %v139 = vsel %vm122, %v61, 0
    %v142 = vsel %vm122, %v62, 0
    %v145 = vsel %vm122, %v63, 0
    %v148 = vsel %vm122, %v64, 0
    %v151 = vsel %vm122, %v65, 0
    %v154 = vsel %vm122, %v66, 0
    %v157 = vsel %vm122, %v67, 0
    %v160 = vsel %vm122, %v68, 0
    %v163 = vsel %vm122, %v69, 0
    %v166 = vsel %vm122, %v70, 0
    %v169 = vsel %vm122, %v71, 0
    %v172 = vsel %vm122, %v72, 0
    %v175 = vsel %vm122, %v73, 0
    %v178 = vsel %vm122, %v74, 0
    %v181 = vsel %vm122, %v75, 0
    %v184 = vsel %vm122, %v76, 0
    %v187 = vsel %vm122, %v77, 0
    %v190 = vsel %vm122, %v78, 0
    %v193 = vsel %vm122, %v79, 0
    %v196 = vsel %vm122, %v80, 0
    %v199 = vsel %vm122, %v81, 0
    %v202 = vsel %vm122, %v82, 0
    %v205 = vsel %vm122, %v83, 0
    %v208 = vsel %vm122, %v84, 0
    %v211 = vsel %vm122, %v85, 0
    %v214 = vsel %vm122, %v86, 0
    %v217 = vsel %vm122, %v87, 0
    %v220 = vsel %vm122, %v88, 0
    %v223 = vsel %vm122, %v89, 0
    %v226 = vsel %vm122, %v90, 0
    %v229 = vsel %vm122, %v91, 0
    %v232 = vsel %vm122, %v92, 0
    %v235 = vsel %vm122, %v93, 0
    %v238 = vsel %vm122, %v94, 0
    %v241 = vsel %vm122, %v95, 0
    %v244 = vsel %vm122, %v96, 0
    %v247 = vsel %vm122, %v97, 0
    %v250 = vsel %vm122, %v98, 0
    %v253 = vsel %vm122, %v99, 0
    %v256 = vsel %vm122, %v100, 0
    %v259 = vsel %vm122, %v101, 0
    %v262 = vsel %vm122, %v102, 0
    %v265 = vsel %vm122, %v103, 0
    %v268 = vsel %vm122, %v104, 0
    %v271 = vsel %vm122, %v105, 0
    %v274 = vsel %vm122, %v106, 0
    %v277 = vsel %vm122, %v107, 0
    %v280 = vsel %vm122, %v108, 0
    %v283 = vsel %vm122, %v109, 0
    %v286 = vsel %vm122, %v110, 0
    %v289 = vsel %vm122, %v111, 0
    %v292 = vsel %vm122, %v112, 0
    %v295 = vsel %vm122, %v113, 0
    %v298 = vsel %vm122, %v114, 0
    %v301 = vsel %vm122, %v115, 0
    %v304 = vsel %vm122, %v116, 0
    %v307 = vsel %vm122, %v117, 0
    %v310 = vsel %vm122, %v118, 0
    %v313 = vsel %vm122, %v119, 0
    %315 = vmatprep.subr.mxu0 0.0
    %316 = vmatpush1.msra.mxu0 %v120
    %317 = vmatprep.subr.mxu0 0.0
    %318 = vmatpush1.msra.mxu0 %v121
    %319 = vmatprep.subr.mxu0 0.0
    %320 = vmatpush1.msra.mxu0 0.0
    %321 = vmatprep.subr.mxu0 0.0
    %322 = vmatpush1.msra.mxu0 0.0
    %323 = vmatprep.subr.mxu0 0.0
    %324 = vmatpush1.msra.mxu0 0.0
    %325 = vmatprep.subr.mxu0 0.0
    %326 = vmatpush1.msra.mxu0 0.0
    %327 = vmatprep.subr.mxu0 0.0
    %328 = vmatpush1.msra.mxu0 0.0
    %329 = vmatprep.subr.mxu0 0.0
    %330 = vmatpush1.msra.mxu0 0.0
    %331 = vmatprep.subr.mxu0 0.0
    %332 = vmatpush1.msra.mxu0 0.0
    %333 = vmatprep.subr.mxu0 0.0
    %334 = vmatpush1.msra.mxu0 0.0
    %335 = vmatprep.subr.mxu0 0.0
    %336 = vmatpush1.msra.mxu0 0.0
    %337 = vmatprep.subr.mxu0 0.0
    %338 = vmatpush1.msra.mxu0 0.0
    %339 = vmatprep.subr.mxu0 0.0
    %340 = vmatpush1.msra.mxu0 0.0
    %341 = vmatprep.subr.mxu0 0.0
    %342 = vmatpush1.msra.mxu0 0.0
    %343 = vmatprep.subr.mxu0 0.0
    %344 = vmatpush1.msra.mxu0 0.0
    %345 = vmatprep.subr.mxu0 0.0
    %346 = vmatpush1.msra.mxu0 0.0
    %347 = vmatprep.subr.mxu0 0.0
    %348 = vmatpush1.msra.mxu0 0.0
    %349 = vmatprep.subr.mxu0 0.0
    %350 = vmatpush1.msra.mxu0 0.0
    %351 = vmatprep.subr.mxu0 0.0
    %352 = vmatpush1.msra.mxu0 0.0
    %353 = vmatprep.subr.mxu0 0.0
    %354 = vmatpush1.msra.mxu0 0.0
    %355 = vmatprep.subr.mxu0 0.0
    %356 = vmatpush1.msra.mxu0 0.0
    %357 = vmatprep.subr.mxu0 0.0
    %358 = vmatpush1.msra.mxu0 0.0
    %359 = vmatprep.subr.mxu0 0.0
    %360 = vmatpush1.msra.mxu0 0.0
    %361 = vmatprep.subr.mxu0 0.0
    %362 = vmatpush1.msra.mxu0 0.0
    %363 = vmatprep.subr.mxu0 0.0
    %364 = vmatpush1.msra.mxu0 0.0
    %365 = vmatprep.subr.mxu0 0.0
    %366 = vmatpush1.msra.mxu0 0.0
    %367 = vmatprep.subr.mxu0 0.0
    %368 = vmatpush1.msra.mxu0 0.0
    %369 = vmatprep.subr.mxu0 0.0
    %370 = vmatpush1.msra.mxu0 0.0
    %371 = vmatprep.subr.mxu0 0.0
    %372 = vmatpush1.msra.mxu0 0.0
    %373 = vmatprep.subr.mxu0 0.0
    %374 = vmatpush1.msra.mxu0 0.0
    %375 = vmatprep.subr.mxu0 0.0
    %376 = vmatpush1.msra.mxu0 0.0
    %377 = vmatprep.subr.mxu0 0.0
    %378 = vmatpush1.msra.mxu0 0.0
    %379 = vmatprep.mubr.f32.mxu0 0.0
    %380 = vmatmul.mubr.f32.gmra.mrb[0].mxu0 %v124
    %v381 = vpop.f32.mrb[0].mxu0
    %v382 = vadd.f32 0.0, %v381
    %v383 = vpop.f32.mrb[0].mxu0
    %384 = vmatprep.mubr.f32.mxu0 0.0
    %385 = vmatmul.mubr.f32.gmra.mrb[0].mxu0 %v127
    %v386 = vpop.f32.mrb[0].mxu0
    %v387 = vadd.f32 0.0, %v386
    %v388 = vpop.f32.mrb[0].mxu0
    %389 = vmatprep.mubr.f32.mxu0 0.0
    %390 = vmatmul.mubr.f32.gmra.mrb[0].mxu0 %v130
    %v391 = vpop.f32.mrb[0].mxu0
    %v392 = vadd.f32 0.0, %v391
    %v393 = vpop.f32.mrb[0].mxu0
    %394 = vmatprep.mubr.f32.mxu0 0.0
    %395 = vmatmul.mubr.f32.gmra.mrb[0].mxu0 %v133
    %v396 = vpop.f32.mrb[0].mxu0
    %v397 = vadd.f32 0.0, %v396
    %v398 = vpop.f32.mrb[0].mxu0
    %399 = vmatprep.mubr.f32.mxu0 0.0
    %400 = vmatmul.mubr.f32.gmra.mrb[0].mxu0 %v136
    %v401 = vpop.f32.mrb[0].mxu0
    %v402 = vadd.f32 0.0, %v401
    %v403 = vpop.f32.mrb[0].mxu0
    %404 = vmatprep.mubr.f32.mxu0 0.0
    %405 = vmatmul.mubr.f32.gmra.mrb[0].mxu0 %v139
    %v406 = vpop.f32.mrb[0].mxu0
    %v407 = vadd.f32 0.0, %v406
    %v408 = vpop.f32.mrb[0].mxu0
    %409 = vmatprep.mubr.f32.mxu0 0.0
    %410 = vmatmul.mubr.f32.gmra.mrb[0].mxu0 %v142
    %v411 = vpop.f32.mrb[0].mxu0
    %v412 = vadd.f32 0.0, %v411
    %v413 = vpop.f32.mrb[0].mxu0
    %414 = vmatprep.mubr.f32.mxu0 0.0
    %415 = vmatmul.mubr.f32.gmra.mrb[0].mxu0 %v145
    %v416 = vpop.f32.mrb[0].mxu0
    %v417 = vadd.f32 0.0, %v416
    %v418 = vpop.f32.mrb[0].mxu0
    %419 = vmatprep.mubr.f32.mxu0 0.0
    %420 = vmatmul.mubr.f32.gmra.mrb[0].mxu0 %v148
    %v421 = vpop.f32.mrb[0].mxu0
    %v422 = vadd.f32 0.0, %v421
    %v423 = vpop.f32.mrb[0].mxu0
    %424 = vmatprep.mubr.f32.mxu0 0.0
    %425 = vmatmul.mubr.f32.gmra.mrb[0].mxu0 %v151
    %v426 = vpop.f32.mrb[0].mxu0
    %v427 = vadd.f32 0.0, %v426
    %v428 = vpop.f32.mrb[0].mxu0
    %429 = vmatprep.mubr.f32.mxu0 0.0
    %430 = vmatmul.mubr.f32.gmra.mrb[0].mxu0 %v154
    %v431 = vpop.f32.mrb[0].mxu0
    %v432 = vadd.f32 0.0, %v431
    %v433 = vpop.f32.mrb[0].mxu0
    %434 = vmatprep.mubr.f32.mxu0 0.0
    %435 = vmatmul.mubr.f32.gmra.mrb[0].mxu0 %v157
    %v436 = vpop.f32.mrb[0].mxu0
    %v437 = vadd.f32 0.0, %v436
    %v438 = vpop.f32.mrb[0].mxu0
    %439 = vmatprep.mubr.f32.mxu0 0.0
    %440 = vmatmul.mubr.f32.gmra.mrb[0].mxu0 %v160
    %v441 = vpop.f32.mrb[0].mxu0
    %v442 = vadd.f32 0.0, %v441
    %v443 = vpop.f32.mrb[0].mxu0
    %444 = vmatprep.mubr.f32.mxu0 0.0
    %445 = vmatmul.mubr.f32.gmra.mrb[0].mxu0 %v163
    %v446 = vpop.f32.mrb[0].mxu0
    %v447 = vadd.f32 0.0, %v446
    %v448 = vpop.f32.mrb[0].mxu0
    %449 = vmatprep.mubr.f32.mxu0 0.0
    %450 = vmatmul.mubr.f32.gmra.mrb[0].mxu0 %v166
    %v451 = vpop.f32.mrb[0].mxu0
    %v452 = vadd.f32 0.0, %v451
    %v453 = vpop.f32.mrb[0].mxu0
    %454 = vmatprep.mubr.f32.mxu0 0.0
    %455 = vmatmul.mubr.f32.gmra.mrb[0].mxu0 %v169
    %v456 = vpop.f32.mrb[0].mxu0
    %v457 = vadd.f32 0.0, %v456
    %v458 = vpop.f32.mrb[0].mxu0
    %459 = vmatprep.mubr.f32.mxu0 0.0
    %460 = vmatmul.mubr.f32.gmra.mrb[0].mxu0 %v172
    %v461 = vpop.f32.mrb[0].mxu0
    %v462 = vadd.f32 0.0, %v461
    %v463 = vpop.f32.mrb[0].mxu0
    %464 = vmatprep.mubr.f32.mxu0 0.0
    %465 = vmatmul.mubr.f32.gmra.mrb[0].mxu0 %v175
    %v466 = vpop.f32.mrb[0].mxu0
    %v467 = vadd.f32 0.0, %v466
    %v468 = vpop.f32.mrb[0].mxu0
    %469 = vmatprep.mubr.f32.mxu0 0.0
    %470 = vmatmul.mubr.f32.gmra.mrb[0].mxu0 %v178
    %v471 = vpop.f32.mrb[0].mxu0
    %v472 = vadd.f32 0.0, %v471
    %v473 = vpop.f32.mrb[0].mxu0
    %474 = vmatprep.mubr.f32.mxu0 0.0
    %475 = vmatmul.mubr.f32.gmra.mrb[0].mxu0 %v181
    %v476 = vpop.f32.mrb[0].mxu0
    %v477 = vadd.f32 0.0, %v476
    %v478 = vpop.f32.mrb[0].mxu0
    %479 = vmatprep.mubr.f32.mxu0 0.0
    %480 = vmatmul.mubr.f32.gmra.mrb[0].mxu0 %v184
    %v481 = vpop.f32.mrb[0].mxu0
    %v482 = vadd.f32 0.0, %v481
    %v483 = vpop.f32.mrb[0].mxu0
    %484 = vmatprep.mubr.f32.mxu0 0.0
    %485 = vmatmul.mubr.f32.gmra.mrb[0].mxu0 %v187
    %v486 = vpop.f32.mrb[0].mxu0
    %v487 = vadd.f32 0.0, %v486
    %v488 = vpop.f32.mrb[0].mxu0
    %489 = vmatprep.mubr.f32.mxu0 0.0
    %490 = vmatmul.mubr.f32.gmra.mrb[0].mxu0 %v190
    %v491 = vpop.f32.mrb[0].mxu0
    %v492 = vadd.f32 0.0, %v491
    %v493 = vpop.f32.mrb[0].mxu0
    %494 = vmatprep.mubr.f32.mxu0 0.0
    %495 = vmatmul.mubr.f32.gmra.mrb[0].mxu0 %v193
    %v496 = vpop.f32.mrb[0].mxu0
    %v497 = vadd.f32 0.0, %v496
    %v498 = vpop.f32.mrb[0].mxu0
    %499 = vmatprep.mubr.f32.mxu0 0.0
    %500 = vmatmul.mubr.f32.gmra.mrb[0].mxu0 %v196
    %v501 = vpop.f32.mrb[0].mxu0
    %v502 = vadd.f32 0.0, %v501
    %v503 = vpop.f32.mrb[0].mxu0
    %504 = vmatprep.mubr.f32.mxu0 0.0
    %505 = vmatmul.mubr.f32.gmra.mrb[0].mxu0 %v199
    %v506 = vpop.f32.mrb[0].mxu0
    %v507 = vadd.f32 0.0, %v506
    %v508 = vpop.f32.mrb[0].mxu0
    %509 = vmatprep.mubr.f32.mxu0 0.0
    %510 = vmatmul.mubr.f32.gmra.mrb[0].mxu0 %v202
    %v511 = vpop.f32.mrb[0].mxu0
    %v512 = vadd.f32 0.0, %v511
    %v513 = vpop.f32.mrb[0].mxu0
    %514 = vmatprep.mubr.f32.mxu0 0.0
    %515 = vmatmul.mubr.f32.gmra.mrb[0].mxu0 %v205
    %v516 = vpop.f32.mrb[0].mxu0
    %v517 = vadd.f32 0.0, %v516
    %v518 = vpop.f32.mrb[0].mxu0
    %519 = vmatprep.mubr.f32.mxu0 0.0
    %520 = vmatmul.mubr.f32.gmra.mrb[0].mxu0 %v208
    %v521 = vpop.f32.mrb[0].mxu0
    %v522 = vadd.f32 0.0, %v521
    %v523 = vpop.f32.mrb[0].mxu0
    %524 = vmatprep.mubr.f32.mxu0 0.0
    %525 = vmatmul.mubr.f32.gmra.mrb[0].mxu0 %v211
    %v526 = vpop.f32.mrb[0].mxu0
    %v527 = vadd.f32 0.0, %v526
    %v528 = vpop.f32.mrb[0].mxu0
    %529 = vmatprep.mubr.f32.mxu0 0.0
    %530 = vmatmul.mubr.f32.gmra.mrb[0].mxu0 %v214
    %v531 = vpop.f32.mrb[0].mxu0
    %v532 = vadd.f32 0.0, %v531
    %v533 = vpop.f32.mrb[0].mxu0
    %534 = vmatprep.mubr.f32.mxu0 0.0
    %535 = vmatmul.mubr.f32.gmra.mrb[0].mxu0 %v217
    %v536 = vpop.f32.mrb[0].mxu0
    %v537 = vadd.f32 0.0, %v536
    %v538 = vpop.f32.mrb[0].mxu0
    %539 = vmatprep.mubr.f32.mxu0 0.0
    %540 = vmatmul.mubr.f32.gmra.mrb[0].mxu0 %v220
    %v541 = vpop.f32.mrb[0].mxu0
    %v542 = vadd.f32 0.0, %v541
    %v543 = vpop.f32.mrb[0].mxu0
    %544 = vmatprep.mubr.f32.mxu0 0.0
    %545 = vmatmul.mubr.f32.gmra.mrb[0].mxu0 %v223
    %v546 = vpop.f32.mrb[0].mxu0
    %v547 = vadd.f32 0.0, %v546
    %v548 = vpop.f32.mrb[0].mxu0
    %549 = vmatprep.mubr.f32.mxu0 0.0
    %550 = vmatmul.mubr.f32.gmra.mrb[0].mxu0 %v226
    %v551 = vpop.f32.mrb[0].mxu0
    %v552 = vadd.f32 0.0, %v551
    %v553 = vpop.f32.mrb[0].mxu0
    %554 = vmatprep.mubr.f32.mxu0 0.0
    %555 = vmatmul.mubr.f32.gmra.mrb[0].mxu0 %v229
    %v556 = vpop.f32.mrb[0].mxu0
    %v557 = vadd.f32 0.0, %v556
    %v558 = vpop.f32.mrb[0].mxu0
    %559 = vmatprep.mubr.f32.mxu0 0.0
    %560 = vmatmul.mubr.f32.gmra.mrb[0].mxu0 %v232
    %v561 = vpop.f32.mrb[0].mxu0
    %v562 = vadd.f32 0.0, %v561
    %v563 = vpop.f32.mrb[0].mxu0
    %564 = vmatprep.mubr.f32.mxu0 0.0
    %565 = vmatmul.mubr.f32.gmra.mrb[0].mxu0 %v235
    %v566 = vpop.f32.mrb[0].mxu0
    %v567 = vadd.f32 0.0, %v566
    %v568 = vpop.f32.mrb[0].mxu0
    %569 = vmatprep.mubr.f32.mxu0 0.0
    %570 = vmatmul.mubr.f32.gmra.mrb[0].mxu0 %v238
    %v571 = vpop.f32.mrb[0].mxu0
    %v572 = vadd.f32 0.0, %v571
    %v573 = vpop.f32.mrb[0].mxu0
    %574 = vmatprep.mubr.f32.mxu0 0.0
    %575 = vmatmul.mubr.f32.gmra.mrb[0].mxu0 %v241
    %v576 = vpop.f32.mrb[0].mxu0
    %v577 = vadd.f32 0.0, %v576
    %v578 = vpop.f32.mrb[0].mxu0
    %579 = vmatprep.mubr.f32.mxu0 0.0
    %580 = vmatmul.mubr.f32.gmra.mrb[0].mxu0 %v244
    %v581 = vpop.f32.mrb[0].mxu0
    %v582 = vadd.f32 0.0, %v581
    %v583 = vpop.f32.mrb[0].mxu0
    %584 = vmatprep.mubr.f32.mxu0 0.0
    %585 = vmatmul.mubr.f32.gmra.mrb[0].mxu0 %v247
    %v586 = vpop.f32.mrb[0].mxu0
    %v587 = vadd.f32 0.0, %v586
    %v588 = vpop.f32.mrb[0].mxu0
    %589 = vmatprep.mubr.f32.mxu0 0.0
    %590 = vmatmul.mubr.f32.gmra.mrb[0].mxu0 %v250
    %v591 = vpop.f32.mrb[0].mxu0
    %v592 = vadd.f32 0.0, %v591
    %v593 = vpop.f32.mrb[0].mxu0
    %594 = vmatprep.mubr.f32.mxu0 0.0
    %595 = vmatmul.mubr.f32.gmra.mrb[0].mxu0 %v253
    %v596 = vpop.f32.mrb[0].mxu0
    %v597 = vadd.f32 0.0, %v596
    %v598 = vpop.f32.mrb[0].mxu0
    %599 = vmatprep.mubr.f32.mxu0 0.0
    %600 = vmatmul.mubr.f32.gmra.mrb[0].mxu0 %v256
    %v601 = vpop.f32.mrb[0].mxu0
    %v602 = vadd.f32 0.0, %v601
    %v603 = vpop.f32.mrb[0].mxu0
    %604 = vmatprep.mubr.f32.mxu0 0.0
    %605 = vmatmul.mubr.f32.gmra.mrb[0].mxu0 %v259
    %v606 = vpop.f32.mrb[0].mxu0
    %v607 = vadd.f32 0.0, %v606
    %v608 = vpop.f32.mrb[0].mxu0
    %609 = vmatprep.mubr.f32.mxu0 0.0
    %610 = vmatmul.mubr.f32.gmra.mrb[0].mxu0 %v262
    %v611 = vpop.f32.mrb[0].mxu0
    %v612 = vadd.f32 0.0, %v611
    %v613 = vpop.f32.mrb[0].mxu0
    %614 = vmatprep.mubr.f32.mxu0 0.0
    %615 = vmatmul.mubr.f32.gmra.mrb[0].mxu0 %v265
    %v616 = vpop.f32.mrb[0].mxu0
    %v617 = vadd.f32 0.0, %v616
    %v618 = vpop.f32.mrb[0].mxu0
    %619 = vmatprep.mubr.f32.mxu0 0.0
    %620 = vmatmul.mubr.f32.gmra.mrb[0].mxu0 %v268
    %v621 = vpop.f32.mrb[0].mxu0
    %v622 = vadd.f32 0.0, %v621
    %v623 = vpop.f32.mrb[0].mxu0
    %624 = vmatprep.mubr.f32.mxu0 0.0
    %625 = vmatmul.mubr.f32.gmra.mrb[0].mxu0 %v271
    %v626 = vpop.f32.mrb[0].mxu0
    %v627 = vadd.f32 0.0, %v626
    %v628 = vpop.f32.mrb[0].mxu0
    %629 = vmatprep.mubr.f32.mxu0 0.0
    %630 = vmatmul.mubr.f32.gmra.mrb[0].mxu0 %v274
    %v631 = vpop.f32.mrb[0].mxu0
    %v632 = vadd.f32 0.0, %v631
    %v633 = vpop.f32.mrb[0].mxu0
    %634 = vmatprep.mubr.f32.mxu0 0.0
    %635 = vmatmul.mubr.f32.gmra.mrb[0].mxu0 %v277
    %v636 = vpop.f32.mrb[0].mxu0
    %v637 = vadd.f32 0.0, %v636
    %v638 = vpop.f32.mrb[0].mxu0
    %639 = vmatprep.mubr.f32.mxu0 0.0
    %640 = vmatmul.mubr.f32.gmra.mrb[0].mxu0 %v280
    %v641 = vpop.f32.mrb[0].mxu0
    %v642 = vadd.f32 0.0, %v641
    %v643 = vpop.f32.mrb[0].mxu0
    %644 = vmatprep.mubr.f32.mxu0 0.0
    %645 = vmatmul.mubr.f32.gmra.mrb[0].mxu0 %v283
    %v646 = vpop.f32.mrb[0].mxu0
    %v647 = vadd.f32 0.0, %v646
    %v648 = vpop.f32.mrb[0].mxu0
    %649 = vmatprep.mubr.f32.mxu0 0.0
    %650 = vmatmul.mubr.f32.gmra.mrb[0].mxu0 %v286
    %v651 = vpop.f32.mrb[0].mxu0
    %v652 = vadd.f32 0.0, %v651
    %v653 = vpop.f32.mrb[0].mxu0
    %654 = vmatprep.mubr.f32.mxu0 0.0
    %655 = vmatmul.mubr.f32.gmra.mrb[0].mxu0 %v289
    %v656 = vpop.f32.mrb[0].mxu0
    %v657 = vadd.f32 0.0, %v656
    %v658 = vpop.f32.mrb[0].mxu0
    %659 = vmatprep.mubr.f32.mxu0 0.0
    %660 = vmatmul.mubr.f32.gmra.mrb[0].mxu0 %v292
    %v661 = vpop.f32.mrb[0].mxu0
    %v662 = vadd.f32 0.0, %v661
    %v663 = vpop.f32.mrb[0].mxu0
    %664 = vmatprep.mubr.f32.mxu0 0.0
    %665 = vmatmul.mubr.f32.gmra.mrb[0].mxu0 %v295
    %v666 = vpop.f32.mrb[0].mxu0
    %v667 = vadd.f32 0.0, %v666
    %v668 = vpop.f32.mrb[0].mxu0
    %669 = vmatprep.mubr.f32.mxu0 0.0
    %670 = vmatmul.mubr.f32.gmra.mrb[0].mxu0 %v298
    %v671 = vpop.f32.mrb[0].mxu0
    %v672 = vadd.f32 0.0, %v671
    %v673 = vpop.f32.mrb[0].mxu0
    %674 = vmatprep.mubr.f32.mxu0 0.0
    %675 = vmatmul.mubr.f32.gmra.mrb[0].mxu0 %v301
    %v676 = vpop.f32.mrb[0].mxu0
    %v677 = vadd.f32 0.0, %v676
    %v678 = vpop.f32.mrb[0].mxu0
    %679 = vmatprep.mubr.f32.mxu0 0.0
    %680 = vmatmul.mubr.f32.gmra.mrb[0].mxu0 %v304
    %v681 = vpop.f32.mrb[0].mxu0
    %v682 = vadd.f32 0.0, %v681
    %v683 = vpop.f32.mrb[0].mxu0
    %684 = vmatprep.mubr.f32.mxu0 0.0
    %685 = vmatmul.mubr.f32.gmra.mrb[0].mxu0 %v307
    %v686 = vpop.f32.mrb[0].mxu0
    %v687 = vadd.f32 0.0, %v686
    %v688 = vpop.f32.mrb[0].mxu0
    %689 = vmatprep.mubr.f32.mxu0 0.0
    %690 = vmatmul.mubr.f32.gmra.mrb[0].mxu0 %v310
    %v691 = vpop.f32.mrb[0].mxu0
    %v692 = vadd.f32 0.0, %v691
    %v693 = vpop.f32.mrb[0].mxu0
    %694 = vmatprep.mubr.f32.mxu0 0.0
    %695 = vmatmul.mubr.f32.gmra.mrb[0].mxu0 %v313
    %v696 = vpop.f32.mrb[0].mxu0
    %v697 = vadd.f32 0.0, %v696
    %v698 = vpop.f32.mrb[0].mxu0
    %699 = vdwg.mxu0
    %v700 = vmul.f32 %v382, 0.5
    %v701 = vmul.f32 %v387, 0.5
    %v702 = vmul.f32 %v392, 0.5
    %v703 = vmul.f32 %v397, 0.5
    %v704 = vmul.f32 %v402, 0.5
    %v705 = vmul.f32 %v407, 0.5
    %v706 = vmul.f32 %v412, 0.5
    %v707 = vmul.f32 %v417, 0.5
    %v708 = vmul.f32 %v422, 0.5
    %v709 = vmul.f32 %v427, 0.5
    %v710 = vmul.f32 %v432, 0.5
    %v711 = vmul.f32 %v437, 0.5
    %v712 = vmul.f32 %v442, 0.5
    %v713 = vmul.f32 %v447, 0.5
    %v714 = vmul.f32 %v452, 0.5
    %v715 = vmul.f32 %v457, 0.5
    %v716 = vmul.f32 %v462, 0.5
    %v717 = vmul.f32 %v467, 0.5
    %v718 = vmul.f32 %v472, 0.5
    %v719 = vmul.f32 %v477, 0.5
    %v720 = vmul.f32 %v482, 0.5
    %v721 = vmul.f32 %v487, 0.5
    %v722 = vmul.f32 %v492, 0.5
    %v723 = vmul.f32 %v497, 0.5
    %v724 = vmul.f32 %v502, 0.5
    %v725 = vmul.f32 %v507, 0.5
    %v726 = vmul.f32 %v512, 0.5
    %v727 = vmul.f32 %v517, 0.5
    %v728 = vmul.f32 %v522, 0.5
    %v729 = vmul.f32 %v527, 0.5
    %v730 = vmul.f32 %v532, 0.5
    %v731 = vmul.f32 %v537, 0.5
    %v732 = vmul.f32 %v542, 0.5
    %v733 = vmul.f32 %v547, 0.5
    %v734 = vmul.f32 %v552, 0.5
    %v735 = vmul.f32 %v557, 0.5
    %v736 = vmul.f32 %v562, 0.5
    %v737 = vmul.f32 %v567, 0.5
    %v738 = vmul.f32 %v572, 0.5
    %v739 = vmul.f32 %v577, 0.5
    %v740 = vmul.f32 %v582, 0.5
    %v741 = vmul.f32 %v587, 0.5
    %v742 = vmul.f32 %v592, 0.5
    %v743 = vmul.f32 %v597, 0.5
    %v744 = vmul.f32 %v602, 0.5
    %v745 = vmul.f32 %v607, 0.5
    %v746 = vmul.f32 %v612, 0.5
    %v747 = vmul.f32 %v617, 0.5
    %v748 = vmul.f32 %v622, 0.5
    %v749 = vmul.f32 %v627, 0.5
    %v750 = vmul.f32 %v632, 0.5
    %v751 = vmul.f32 %v637, 0.5
    %v752 = vmul.f32 %v642, 0.5
    %v753 = vmul.f32 %v647, 0.5
    %v754 = vmul.f32 %v652, 0.5
    %v755 = vmul.f32 %v657, 0.5
    %v756 = vmul.f32 %v662, 0.5
    %v757 = vmul.f32 %v667, 0.5
    %v758 = vmul.f32 %v672, 0.5
    %v759 = vmul.f32 %v677, 0.5
    %v760 = vmul.f32 %v682, 0.5
    %v761 = vmul.f32 %v687, 0.5
    %v762 = vmul.f32 %v692, 0.5
    %v763 = vmul.f32 %v697, 0.5
    %v764 = vmul.f32 %v382, 0.70710677
    %v765 = vmul.f32 %v387, 0.70710677
    %v766 = vmul.f32 %v392, 0.70710677
    %v767 = vmul.f32 %v397, 0.70710677
    %v768 = vmul.f32 %v402, 0.70710677
    %v769 = vmul.f32 %v407, 0.70710677
    %v770 = vmul.f32 %v412, 0.70710677
    %v771 = vmul.f32 %v417, 0.70710677
    %v772 = vmul.f32 %v422, 0.70710677
    %v773 = vmul.f32 %v427, 0.70710677
    %v774 = vmul.f32 %v432, 0.70710677
    %v775 = vmul.f32 %v437, 0.70710677
    %v776 = vmul.f32 %v442, 0.70710677
    %v777 = vmul.f32 %v447, 0.70710677
    %v778 = vmul.f32 %v452, 0.70710677
    %v779 = vmul.f32 %v457, 0.70710677
    %v780 = vmul.f32 %v462, 0.70710677
    %v781 = vmul.f32 %v467, 0.70710677
    %v782 = vmul.f32 %v472, 0.70710677
    %v783 = vmul.f32 %v477, 0.70710677
    %v784 = vmul.f32 %v482, 0.70710677
    %v785 = vmul.f32 %v487, 0.70710677
    %v786 = vmul.f32 %v492, 0.70710677
    %v787 = vmul.f32 %v497, 0.70710677
    %v788 = vmul.f32 %v502, 0.70710677
    %v789 = vmul.f32 %v507, 0.70710677
    %v790 = vmul.f32 %v512, 0.70710677
    %v791 = vmul.f32 %v517, 0.70710677
    %v792 = vmul.f32 %v522, 0.70710677
    %v793 = vmul.f32 %v527, 0.70710677
    %v794 = vmul.f32 %v532, 0.70710677
    %v795 = vmul.f32 %v537, 0.70710677
    %v796 = vmul.f32 %v542, 0.70710677
    %v797 = vmul.f32 %v547, 0.70710677
    %v798 = vmul.f32 %v552, 0.70710677
    %v799 = vmul.f32 %v557, 0.70710677
    %v800 = vmul.f32 %v562, 0.70710677
    %v801 = vmul.f32 %v567, 0.70710677
    %v802 = vmul.f32 %v572, 0.70710677
    %v803 = vmul.f32 %v577, 0.70710677
    %v804 = vmul.f32 %v582, 0.70710677
    %v805 = vmul.f32 %v587, 0.70710677
    %v806 = vmul.f32 %v592, 0.70710677
    %v807 = vmul.f32 %v597, 0.70710677
    %v808 = vmul.f32 %v602, 0.70710677
    %v809 = vmul.f32 %v607, 0.70710677
    %v810 = vmul.f32 %v612, 0.70710677
    %v811 = vmul.f32 %v617, 0.70710677
    %v812 = vmul.f32 %v622, 0.70710677
    %v813 = vmul.f32 %v627, 0.70710677
    %v814 = vmul.f32 %v632, 0.70710677
    %v815 = vmul.f32 %v637, 0.70710677
    %v816 = vmul.f32 %v642, 0.70710677
    %v817 = vmul.f32 %v647, 0.70710677
    %v818 = vmul.f32 %v652, 0.70710677
    %v819 = vmul.f32 %v657, 0.70710677
    %v820 = vmul.f32 %v662, 0.70710677
    %v821 = vmul.f32 %v667, 0.70710677
    %v822 = vmul.f32 %v672, 0.70710677
    %v823 = vmul.f32 %v677, 0.70710677
    %v824 = vmul.f32 %v682, 0.70710677
    %v825 = vmul.f32 %v687, 0.70710677
    %v826 = vmul.f32 %v692, 0.70710677
    %v827 = vmul.f32 %v697, 0.70710677
    %vm828 = vcmp.ge.f32.partialorder %v764, 0.0
    %vm829 = vcmp.ge.f32.partialorder %v765, 0.0
    %vm830 = vcmp.ge.f32.partialorder %v766, 0.0
    %vm831 = vcmp.ge.f32.partialorder %v767, 0.0
    %vm832 = vcmp.ge.f32.partialorder %v768, 0.0
    %vm833 = vcmp.ge.f32.partialorder %v769, 0.0
    %vm834 = vcmp.ge.f32.partialorder %v770, 0.0
    %vm835 = vcmp.ge.f32.partialorder %v771, 0.0
    %vm836 = vcmp.ge.f32.partialorder %v772, 0.0
    %vm837 = vcmp.ge.f32.partialorder %v773, 0.0
    %vm838 = vcmp.ge.f32.partialorder %v774, 0.0
    %vm839 = vcmp.ge.f32.partialorder %v775, 0.0
    %vm840 = vcmp.ge.f32.partialorder %v776, 0.0
    %vm841 = vcmp.ge.f32.partialorder %v777, 0.0
    %vm842 = vcmp.ge.f32.partialorder %v778, 0.0
    %vm843 = vcmp.ge.f32.partialorder %v779, 0.0
    %vm844 = vcmp.ge.f32.partialorder %v780, 0.0
    %vm845 = vcmp.ge.f32.partialorder %v781, 0.0
    %vm846 = vcmp.ge.f32.partialorder %v782, 0.0
    %vm847 = vcmp.ge.f32.partialorder %v783, 0.0
    %vm848 = vcmp.ge.f32.partialorder %v784, 0.0
    %vm849 = vcmp.ge.f32.partialorder %v785, 0.0
    %vm850 = vcmp.ge.f32.partialorder %v786, 0.0
    %vm851 = vcmp.ge.f32.partialorder %v787, 0.0
    %vm852 = vcmp.ge.f32.partialorder %v788, 0.0
    %vm853 = vcmp.ge.f32.partialorder %v789, 0.0
    %vm854 = vcmp.ge.f32.partialorder %v790, 0.0
    %vm855 = vcmp.ge.f32.partialorder %v791, 0.0
    %vm856 = vcmp.ge.f32.partialorder %v792, 0.0
    %vm857 = vcmp.ge.f32.partialorder %v793, 0.0
    %vm858 = vcmp.ge.f32.partialorder %v794, 0.0
    %vm859 = vcmp.ge.f32.partialorder %v795, 0.0
    %vm860 = vcmp.ge.f32.partialorder %v796, 0.0
    %vm861 = vcmp.ge.f32.partialorder %v797, 0.0
    %vm862 = vcmp.ge.f32.partialorder %v798, 0.0
    %vm863 = vcmp.ge.f32.partialorder %v799, 0.0
    %vm864 = vcmp.ge.f32.partialorder %v800, 0.0
    %vm865 = vcmp.ge.f32.partialorder %v801, 0.0
    %vm866 = vcmp.ge.f32.partialorder %v802, 0.0
    %vm867 = vcmp.ge.f32.partialorder %v803, 0.0
    %vm868 = vcmp.ge.f32.partialorder %v804, 0.0
    %vm869 = vcmp.ge.f32.partialorder %v805, 0.0
    %vm870 = vcmp.ge.f32.partialorder %v806, 0.0
    %vm871 = vcmp.ge.f32.partialorder %v807, 0.0
    %vm872 = vcmp.ge.f32.partialorder %v808, 0.0
    %vm873 = vcmp.ge.f32.partialorder %v809, 0.0
    %vm874 = vcmp.ge.f32.partialorder %v810, 0.0
    %vm875 = vcmp.ge.f32.partialorder %v811, 0.0
    %vm876 = vcmp.ge.f32.partialorder %v812, 0.0
    %vm877 = vcmp.ge.f32.partialorder %v813, 0.0
    %vm878 = vcmp.ge.f32.partialorder %v814, 0.0
    %vm879 = vcmp.ge.f32.partialorder %v815, 0.0
    %vm880 = vcmp.ge.f32.partialorder %v816, 0.0
    %vm881 = vcmp.ge.f32.partialorder %v817, 0.0
    %vm882 = vcmp.ge.f32.partialorder %v818, 0.0
    %vm883 = vcmp.ge.f32.partialorder %v819, 0.0
    %vm884 = vcmp.ge.f32.partialorder %v820, 0.0
    %vm885 = vcmp.ge.f32.partialorder %v821, 0.0
    %vm886 = vcmp.ge.f32.partialorder %v822, 0.0
    %vm887 = vcmp.ge.f32.partialorder %v823, 0.0
    %vm888 = vcmp.ge.f32.partialorder %v824, 0.0
    %vm889 = vcmp.ge.f32.partialorder %v825, 0.0
    %vm890 = vcmp.ge.f32.partialorder %v826, 0.0
    %vm891 = vcmp.ge.f32.partialorder %v827, 0.0
    %v892 = vsel %vm828, 1.0, -1.0
    %v893 = vsel %vm829, 1.0, -1.0
    %v894 = vsel %vm830, 1.0, -1.0
    %v895 = vsel %vm831, 1.0, -1.0
    %v896 = vsel %vm832, 1.0, -1.0
    %v897 = vsel %vm833, 1.0, -1.0
    %v898 = vsel %vm834, 1.0, -1.0
    %v899 = vsel %vm835, 1.0, -1.0
    %v900 = vsel %vm836, 1.0, -1.0
    %v901 = vsel %vm837, 1.0, -1.0
    %v902 = vsel %vm838, 1.0, -1.0
    %v903 = vsel %vm839, 1.0, -1.0
    %v904 = vsel %vm840, 1.0, -1.0
    %v905 = vsel %vm841, 1.0, -1.0
    %v906 = vsel %vm842, 1.0, -1.0
    %v907 = vsel %vm843, 1.0, -1.0
    %v908 = vsel %vm844, 1.0, -1.0
    %v909 = vsel %vm845, 1.0, -1.0
    %v910 = vsel %vm846, 1.0, -1.0
    %v911 = vsel %vm847, 1.0, -1.0
    %v912 = vsel %vm848, 1.0, -1.0
    %v913 = vsel %vm849, 1.0, -1.0
    %v914 = vsel %vm850, 1.0, -1.0
    %v915 = vsel %vm851, 1.0, -1.0
    %v916 = vsel %vm852, 1.0, -1.0
    %v917 = vsel %vm853, 1.0, -1.0
    %v918 = vsel %vm854, 1.0, -1.0
    %v919 = vsel %vm855, 1.0, -1.0
    %v920 = vsel %vm856, 1.0, -1.0
    %v921 = vsel %vm857, 1.0, -1.0
    %v922 = vsel %vm858, 1.0, -1.0
    %v923 = vsel %vm859, 1.0, -1.0
    %v924 = vsel %vm860, 1.0, -1.0
    %v925 = vsel %vm861, 1.0, -1.0
    %v926 = vsel %vm862, 1.0, -1.0
    %v927 = vsel %vm863, 1.0, -1.0
    %v928 = vsel %vm864, 1.0, -1.0
    %v929 = vsel %vm865, 1.0, -1.0
    %v930 = vsel %vm866, 1.0, -1.0
    %v931 = vsel %vm867, 1.0, -1.0
    %v932 = vsel %vm868, 1.0, -1.0
    %v933 = vsel %vm869, 1.0, -1.0
    %v934 = vsel %vm870, 1.0, -1.0
    %v935 = vsel %vm871, 1.0, -1.0
    %v936 = vsel %vm872, 1.0, -1.0
    %v937 = vsel %vm873, 1.0, -1.0
    %v938 = vsel %vm874, 1.0, -1.0
    %v939 = vsel %vm875, 1.0, -1.0
    %v940 = vsel %vm876, 1.0, -1.0
    %v941 = vsel %vm877, 1.0, -1.0
    %v942 = vsel %vm878, 1.0, -1.0
    %v943 = vsel %vm879, 1.0, -1.0
    %v944 = vsel %vm880, 1.0, -1.0
    %v945 = vsel %vm881, 1.0, -1.0
    %v946 = vsel %vm882, 1.0, -1.0
    %v947 = vsel %vm883, 1.0, -1.0
    %v948 = vsel %vm884, 1.0, -1.0
    %v949 = vsel %vm885, 1.0, -1.0
    %v950 = vsel %vm886, 1.0, -1.0
    %v951 = vsel %vm887, 1.0, -1.0
    %v952 = vsel %vm888, 1.0, -1.0
    %v953 = vsel %vm889, 1.0, -1.0
    %v954 = vsel %vm890, 1.0, -1.0
    %v955 = vsel %vm891, 1.0, -1.0
    %v956 = vand.u32 2147483647, %v764
    %v957 = vand.u32 2147483647, %v765
    %v958 = vand.u32 2147483647, %v766
    %v959 = vand.u32 2147483647, %v767
    %v960 = vand.u32 2147483647, %v768
    %v961 = vand.u32 2147483647, %v769
    %v962 = vand.u32 2147483647, %v770
    %v963 = vand.u32 2147483647, %v771
    %v964 = vand.u32 2147483647, %v772
    %v965 = vand.u32 2147483647, %v773
    %v966 = vand.u32 2147483647, %v774
    %v967 = vand.u32 2147483647, %v775
    %v968 = vand.u32 2147483647, %v776
    %v969 = vand.u32 2147483647, %v777
    %v970 = vand.u32 2147483647, %v778
    %v971 = vand.u32 2147483647, %v779
    %v972 = vand.u32 2147483647, %v780
    %v973 = vand.u32 2147483647, %v781
    %v974 = vand.u32 2147483647, %v782
    %v975 = vand.u32 2147483647, %v783
    %v976 = vand.u32 2147483647, %v784
    %v977 = vand.u32 2147483647, %v785
    %v978 = vand.u32 2147483647, %v786
    %v979 = vand.u32 2147483647, %v787
    %v980 = vand.u32 2147483647, %v788
    %v981 = vand.u32 2147483647, %v789
    %v982 = vand.u32 2147483647, %v790
    %v983 = vand.u32 2147483647, %v791
    %v984 = vand.u32 2147483647, %v792
    %v985 = vand.u32 2147483647, %v793
    %v986 = vand.u32 2147483647, %v794
    %v987 = vand.u32 2147483647, %v795
    %v988 = vand.u32 2147483647, %v796
    %v989 = vand.u32 2147483647, %v797
    %v990 = vand.u32 2147483647, %v798
    %v991 = vand.u32 2147483647, %v799
    %v992 = vand.u32 2147483647, %v800
    %v993 = vand.u32 2147483647, %v801
    %v994 = vand.u32 2147483647, %v802
    %v995 = vand.u32 2147483647, %v803
    %v996 = vand.u32 2147483647, %v804
    %v997 = vand.u32 2147483647, %v805
    %v998 = vand.u32 2147483647, %v806
    %v999 = vand.u32 2147483647, %v807
    %v1000 = vand.u32 2147483647, %v808
    %v1001 = vand.u32 2147483647, %v809
    %v1002 = vand.u32 2147483647, %v810
    %v1003 = vand.u32 2147483647, %v811
    %v1004 = vand.u32 2147483647, %v812
    %v1005 = vand.u32 2147483647, %v813
    %v1006 = vand.u32 2147483647, %v814
    %v1007 = vand.u32 2147483647, %v815
    %v1008 = vand.u32 2147483647, %v816
    %v1009 = vand.u32 2147483647, %v817
    %v1010 = vand.u32 2147483647, %v818
    %v1011 = vand.u32 2147483647, %v819
    %v1012 = vand.u32 2147483647, %v820
    %v1013 = vand.u32 2147483647, %v821
    %v1014 = vand.u32 2147483647, %v822
    %v1015 = vand.u32 2147483647, %v823
    %v1016 = vand.u32 2147483647, %v824
    %v1017 = vand.u32 2147483647, %v825
    %v1018 = vand.u32 2147483647, %v826
    %v1019 = vand.u32 2147483647, %v827
    %v1020 = vmul.f32 %v956, 0.3275911
    %v1021 = vmul.f32 %v957, 0.3275911
    %v1022 = vmul.f32 %v958, 0.3275911
    %v1023 = vmul.f32 %v959, 0.3275911
    %v1024 = vmul.f32 %v960, 0.3275911
    %v1025 = vmul.f32 %v961, 0.3275911
    %v1026 = vmul.f32 %v962, 0.3275911
    %v1027 = vmul.f32 %v963, 0.3275911
    %v1028 = vmul.f32 %v964, 0.3275911
    %v1029 = vmul.f32 %v965, 0.3275911
    %v1030 = vmul.f32 %v966, 0.3275911
    %v1031 = vmul.f32 %v967, 0.3275911
    %v1032 = vmul.f32 %v968, 0.3275911
    %v1033 = vmul.f32 %v969, 0.3275911
    %v1034 = vmul.f32 %v970, 0.3275911
    %v1035 = vmul.f32 %v971, 0.3275911
    %v1036 = vmul.f32 %v972, 0.3275911
    %v1037 = vmul.f32 %v973, 0.3275911
    %v1038 = vmul.f32 %v974, 0.3275911
    %v1039 = vmul.f32 %v975, 0.3275911
    %v1040 = vmul.f32 %v976, 0.3275911
    %v1041 = vmul.f32 %v977, 0.3275911
    %v1042 = vmul.f32 %v978, 0.3275911
    %v1043 = vmul.f32 %v979, 0.3275911
    %v1044 = vmul.f32 %v980, 0.3275911
    %v1045 = vmul.f32 %v981, 0.3275911
    %v1046 = vmul.f32 %v982, 0.3275911
    %v1047 = vmul.f32 %v983, 0.3275911
    %v1048 = vmul.f32 %v984, 0.3275911
    %v1049 = vmul.f32 %v985, 0.3275911
    %v1050 = vmul.f32 %v986, 0.3275911
    %v1051 = vmul.f32 %v987, 0.3275911
    %v1052 = vmul.f32 %v988, 0.3275911
    %v1053 = vmul.f32 %v989, 0.3275911
    %v1054 = vmul.f32 %v990, 0.3275911
    %v1055 = vmul.f32 %v991, 0.3275911
    %v1056 = vmul.f32 %v992, 0.3275911
    %v1057 = vmul.f32 %v993, 0.3275911
    %v1058 = vmul.f32 %v994, 0.3275911
    %v1059 = vmul.f32 %v995, 0.3275911
    %v1060 = vmul.f32 %v996, 0.3275911
    %v1061 = vmul.f32 %v997, 0.3275911
    %v1062 = vmul.f32 %v998, 0.3275911
    %v1063 = vmul.f32 %v999, 0.3275911
    %v1064 = vmul.f32 %v1000, 0.3275911
    %v1065 = vmul.f32 %v1001, 0.3275911
    %v1066 = vmul.f32 %v1002, 0.3275911
    %v1067 = vmul.f32 %v1003, 0.3275911
    %v1068 = vmul.f32 %v1004, 0.3275911
    %v1069 = vmul.f32 %v1005, 0.3275911
    %v1070 = vmul.f32 %v1006, 0.3275911
    %v1071 = vmul.f32 %v1007, 0.3275911
    %v1072 = vmul.f32 %v1008, 0.3275911
    %v1073 = vmul.f32 %v1009, 0.3275911
    %v1074 = vmul.f32 %v1010, 0.3275911
    %v1075 = vmul.f32 %v1011, 0.3275911
    %v1076 = vmul.f32 %v1012, 0.3275911
    %v1077 = vmul.f32 %v1013, 0.3275911
    %v1078 = vmul.f32 %v1014, 0.3275911
    %v1079 = vmul.f32 %v1015, 0.3275911
    %v1080 = vmul.f32 %v1016, 0.3275911
    %v1081 = vmul.f32 %v1017, 0.3275911
    %v1082 = vmul.f32 %v1018, 0.3275911
    %v1083 = vmul.f32 %v1019, 0.3275911
    %v1084 = vadd.f32 %v1020, 1.0
    %v1085 = vadd.f32 %v1021, 1.0
    %v1086 = vadd.f32 %v1022, 1.0
    %v1087 = vadd.f32 %v1023, 1.0
    %v1088 = vadd.f32 %v1024, 1.0
    %v1089 = vadd.f32 %v1025, 1.0
    %v1090 = vadd.f32 %v1026, 1.0
    %v1091 = vadd.f32 %v1027, 1.0
    %v1092 = vadd.f32 %v1028, 1.0
    %v1093 = vadd.f32 %v1029, 1.0
    %v1094 = vadd.f32 %v1030, 1.0
    %v1095 = vadd.f32 %v1031, 1.0
    %v1096 = vadd.f32 %v1032, 1.0
    %v1097 = vadd.f32 %v1033, 1.0
    %v1098 = vadd.f32 %v1034, 1.0
    %v1099 = vadd.f32 %v1035, 1.0
    %v1100 = vadd.f32 %v1036, 1.0
    %v1101 = vadd.f32 %v1037, 1.0
    %v1102 = vadd.f32 %v1038, 1.0
    %v1103 = vadd.f32 %v1039, 1.0
    %v1104 = vadd.f32 %v1040, 1.0
    %v1105 = vadd.f32 %v1041, 1.0
    %v1106 = vadd.f32 %v1042, 1.0
    %v1107 = vadd.f32 %v1043, 1.0
    %v1108 = vadd.f32 %v1044, 1.0
    %v1109 = vadd.f32 %v1045, 1.0
    %v1110 = vadd.f32 %v1046, 1.0
    %v1111 = vadd.f32 %v1047, 1.0
    %v1112 = vadd.f32 %v1048, 1.0
    %v1113 = vadd.f32 %v1049, 1.0
    %v1114 = vadd.f32 %v1050, 1.0
    %v1115 = vadd.f32 %v1051, 1.0
    %v1116 = vadd.f32 %v1052, 1.0
    %v1117 = vadd.f32 %v1053, 1.0
    %v1118 = vadd.f32 %v1054, 1.0
    %v1119 = vadd.f32 %v1055, 1.0
    %v1120 = vadd.f32 %v1056, 1.0
    %v1121 = vadd.f32 %v1057, 1.0
    %v1122 = vadd.f32 %v1058, 1.0
    %v1123 = vadd.f32 %v1059, 1.0
    %v1124 = vadd.f32 %v1060, 1.0
    %v1125 = vadd.f32 %v1061, 1.0
    %v1126 = vadd.f32 %v1062, 1.0
    %v1127 = vadd.f32 %v1063, 1.0
    %v1128 = vadd.f32 %v1064, 1.0
    %v1129 = vadd.f32 %v1065, 1.0
    %v1130 = vadd.f32 %v1066, 1.0
    %v1131 = vadd.f32 %v1067, 1.0
    %v1132 = vadd.f32 %v1068, 1.0
    %v1133 = vadd.f32 %v1069, 1.0
    %v1134 = vadd.f32 %v1070, 1.0
    %v1135 = vadd.f32 %v1071, 1.0
    %v1136 = vadd.f32 %v1072, 1.0
    %v1137 = vadd.f32 %v1073, 1.0
    %v1138 = vadd.f32 %v1074, 1.0
    %v1139 = vadd.f32 %v1075, 1.0
    %v1140 = vadd.f32 %v1076, 1.0
    %v1141 = vadd.f32 %v1077, 1.0
    %v1142 = vadd.f32 %v1078, 1.0
    %v1143 = vadd.f32 %v1079, 1.0
    %v1144 = vadd.f32 %v1080, 1.0
    %v1145 = vadd.f32 %v1081, 1.0
    %v1146 = vadd.f32 %v1082, 1.0
    %v1147 = vadd.f32 %v1083, 1.0
    %v1148 = vrcp.pop %v1084
    %v1149 = vmul.f32 1.0, %v1148
    %v1150 = vrcp.pop %v1085
    %v1151 = vmul.f32 1.0, %v1150
    %v1152 = vrcp.pop %v1086
    %v1153 = vmul.f32 1.0, %v1152
    %v1154 = vrcp.pop %v1087
    %v1155 = vmul.f32 1.0, %v1154
    %v1156 = vrcp.pop %v1088
    %v1157 = vmul.f32 1.0, %v1156
    %v1158 = vrcp.pop %v1089
    %v1159 = vmul.f32 1.0, %v1158
    %v1160 = vrcp.pop %v1090
    %v1161 = vmul.f32 1.0, %v1160
    %v1162 = vrcp.pop %v1091
    %v1163 = vmul.f32 1.0, %v1162
    %v1164 = vrcp.pop %v1092
    %v1165 = vmul.f32 1.0, %v1164
    %v1166 = vrcp.pop %v1093
    %v1167 = vmul.f32 1.0, %v1166
    %v1168 = vrcp.pop %v1094
    %v1169 = vmul.f32 1.0, %v1168
    %v1170 = vrcp.pop %v1095
    %v1171 = vmul.f32 1.0, %v1170
    %v1172 = vrcp.pop %v1096
    %v1173 = vmul.f32 1.0, %v1172
    %v1174 = vrcp.pop %v1097
    %v1175 = vmul.f32 1.0, %v1174
    %v1176 = vrcp.pop %v1098
    %v1177 = vmul.f32 1.0, %v1176
    %v1178 = vrcp.pop %v1099
    %v1179 = vmul.f32 1.0, %v1178
    %v1180 = vrcp.pop %v1100
    %v1181 = vmul.f32 1.0, %v1180
    %v1182 = vrcp.pop %v1101
    %v1183 = vmul.f32 1.0, %v1182
    %v1184 = vrcp.pop %v1102
    %v1185 = vmul.f32 1.0, %v1184
    %v1186 = vrcp.pop %v1103
    %v1187 = vmul.f32 1.0, %v1186
    %v1188 = vrcp.pop %v1104
    %v1189 = vmul.f32 1.0, %v1188
    %v1190 = vrcp.pop %v1105
    %v1191 = vmul.f32 1.0, %v1190
    %v1192 = vrcp.pop %v1106
    %v1193 = vmul.f32 1.0, %v1192
    %v1194 = vrcp.pop %v1107
    %v1195 = vmul.f32 1.0, %v1194
    %v1196 = vrcp.pop %v1108
    %v1197 = vmul.f32 1.0, %v1196
    %v1198 = vrcp.pop %v1109
    %v1199 = vmul.f32 1.0, %v1198
    %v1200 = vrcp.pop %v1110
    %v1201 = vmul.f32 1.0, %v1200
    %v1202 = vrcp.pop %v1111
    %v1203 = vmul.f32 1.0, %v1202
    %v1204 = vrcp.pop %v1112
    %v1205 = vmul.f32 1.0, %v1204
    %v1206 = vrcp.pop %v1113
    %v1207 = vmul.f32 1.0, %v1206
    %v1208 = vrcp.pop %v1114
    %v1209 = vmul.f32 1.0, %v1208
    %v1210 = vrcp.pop %v1115
    %v1211 = vmul.f32 1.0, %v1210
    %v1212 = vrcp.pop %v1116
    %v1213 = vmul.f32 1.0, %v1212
    %v1214 = vrcp.pop %v1117
    %v1215 = vmul.f32 1.0, %v1214
    %v1216 = vrcp.pop %v1118
    %v1217 = vmul.f32 1.0, %v1216
    %v1218 = vrcp.pop %v1119
    %v1219 = vmul.f32 1.0, %v1218
    %v1220 = vrcp.pop %v1120
    %v1221 = vmul.f32 1.0, %v1220
    %v1222 = vrcp.pop %v1121
    %v1223 = vmul.f32 1.0, %v1222
    %v1224 = vrcp.pop %v1122
    %v1225 = vmul.f32 1.0, %v1224
    %v1226 = vrcp.pop %v1123
    %v1227 = vmul.f32 1.0, %v1226
    %v1228 = vrcp.pop %v1124
    %v1229 = vmul.f32 1.0, %v1228
    %v1230 = vrcp.pop %v1125
    %v1231 = vmul.f32 1.0, %v1230
    %v1232 = vrcp.pop %v1126
    %v1233 = vmul.f32 1.0, %v1232
    %v1234 = vrcp.pop %v1127
    %v1235 = vmul.f32 1.0, %v1234
    %v1236 = vrcp.pop %v1128
    %v1237 = vmul.f32 1.0, %v1236
    %v1238 = vrcp.pop %v1129
    %v1239 = vmul.f32 1.0, %v1238
    %v1240 = vrcp.pop %v1130
    %v1241 = vmul.f32 1.0, %v1240
    %v1242 = vrcp.pop %v1131
    %v1243 = vmul.f32 1.0, %v1242
    %v1244 = vrcp.pop %v1132
    %v1245 = vmul.f32 1.0, %v1244
    %v1246 = vrcp.pop %v1133
    %v1247 = vmul.f32 1.0, %v1246
    %v1248 = vrcp.pop %v1134
    %v1249 = vmul.f32 1.0, %v1248
    %v1250 = vrcp.pop %v1135
    %v1251 = vmul.f32 1.0, %v1250
    %v1252 = vrcp.pop %v1136
    %v1253 = vmul.f32 1.0, %v1252
    %v1254 = vrcp.pop %v1137
    %v1255 = vmul.f32 1.0, %v1254
    %v1256 = vrcp.pop %v1138
    %v1257 = vmul.f32 1.0, %v1256
    %v1258 = vrcp.pop %v1139
    %v1259 = vmul.f32 1.0, %v1258
    %v1260 = vrcp.pop %v1140
    %v1261 = vmul.f32 1.0, %v1260
    %v1262 = vrcp.pop %v1141
    %v1263 = vmul.f32 1.0, %v1262
    %v1264 = vrcp.pop %v1142
    %v1265 = vmul.f32 1.0, %v1264
    %v1266 = vrcp.pop %v1143
    %v1267 = vmul.f32 1.0, %v1266
    %v1268 = vrcp.pop %v1144
    %v1269 = vmul.f32 1.0, %v1268
    %v1270 = vrcp.pop %v1145
    %v1271 = vmul.f32 1.0, %v1270
    %v1272 = vrcp.pop %v1146
    %v1273 = vmul.f32 1.0, %v1272
    %v1274 = vrcp.pop %v1147
    %v1275 = vmul.f32 1.0, %v1274
    %v1276 = vmul.f32 %v1149, 1.0614054
    %v1277 = vmul.f32 %v1151, 1.0614054
    %v1278 = vmul.f32 %v1153, 1.0614054
    %v1279 = vmul.f32 %v1155, 1.0614054
    %v1280 = vmul.f32 %v1157, 1.0614054
    %v1281 = vmul.f32 %v1159, 1.0614054
    %v1282 = vmul.f32 %v1161, 1.0614054
    %v1283 = vmul.f32 %v1163, 1.0614054
    %v1284 = vmul.f32 %v1165, 1.0614054
    %v1285 = vmul.f32 %v1167, 1.0614054
    %v1286 = vmul.f32 %v1169, 1.0614054
    %v1287 = vmul.f32 %v1171, 1.0614054
    %v1288 = vmul.f32 %v1173, 1.0614054
    %v1289 = vmul.f32 %v1175, 1.0614054
    %v1290 = vmul.f32 %v1177, 1.0614054
    %v1291 = vmul.f32 %v1179, 1.0614054
    %v1292 = vmul.f32 %v1181, 1.0614054
    %v1293 = vmul.f32 %v1183, 1.0614054
    %v1294 = vmul.f32 %v1185, 1.0614054
    %v1295 = vmul.f32 %v1187, 1.0614054
    %v1296 = vmul.f32 %v1189, 1.0614054
    %v1297 = vmul.f32 %v1191, 1.0614054
    %v1298 = vmul.f32 %v1193, 1.0614054
    %v1299 = vmul.f32 %v1195, 1.0614054
    %v1300 = vmul.f32 %v1197, 1.0614054
    %v1301 = vmul.f32 %v1199, 1.0614054
    %v1302 = vmul.f32 %v1201, 1.0614054
    %v1303 = vmul.f32 %v1203, 1.0614054
    %v1304 = vmul.f32 %v1205, 1.0614054
    %v1305 = vmul.f32 %v1207, 1.0614054
    %v1306 = vmul.f32 %v1209, 1.0614054
    %v1307 = vmul.f32 %v1211, 1.0614054
    %v1308 = vmul.f32 %v1213, 1.0614054
    %v1309 = vmul.f32 %v1215, 1.0614054
    %v1310 = vmul.f32 %v1217, 1.0614054
    %v1311 = vmul.f32 %v1219, 1.0614054
    %v1312 = vmul.f32 %v1221, 1.0614054
    %v1313 = vmul.f32 %v1223, 1.0614054
    %v1314 = vmul.f32 %v1225, 1.0614054
    %v1315 = vmul.f32 %v1227, 1.0614054
    %v1316 = vmul.f32 %v1229, 1.0614054
    %v1317 = vmul.f32 %v1231, 1.0614054
    %v1318 = vmul.f32 %v1233, 1.0614054
    %v1319 = vmul.f32 %v1235, 1.0614054
    %v1320 = vmul.f32 %v1237, 1.0614054
    %v1321 = vmul.f32 %v1239, 1.0614054
    %v1322 = vmul.f32 %v1241, 1.0614054
    %v1323 = vmul.f32 %v1243, 1.0614054
    %v1324 = vmul.f32 %v1245, 1.0614054
    %v1325 = vmul.f32 %v1247, 1.0614054
    %v1326 = vmul.f32 %v1249, 1.0614054
    %v1327 = vmul.f32 %v1251, 1.0614054
    %v1328 = vmul.f32 %v1253, 1.0614054
    %v1329 = vmul.f32 %v1255, 1.0614054
    %v1330 = vmul.f32 %v1257, 1.0614054
    %v1331 = vmul.f32 %v1259, 1.0614054
    %v1332 = vmul.f32 %v1261, 1.0614054
    %v1333 = vmul.f32 %v1263, 1.0614054
    %v1334 = vmul.f32 %v1265, 1.0614054
    %v1335 = vmul.f32 %v1267, 1.0614054
    %v1336 = vmul.f32 %v1269, 1.0614054
    %v1337 = vmul.f32 %v1271, 1.0614054
    %v1338 = vmul.f32 %v1273, 1.0614054
    %v1339 = vmul.f32 %v1275, 1.0614054
    %v1340 = vadd.f32 %v1276, -1.4531521
    %v1341 = vadd.f32 %v1277, -1.4531521
    %v1342 = vadd.f32 %v1278, -1.4531521
    %v1343 = vadd.f32 %v1279, -1.4531521
    %v1344 = vadd.f32 %v1280, -1.4531521
    %v1345 = vadd.f32 %v1281, -1.4531521
    %v1346 = vadd.f32 %v1282, -1.4531521
    %v1347 = vadd.f32 %v1283, -1.4531521
    %v1348 = vadd.f32 %v1284, -1.4531521
    %v1349 = vadd.f32 %v1285, -1.4531521
    %v1350 = vadd.f32 %v1286, -1.4531521
    %v1351 = vadd.f32 %v1287, -1.4531521
    %v1352 = vadd.f32 %v1288, -1.4531521
    %v1353 = vadd.f32 %v1289, -1.4531521
    %v1354 = vadd.f32 %v1290, -1.4531521
    %v1355 = vadd.f32 %v1291, -1.4531521
    %v1356 = vadd.f32 %v1292, -1.4531521
    %v1357 = vadd.f32 %v1293, -1.4531521
    %v1358 = vadd.f32 %v1294, -1.4531521
    %v1359 = vadd.f32 %v1295, -1.4531521
    %v1360 = vadd.f32 %v1296, -1.4531521
    %v1361 = vadd.f32 %v1297, -1.4531521
    %v1362 = vadd.f32 %v1298, -1.4531521
    %v1363 = vadd.f32 %v1299, -1.4531521
    %v1364 = vadd.f32 %v1300, -1.4531521
    %v1365 = vadd.f32 %v1301, -1.4531521
    %v1366 = vadd.f32 %v1302, -1.4531521
    %v1367 = vadd.f32 %v1303, -1.4531521
    %v1368 = vadd.f32 %v1304, -1.4531521
    %v1369 = vadd.f32 %v1305, -1.4531521
    %v1370 = vadd.f32 %v1306, -1.4531521
    %v1371 = vadd.f32 %v1307, -1.4531521
    %v1372 = vadd.f32 %v1308, -1.4531521
    %v1373 = vadd.f32 %v1309, -1.4531521
    %v1374 = vadd.f32 %v1310, -1.4531521
    %v1375 = vadd.f32 %v1311, -1.4531521
    %v1376 = vadd.f32 %v1312, -1.4531521
    %v1377 = vadd.f32 %v1313, -1.4531521
    %v1378 = vadd.f32 %v1314, -1.4531521
    %v1379 = vadd.f32 %v1315, -1.4531521
    %v1380 = vadd.f32 %v1316, -1.4531521
    %v1381 = vadd.f32 %v1317, -1.4531521
    %v1382 = vadd.f32 %v1318, -1.4531521
    %v1383 = vadd.f32 %v1319, -1.4531521
    %v1384 = vadd.f32 %v1320, -1.4531521
    %v1385 = vadd.f32 %v1321, -1.4531521
    %v1386 = vadd.f32 %v1322, -1.4531521
    %v1387 = vadd.f32 %v1323, -1.4531521
    %v1388 = vadd.f32 %v1324, -1.4531521
    %v1389 = vadd.f32 %v1325, -1.4531521
    %v1390 = vadd.f32 %v1326, -1.4531521
    %v1391 = vadd.f32 %v1327, -1.4531521
    %v1392 = vadd.f32 %v1328, -1.4531521
    %v1393 = vadd.f32 %v1329, -1.4531521
    %v1394 = vadd.f32 %v1330, -1.4531521
    %v1395 = vadd.f32 %v1331, -1.4531521
    %v1396 = vadd.f32 %v1332, -1.4531521
    %v1397 = vadd.f32 %v1333, -1.4531521
    %v1398 = vadd.f32 %v1334, -1.4531521
    %v1399 = vadd.f32 %v1335, -1.4531521
    %v1400 = vadd.f32 %v1336, -1.4531521
    %v1401 = vadd.f32 %v1337, -1.4531521
    %v1402 = vadd.f32 %v1338, -1.4531521
    %v1403 = vadd.f32 %v1339, -1.4531521
    %v1404 = vmul.f32 %v1340, %v1149
    %v1405 = vmul.f32 %v1341, %v1151
    %v1406 = vmul.f32 %v1342, %v1153
    %v1407 = vmul.f32 %v1343, %v1155
    %v1408 = vmul.f32 %v1344, %v1157
    %v1409 = vmul.f32 %v1345, %v1159
    %v1410 = vmul.f32 %v1346, %v1161
    %v1411 = vmul.f32 %v1347, %v1163
    %v1412 = vmul.f32 %v1348, %v1165
    %v1413 = vmul.f32 %v1349, %v1167
    %v1414 = vmul.f32 %v1350, %v1169
    %v1415 = vmul.f32 %v1351, %v1171
    %v1416 = vmul.f32 %v1352, %v1173
    %v1417 = vmul.f32 %v1353, %v1175
    %v1418 = vmul.f32 %v1354, %v1177
    %v1419 = vmul.f32 %v1355, %v1179
    %v1420 = vmul.f32 %v1356, %v1181
    %v1421 = vmul.f32 %v1357, %v1183
    %v1422 = vmul.f32 %v1358, %v1185
    %v1423 = vmul.f32 %v1359, %v1187
    %v1424 = vmul.f32 %v1360, %v1189
    %v1425 = vmul.f32 %v1361, %v1191
    %v1426 = vmul.f32 %v1362, %v1193
    %v1427 = vmul.f32 %v1363, %v1195
    %v1428 = vmul.f32 %v1364, %v1197
    %v1429 = vmul.f32 %v1365, %v1199
    %v1430 = vmul.f32 %v1366, %v1201
    %v1431 = vmul.f32 %v1367, %v1203
    %v1432 = vmul.f32 %v1368, %v1205
    %v1433 = vmul.f32 %v1369, %v1207
    %v1434 = vmul.f32 %v1370, %v1209
    %v1435 = vmul.f32 %v1371, %v1211
    %v1436 = vmul.f32 %v1372, %v1213
    %v1437 = vmul.f32 %v1373, %v1215
    %v1438 = vmul.f32 %v1374, %v1217
    %v1439 = vmul.f32 %v1375, %v1219
    %v1440 = vmul.f32 %v1376, %v1221
    %v1441 = vmul.f32 %v1377, %v1223
    %v1442 = vmul.f32 %v1378, %v1225
    %v1443 = vmul.f32 %v1379, %v1227
    %v1444 = vmul.f32 %v1380, %v1229
    %v1445 = vmul.f32 %v1381, %v1231
    %v1446 = vmul.f32 %v1382, %v1233
    %v1447 = vmul.f32 %v1383, %v1235
    %v1448 = vmul.f32 %v1384, %v1237
    %v1449 = vmul.f32 %v1385, %v1239
    %v1450 = vmul.f32 %v1386, %v1241
    %v1451 = vmul.f32 %v1387, %v1243
    %v1452 = vmul.f32 %v1388, %v1245
    %v1453 = vmul.f32 %v1389, %v1247
    %v1454 = vmul.f32 %v1390, %v1249
    %v1455 = vmul.f32 %v1391, %v1251
    %v1456 = vmul.f32 %v1392, %v1253
    %v1457 = vmul.f32 %v1393, %v1255
    %v1458 = vmul.f32 %v1394, %v1257
    %v1459 = vmul.f32 %v1395, %v1259
    %v1460 = vmul.f32 %v1396, %v1261
    %v1461 = vmul.f32 %v1397, %v1263
    %v1462 = vmul.f32 %v1398, %v1265
    %v1463 = vmul.f32 %v1399, %v1267
    %v1464 = vmul.f32 %v1400, %v1269
    %v1465 = vmul.f32 %v1401, %v1271
    %v1466 = vmul.f32 %v1402, %v1273
    %v1467 = vmul.f32 %v1403, %v1275
    %v1468 = vadd.f32 %v1404, 1.4214138
    %v1469 = vadd.f32 %v1405, 1.4214138
    %v1470 = vadd.f32 %v1406, 1.4214138
    %v1471 = vadd.f32 %v1407, 1.4214138
    %v1472 = vadd.f32 %v1408, 1.4214138
    %v1473 = vadd.f32 %v1409, 1.4214138
    %v1474 = vadd.f32 %v1410, 1.4214138
    %v1475 = vadd.f32 %v1411, 1.4214138
    %v1476 = vadd.f32 %v1412, 1.4214138
    %v1477 = vadd.f32 %v1413, 1.4214138
    %v1478 = vadd.f32 %v1414, 1.4214138
    %v1479 = vadd.f32 %v1415, 1.4214138
    %v1480 = vadd.f32 %v1416, 1.4214138
    %v1481 = vadd.f32 %v1417, 1.4214138
    %v1482 = vadd.f32 %v1418, 1.4214138
    %v1483 = vadd.f32 %v1419, 1.4214138
    %v1484 = vadd.f32 %v1420, 1.4214138
    %v1485 = vadd.f32 %v1421, 1.4214138
    %v1486 = vadd.f32 %v1422, 1.4214138
    %v1487 = vadd.f32 %v1423, 1.4214138
    %v1488 = vadd.f32 %v1424, 1.4214138
    %v1489 = vadd.f32 %v1425, 1.4214138
    %v1490 = vadd.f32 %v1426, 1.4214138
    %v1491 = vadd.f32 %v1427, 1.4214138
    %v1492 = vadd.f32 %v1428, 1.4214138
    %v1493 = vadd.f32 %v1429, 1.4214138
    %v1494 = vadd.f32 %v1430, 1.4214138
    %v1495 = vadd.f32 %v1431, 1.4214138
    %v1496 = vadd.f32 %v1432, 1.4214138
    %v1497 = vadd.f32 %v1433, 1.4214138
    %v1498 = vadd.f32 %v1434, 1.4214138
    %v1499 = vadd.f32 %v1435, 1.4214138
    %v1500 = vadd.f32 %v1436, 1.4214138
    %v1501 = vadd.f32 %v1437, 1.4214138
    %v1502 = vadd.f32 %v1438, 1.4214138
    %v1503 = vadd.f32 %v1439, 1.4214138
    %v1504 = vadd.f32 %v1440, 1.4214138
    %v1505 = vadd.f32 %v1441, 1.4214138
    %v1506 = vadd.f32 %v1442, 1.4214138
    %v1507 = vadd.f32 %v1443, 1.4214138
    %v1508 = vadd.f32 %v1444, 1.4214138
    %v1509 = vadd.f32 %v1445, 1.4214138
    %v1510 = vadd.f32 %v1446, 1.4214138
    %v1511 = vadd.f32 %v1447, 1.4214138
    %v1512 = vadd.f32 %v1448, 1.4214138
    %v1513 = vadd.f32 %v1449, 1.4214138
    %v1514 = vadd.f32 %v1450, 1.4214138
    %v1515 = vadd.f32 %v1451, 1.4214138
    %v1516 = vadd.f32 %v1452, 1.4214138
    %v1517 = vadd.f32 %v1453, 1.4214138
    %v1518 = vadd.f32 %v1454, 1.4214138
    %v1519 = vadd.f32 %v1455, 1.4214138
    %v1520 = vadd.f32 %v1456, 1.4214138
    %v1521 = vadd.f32 %v1457, 1.4214138
    %v1522 = vadd.f32 %v1458, 1.4214138
    %v1523 = vadd.f32 %v1459, 1.4214138
    %v1524 = vadd.f32 %v1460, 1.4214138
    %v1525 = vadd.f32 %v1461, 1.4214138
    %v1526 = vadd.f32 %v1462, 1.4214138
    %v1527 = vadd.f32 %v1463, 1.4214138
    %v1528 = vadd.f32 %v1464, 1.4214138
    %v1529 = vadd.f32 %v1465, 1.4214138
    %v1530 = vadd.f32 %v1466, 1.4214138
    %v1531 = vadd.f32 %v1467, 1.4214138
    %v1532 = vmul.f32 %v1468, %v1149
    %v1533 = vmul.f32 %v1469, %v1151
    %v1534 = vmul.f32 %v1470, %v1153
    %v1535 = vmul.f32 %v1471, %v1155
    %v1536 = vmul.f32 %v1472, %v1157
    %v1537 = vmul.f32 %v1473, %v1159
    %v1538 = vmul.f32 %v1474, %v1161
    %v1539 = vmul.f32 %v1475, %v1163
    %v1540 = vmul.f32 %v1476, %v1165
    %v1541 = vmul.f32 %v1477, %v1167
    %v1542 = vmul.f32 %v1478, %v1169
    %v1543 = vmul.f32 %v1479, %v1171
    %v1544 = vmul.f32 %v1480, %v1173
    %v1545 = vmul.f32 %v1481, %v1175
    %v1546 = vmul.f32 %v1482, %v1177
    %v1547 = vmul.f32 %v1483, %v1179
    %v1548 = vmul.f32 %v1484, %v1181
    %v1549 = vmul.f32 %v1485, %v1183
    %v1550 = vmul.f32 %v1486, %v1185
    %v1551 = vmul.f32 %v1487, %v1187
    %v1552 = vmul.f32 %v1488, %v1189
    %v1553 = vmul.f32 %v1489, %v1191
    %v1554 = vmul.f32 %v1490, %v1193
    %v1555 = vmul.f32 %v1491, %v1195
    %v1556 = vmul.f32 %v1492, %v1197
    %v1557 = vmul.f32 %v1493, %v1199
    %v1558 = vmul.f32 %v1494, %v1201
    %v1559 = vmul.f32 %v1495, %v1203
    %v1560 = vmul.f32 %v1496, %v1205
    %v1561 = vmul.f32 %v1497, %v1207
    %v1562 = vmul.f32 %v1498, %v1209
    %v1563 = vmul.f32 %v1499, %v1211
    %v1564 = vmul.f32 %v1500, %v1213
    %v1565 = vmul.f32 %v1501, %v1215
    %v1566 = vmul.f32 %v1502, %v1217
    %v1567 = vmul.f32 %v1503, %v1219
    %v1568 = vmul.f32 %v1504, %v1221
    %v1569 = vmul.f32 %v1505, %v1223
    %v1570 = vmul.f32 %v1506, %v1225
    %v1571 = vmul.f32 %v1507, %v1227
    %v1572 = vmul.f32 %v1508, %v1229
    %v1573 = vmul.f32 %v1509, %v1231
    %v1574 = vmul.f32 %v1510, %v1233
    %v1575 = vmul.f32 %v1511, %v1235
    %v1576 = vmul.f32 %v1512, %v1237
    %v1577 = vmul.f32 %v1513, %v1239
    %v1578 = vmul.f32 %v1514, %v1241
    %v1579 = vmul.f32 %v1515, %v1243
    %v1580 = vmul.f32 %v1516, %v1245
    %v1581 = vmul.f32 %v1517, %v1247
    %v1582 = vmul.f32 %v1518, %v1249
    %v1583 = vmul.f32 %v1519, %v1251
    %v1584 = vmul.f32 %v1520, %v1253
    %v1585 = vmul.f32 %v1521, %v1255
    %v1586 = vmul.f32 %v1522, %v1257
    %v1587 = vmul.f32 %v1523, %v1259
    %v1588 = vmul.f32 %v1524, %v1261
    %v1589 = vmul.f32 %v1525, %v1263
    %v1590 = vmul.f32 %v1526, %v1265
    %v1591 = vmul.f32 %v1527, %v1267
    %v1592 = vmul.f32 %v1528, %v1269
    %v1593 = vmul.f32 %v1529, %v1271
    %v1594 = vmul.f32 %v1530, %v1273
    %v1595 = vmul.f32 %v1531, %v1275
    %v1596 = vadd.f32 %v1532, -0.28449672
    %v1597 = vadd.f32 %v1533, -0.28449672
    %v1598 = vadd.f32 %v1534, -0.28449672
    %v1599 = vadd.f32 %v1535, -0.28449672
    %v1600 = vadd.f32 %v1536, -0.28449672
    %v1601 = vadd.f32 %v1537, -0.28449672
    %v1602 = vadd.f32 %v1538, -0.28449672
    %v1603 = vadd.f32 %v1539, -0.28449672
    %v1604 = vadd.f32 %v1540, -0.28449672
    %v1605 = vadd.f32 %v1541, -0.28449672
    %v1606 = vadd.f32 %v1542, -0.28449672
    %v1607 = vadd.f32 %v1543, -0.28449672
    %v1608 = vadd.f32 %v1544, -0.28449672
    %v1609 = vadd.f32 %v1545, -0.28449672
    %v1610 = vadd.f32 %v1546, -0.28449672
    %v1611 = vadd.f32 %v1547, -0.28449672
    %v1612 = vadd.f32 %v1548, -0.28449672
    %v1613 = vadd.f32 %v1549, -0.28449672
    %v1614 = vadd.f32 %v1550, -0.28449672
    %v1615 = vadd.f32 %v1551, -0.28449672
    %v1616 = vadd.f32 %v1552, -0.28449672
    %v1617 = vadd.f32 %v1553, -0.28449672
    %v1618 = vadd.f32 %v1554, -0.28449672
    %v1619 = vadd.f32 %v1555, -0.28449672
    %v1620 = vadd.f32 %v1556, -0.28449672
    %v1621 = vadd.f32 %v1557, -0.28449672
    %v1622 = vadd.f32 %v1558, -0.28449672
    %v1623 = vadd.f32 %v1559, -0.28449672
    %v1624 = vadd.f32 %v1560, -0.28449672
    %v1625 = vadd.f32 %v1561, -0.28449672
    %v1626 = vadd.f32 %v1562, -0.28449672
    %v1627 = vadd.f32 %v1563, -0.28449672
    %v1628 = vadd.f32 %v1564, -0.28449672
    %v1629 = vadd.f32 %v1565, -0.28449672
    %v1630 = vadd.f32 %v1566, -0.28449672
    %v1631 = vadd.f32 %v1567, -0.28449672
    %v1632 = vadd.f32 %v1568, -0.28449672
    %v1633 = vadd.f32 %v1569, -0.28449672
    %v1634 = vadd.f32 %v1570, -0.28449672
    %v1635 = vadd.f32 %v1571, -0.28449672
    %v1636 = vadd.f32 %v1572, -0.28449672
    %v1637 = vadd.f32 %v1573, -0.28449672
    %v1638 = vadd.f32 %v1574, -0.28449672
    %v1639 = vadd.f32 %v1575, -0.28449672
    %v1640 = vadd.f32 %v1576, -0.28449672
    %v1641 = vadd.f32 %v1577, -0.28449672
    %v1642 = vadd.f32 %v1578, -0.28449672
    %v1643 = vadd.f32 %v1579, -0.28449672
    %v1644 = vadd.f32 %v1580, -0.28449672
    %v1645 = vadd.f32 %v1581, -0.28449672
    %v1646 = vadd.f32 %v1582, -0.28449672
    %v1647 = vadd.f32 %v1583, -0.28449672
    %v1648 = vadd.f32 %v1584, -0.28449672
    %v1649 = vadd.f32 %v1585, -0.28449672
    %v1650 = vadd.f32 %v1586, -0.28449672
    %v1651 = vadd.f32 %v1587, -0.28449672
    %v1652 = vadd.f32 %v1588, -0.28449672
    %v1653 = vadd.f32 %v1589, -0.28449672
    %v1654 = vadd.f32 %v1590, -0.28449672
    %v1655 = vadd.f32 %v1591, -0.28449672
    %v1656 = vadd.f32 %v1592, -0.28449672
    %v1657 = vadd.f32 %v1593, -0.28449672
    %v1658 = vadd.f32 %v1594, -0.28449672
    %v1659 = vadd.f32 %v1595, -0.28449672
    %v1660 = vmul.f32 %v1596, %v1149
    %v1661 = vmul.f32 %v1597, %v1151
    %v1662 = vmul.f32 %v1598, %v1153
    %v1663 = vmul.f32 %v1599, %v1155
    %v1664 = vmul.f32 %v1600, %v1157
    %v1665 = vmul.f32 %v1601, %v1159
    %v1666 = vmul.f32 %v1602, %v1161
    %v1667 = vmul.f32 %v1603, %v1163
    %v1668 = vmul.f32 %v1604, %v1165
    %v1669 = vmul.f32 %v1605, %v1167
    %v1670 = vmul.f32 %v1606, %v1169
    %v1671 = vmul.f32 %v1607, %v1171
    %v1672 = vmul.f32 %v1608, %v1173
    %v1673 = vmul.f32 %v1609, %v1175
    %v1674 = vmul.f32 %v1610, %v1177
    %v1675 = vmul.f32 %v1611, %v1179
    %v1676 = vmul.f32 %v1612, %v1181
    %v1677 = vmul.f32 %v1613, %v1183
    %v1678 = vmul.f32 %v1614, %v1185
    %v1679 = vmul.f32 %v1615, %v1187
    %v1680 = vmul.f32 %v1616, %v1189
    %v1681 = vmul.f32 %v1617, %v1191
    %v1682 = vmul.f32 %v1618, %v1193
    %v1683 = vmul.f32 %v1619, %v1195
    %v1684 = vmul.f32 %v1620, %v1197
    %v1685 = vmul.f32 %v1621, %v1199
    %v1686 = vmul.f32 %v1622, %v1201
    %v1687 = vmul.f32 %v1623, %v1203
    %v1688 = vmul.f32 %v1624, %v1205
    %v1689 = vmul.f32 %v1625, %v1207
    %v1690 = vmul.f32 %v1626, %v1209
    %v1691 = vmul.f32 %v1627, %v1211
    %v1692 = vmul.f32 %v1628, %v1213
    %v1693 = vmul.f32 %v1629, %v1215
    %v1694 = vmul.f32 %v1630, %v1217
    %v1695 = vmul.f32 %v1631, %v1219
    %v1696 = vmul.f32 %v1632, %v1221
    %v1697 = vmul.f32 %v1633, %v1223
    %v1698 = vmul.f32 %v1634, %v1225
    %v1699 = vmul.f32 %v1635, %v1227
    %v1700 = vmul.f32 %v1636, %v1229
    %v1701 = vmul.f32 %v1637, %v1231
    %v1702 = vmul.f32 %v1638, %v1233
    %v1703 = vmul.f32 %v1639, %v1235
    %v1704 = vmul.f32 %v1640, %v1237
    %v1705 = vmul.f32 %v1641, %v1239
    %v1706 = vmul.f32 %v1642, %v1241
    %v1707 = vmul.f32 %v1643, %v1243
    %v1708 = vmul.f32 %v1644, %v1245
    %v1709 = vmul.f32 %v1645, %v1247
    %v1710 = vmul.f32 %v1646, %v1249
    %v1711 = vmul.f32 %v1647, %v1251
    %v1712 = vmul.f32 %v1648, %v1253
    %v1713 = vmul.f32 %v1649, %v1255
    %v1714 = vmul.f32 %v1650, %v1257
    %v1715 = vmul.f32 %v1651, %v1259
    %v1716 = vmul.f32 %v1652, %v1261
    %v1717 = vmul.f32 %v1653, %v1263
    %v1718 = vmul.f32 %v1654, %v1265
    %v1719 = vmul.f32 %v1655, %v1267
    %v1720 = vmul.f32 %v1656, %v1269
    %v1721 = vmul.f32 %v1657, %v1271
    %v1722 = vmul.f32 %v1658, %v1273
    %v1723 = vmul.f32 %v1659, %v1275
    %v1724 = vadd.f32 %v1660, 0.2548296
    %v1725 = vadd.f32 %v1661, 0.2548296
    %v1726 = vadd.f32 %v1662, 0.2548296
    %v1727 = vadd.f32 %v1663, 0.2548296
    %v1728 = vadd.f32 %v1664, 0.2548296
    %v1729 = vadd.f32 %v1665, 0.2548296
    %v1730 = vadd.f32 %v1666, 0.2548296
    %v1731 = vadd.f32 %v1667, 0.2548296
    %v1732 = vadd.f32 %v1668, 0.2548296
    %v1733 = vadd.f32 %v1669, 0.2548296
    %v1734 = vadd.f32 %v1670, 0.2548296
    %v1735 = vadd.f32 %v1671, 0.2548296
    %v1736 = vadd.f32 %v1672, 0.2548296
    %v1737 = vadd.f32 %v1673, 0.2548296
    %v1738 = vadd.f32 %v1674, 0.2548296
    %v1739 = vadd.f32 %v1675, 0.2548296
    %v1740 = vadd.f32 %v1676, 0.2548296
    %v1741 = vadd.f32 %v1677, 0.2548296
    %v1742 = vadd.f32 %v1678, 0.2548296
    %v1743 = vadd.f32 %v1679, 0.2548296
    %v1744 = vadd.f32 %v1680, 0.2548296
    %v1745 = vadd.f32 %v1681, 0.2548296
    %v1746 = vadd.f32 %v1682, 0.2548296
    %v1747 = vadd.f32 %v1683, 0.2548296
    %v1748 = vadd.f32 %v1684, 0.2548296
    %v1749 = vadd.f32 %v1685, 0.2548296
    %v1750 = vadd.f32 %v1686, 0.2548296
    %v1751 = vadd.f32 %v1687, 0.2548296
    %v1752 = vadd.f32 %v1688, 0.2548296
    %v1753 = vadd.f32 %v1689, 0.2548296
    %v1754 = vadd.f32 %v1690, 0.2548296
    %v1755 = vadd.f32 %v1691, 0.2548296
    %v1756 = vadd.f32 %v1692, 0.2548296
    %v1757 = vadd.f32 %v1693, 0.2548296
    %v1758 = vadd.f32 %v1694, 0.2548296
    %v1759 = vadd.f32 %v1695, 0.2548296
    %v1760 = vadd.f32 %v1696, 0.2548296
    %v1761 = vadd.f32 %v1697, 0.2548296
    %v1762 = vadd.f32 %v1698, 0.2548296
    %v1763 = vadd.f32 %v1699, 0.2548296
    %v1764 = vadd.f32 %v1700, 0.2548296
    %v1765 = vadd.f32 %v1701, 0.2548296
    %v1766 = vadd.f32 %v1702, 0.2548296
    %v1767 = vadd.f32 %v1703, 0.2548296
    %v1768 = vadd.f32 %v1704, 0.2548296
    %v1769 = vadd.f32 %v1705, 0.2548296
    %v1770 = vadd.f32 %v1706, 0.2548296
    %v1771 = vadd.f32 %v1707, 0.2548296
    %v1772 = vadd.f32 %v1708, 0.2548296
    %v1773 = vadd.f32 %v1709, 0.2548296
    %v1774 = vadd.f32 %v1710, 0.2548296
    %v1775 = vadd.f32 %v1711, 0.2548296
    %v1776 = vadd.f32 %v1712, 0.2548296
    %v1777 = vadd.f32 %v1713, 0.2548296
    %v1778 = vadd.f32 %v1714, 0.2548296
    %v1779 = vadd.f32 %v1715, 0.2548296
    %v1780 = vadd.f32 %v1716, 0.2548296
    %v1781 = vadd.f32 %v1717, 0.2548296
    %v1782 = vadd.f32 %v1718, 0.2548296
    %v1783 = vadd.f32 %v1719, 0.2548296
    %v1784 = vadd.f32 %v1720, 0.2548296
    %v1785 = vadd.f32 %v1721, 0.2548296
    %v1786 = vadd.f32 %v1722, 0.2548296
    %v1787 = vadd.f32 %v1723, 0.2548296
    %v1788 = vmul.f32 %v1724, %v1149
    %v1789 = vmul.f32 %v1725, %v1151
    %v1790 = vmul.f32 %v1726, %v1153
    %v1791 = vmul.f32 %v1727, %v1155
    %v1792 = vmul.f32 %v1728, %v1157
    %v1793 = vmul.f32 %v1729, %v1159
    %v1794 = vmul.f32 %v1730, %v1161
    %v1795 = vmul.f32 %v1731, %v1163
    %v1796 = vmul.f32 %v1732, %v1165
    %v1797 = vmul.f32 %v1733, %v1167
    %v1798 = vmul.f32 %v1734, %v1169
    %v1799 = vmul.f32 %v1735, %v1171
    %v1800 = vmul.f32 %v1736, %v1173
    %v1801 = vmul.f32 %v1737, %v1175
    %v1802 = vmul.f32 %v1738, %v1177
    %v1803 = vmul.f32 %v1739, %v1179
    %v1804 = vmul.f32 %v1740, %v1181
    %v1805 = vmul.f32 %v1741, %v1183
    %v1806 = vmul.f32 %v1742, %v1185
    %v1807 = vmul.f32 %v1743, %v1187
    %v1808 = vmul.f32 %v1744, %v1189
    %v1809 = vmul.f32 %v1745, %v1191
    %v1810 = vmul.f32 %v1746, %v1193
    %v1811 = vmul.f32 %v1747, %v1195
    %v1812 = vmul.f32 %v1748, %v1197
    %v1813 = vmul.f32 %v1749, %v1199
    %v1814 = vmul.f32 %v1750, %v1201
    %v1815 = vmul.f32 %v1751, %v1203
    %v1816 = vmul.f32 %v1752, %v1205
    %v1817 = vmul.f32 %v1753, %v1207
    %v1818 = vmul.f32 %v1754, %v1209
    %v1819 = vmul.f32 %v1755, %v1211
    %v1820 = vmul.f32 %v1756, %v1213
    %v1821 = vmul.f32 %v1757, %v1215
    %v1822 = vmul.f32 %v1758, %v1217
    %v1823 = vmul.f32 %v1759, %v1219
    %v1824 = vmul.f32 %v1760, %v1221
    %v1825 = vmul.f32 %v1761, %v1223
    %v1826 = vmul.f32 %v1762, %v1225
    %v1827 = vmul.f32 %v1763, %v1227
    %v1828 = vmul.f32 %v1764, %v1229
    %v1829 = vmul.f32 %v1765, %v1231
    %v1830 = vmul.f32 %v1766, %v1233
    %v1831 = vmul.f32 %v1767, %v1235
    %v1832 = vmul.f32 %v1768, %v1237
    %v1833 = vmul.f32 %v1769, %v1239
    %v1834 = vmul.f32 %v1770, %v1241
    %v1835 = vmul.f32 %v1771, %v1243
    %v1836 = vmul.f32 %v1772, %v1245
    %v1837 = vmul.f32 %v1773, %v1247
    %v1838 = vmul.f32 %v1774, %v1249
    %v1839 = vmul.f32 %v1775, %v1251
    %v1840 = vmul.f32 %v1776, %v1253
    %v1841 = vmul.f32 %v1777, %v1255
    %v1842 = vmul.f32 %v1778, %v1257
    %v1843 = vmul.f32 %v1779, %v1259
    %v1844 = vmul.f32 %v1780, %v1261
    %v1845 = vmul.f32 %v1781, %v1263
    %v1846 = vmul.f32 %v1782, %v1265
    %v1847 = vmul.f32 %v1783, %v1267
    %v1848 = vmul.f32 %v1784, %v1269
    %v1849 = vmul.f32 %v1785, %v1271
    %v1850 = vmul.f32 %v1786, %v1273
    %v1851 = vmul.f32 %v1787, %v1275
    %v1852 = vsub.f32 0.0, %v956
    %v1853 = vsub.f32 0.0, %v957
    %v1854 = vsub.f32 0.0, %v958
    %v1855 = vsub.f32 0.0, %v959
    %v1856 = vsub.f32 0.0, %v960
    %v1857 = vsub.f32 0.0, %v961
    %v1858 = vsub.f32 0.0, %v962
    %v1859 = vsub.f32 0.0, %v963
    %v1860 = vsub.f32 0.0, %v964
    %v1861 = vsub.f32 0.0, %v965
    %v1862 = vsub.f32 0.0, %v966
    %v1863 = vsub.f32 0.0, %v967
    %v1864 = vsub.f32 0.0, %v968
    %v1865 = vsub.f32 0.0, %v969
    %v1866 = vsub.f32 0.0, %v970
    %v1867 = vsub.f32 0.0, %v971
    %v1868 = vsub.f32 0.0, %v972
    %v1869 = vsub.f32 0.0, %v973
    %v1870 = vsub.f32 0.0, %v974
    %v1871 = vsub.f32 0.0, %v975
    %v1872 = vsub.f32 0.0, %v976
    %v1873 = vsub.f32 0.0, %v977
    %v1874 = vsub.f32 0.0, %v978
    %v1875 = vsub.f32 0.0, %v979
    %v1876 = vsub.f32 0.0, %v980
    %v1877 = vsub.f32 0.0, %v981
    %v1878 = vsub.f32 0.0, %v982
    %v1879 = vsub.f32 0.0, %v983
    %v1880 = vsub.f32 0.0, %v984
    %v1881 = vsub.f32 0.0, %v985
    %v1882 = vsub.f32 0.0, %v986
    %v1883 = vsub.f32 0.0, %v987
    %v1884 = vsub.f32 0.0, %v988
    %v1885 = vsub.f32 0.0, %v989
    %v1886 = vsub.f32 0.0, %v990
    %v1887 = vsub.f32 0.0, %v991
    %v1888 = vsub.f32 0.0, %v992
    %v1889 = vsub.f32 0.0, %v993
    %v1890 = vsub.f32 0.0, %v994
    %v1891 = vsub.f32 0.0, %v995
    %v1892 = vsub.f32 0.0, %v996
    %v1893 = vsub.f32 0.0, %v997
    %v1894 = vsub.f32 0.0, %v998
    %v1895 = vsub.f32 0.0, %v999
    %v1896 = vsub.f32 0.0, %v1000
    %v1897 = vsub.f32 0.0, %v1001
    %v1898 = vsub.f32 0.0, %v1002
    %v1899 = vsub.f32 0.0, %v1003
    %v1900 = vsub.f32 0.0, %v1004
    %v1901 = vsub.f32 0.0, %v1005
    %v1902 = vsub.f32 0.0, %v1006
    %v1903 = vsub.f32 0.0, %v1007
    %v1904 = vsub.f32 0.0, %v1008
    %v1905 = vsub.f32 0.0, %v1009
    %v1906 = vsub.f32 0.0, %v1010
    %v1907 = vsub.f32 0.0, %v1011
    %v1908 = vsub.f32 0.0, %v1012
    %v1909 = vsub.f32 0.0, %v1013
    %v1910 = vsub.f32 0.0, %v1014
    %v1911 = vsub.f32 0.0, %v1015
    %v1912 = vsub.f32 0.0, %v1016
    %v1913 = vsub.f32 0.0, %v1017
    %v1914 = vsub.f32 0.0, %v1018
    %v1915 = vsub.f32 0.0, %v1019
    %v1916 = vmul.f32 %v1852, %v956
    %v1917 = vmul.f32 %v1853, %v957
    %v1918 = vmul.f32 %v1854, %v958
    %v1919 = vmul.f32 %v1855, %v959
    %v1920 = vmul.f32 %v1856, %v960
    %v1921 = vmul.f32 %v1857, %v961
    %v1922 = vmul.f32 %v1858, %v962
    %v1923 = vmul.f32 %v1859, %v963
    %v1924 = vmul.f32 %v1860, %v964
    %v1925 = vmul.f32 %v1861, %v965
    %v1926 = vmul.f32 %v1862, %v966
    %v1927 = vmul.f32 %v1863, %v967
    %v1928 = vmul.f32 %v1864, %v968
    %v1929 = vmul.f32 %v1865, %v969
    %v1930 = vmul.f32 %v1866, %v970
    %v1931 = vmul.f32 %v1867, %v971
    %v1932 = vmul.f32 %v1868, %v972
    %v1933 = vmul.f32 %v1869, %v973
    %v1934 = vmul.f32 %v1870, %v974
    %v1935 = vmul.f32 %v1871, %v975
    %v1936 = vmul.f32 %v1872, %v976
    %v1937 = vmul.f32 %v1873, %v977
    %v1938 = vmul.f32 %v1874, %v978
    %v1939 = vmul.f32 %v1875, %v979
    %v1940 = vmul.f32 %v1876, %v980
    %v1941 = vmul.f32 %v1877, %v981
    %v1942 = vmul.f32 %v1878, %v982
    %v1943 = vmul.f32 %v1879, %v983
    %v1944 = vmul.f32 %v1880, %v984
    %v1945 = vmul.f32 %v1881, %v985
    %v1946 = vmul.f32 %v1882, %v986
    %v1947 = vmul.f32 %v1883, %v987
    %v1948 = vmul.f32 %v1884, %v988
    %v1949 = vmul.f32 %v1885, %v989
    %v1950 = vmul.f32 %v1886, %v990
    %v1951 = vmul.f32 %v1887, %v991
    %v1952 = vmul.f32 %v1888, %v992
    %v1953 = vmul.f32 %v1889, %v993
    %v1954 = vmul.f32 %v1890, %v994
    %v1955 = vmul.f32 %v1891, %v995
    %v1956 = vmul.f32 %v1892, %v996
    %v1957 = vmul.f32 %v1893, %v997
    %v1958 = vmul.f32 %v1894, %v998
    %v1959 = vmul.f32 %v1895, %v999
    %v1960 = vmul.f32 %v1896, %v1000
    %v1961 = vmul.f32 %v1897, %v1001
    %v1962 = vmul.f32 %v1898, %v1002
    %v1963 = vmul.f32 %v1899, %v1003
    %v1964 = vmul.f32 %v1900, %v1004
    %v1965 = vmul.f32 %v1901, %v1005
    %v1966 = vmul.f32 %v1902, %v1006
    %v1967 = vmul.f32 %v1903, %v1007
    %v1968 = vmul.f32 %v1904, %v1008
    %v1969 = vmul.f32 %v1905, %v1009
    %v1970 = vmul.f32 %v1906, %v1010
    %v1971 = vmul.f32 %v1907, %v1011
    %v1972 = vmul.f32 %v1908, %v1012
    %v1973 = vmul.f32 %v1909, %v1013
    %v1974 = vmul.f32 %v1910, %v1014
    %v1975 = vmul.f32 %v1911, %v1015
    %v1976 = vmul.f32 %v1912, %v1016
    %v1977 = vmul.f32 %v1913, %v1017
    %v1978 = vmul.f32 %v1914, %v1018
    %v1979 = vmul.f32 %v1915, %v1019
    %v1980 = vmul.f32 %v1916, 1.442695
    %v1981 = vpow.pop %v1980
    %v1982 = vmul.f32 %v1917, 1.442695
    %v1983 = vpow.pop %v1982
    %v1984 = vmul.f32 %v1918, 1.442695
    %v1985 = vpow.pop %v1984
    %v1986 = vmul.f32 %v1919, 1.442695
    %v1987 = vpow.pop %v1986
    %v1988 = vmul.f32 %v1920, 1.442695
    %v1989 = vpow.pop %v1988
    %v1990 = vmul.f32 %v1921, 1.442695
    %v1991 = vpow.pop %v1990
    %v1992 = vmul.f32 %v1922, 1.442695
    %v1993 = vpow.pop %v1992
    %v1994 = vmul.f32 %v1923, 1.442695
    %v1995 = vpow.pop %v1994
    %v1996 = vmul.f32 %v1924, 1.442695
    %v1997 = vpow.pop %v1996
    %v1998 = vmul.f32 %v1925, 1.442695
    %v1999 = vpow.pop %v1998
    %v2000 = vmul.f32 %v1926, 1.442695
    %v2001 = vpow.pop %v2000
    %v2002 = vmul.f32 %v1927, 1.442695
    %v2003 = vpow.pop %v2002
    %v2004 = vmul.f32 %v1928, 1.442695
    %v2005 = vpow.pop %v2004
    %v2006 = vmul.f32 %v1929, 1.442695
    %v2007 = vpow.pop %v2006
    %v2008 = vmul.f32 %v1930, 1.442695
    %v2009 = vpow.pop %v2008
    %v2010 = vmul.f32 %v1931, 1.442695
    %v2011 = vpow.pop %v2010
    %v2012 = vmul.f32 %v1932, 1.442695
    %v2013 = vpow.pop %v2012
    %v2014 = vmul.f32 %v1933, 1.442695
    %v2015 = vpow.pop %v2014
    %v2016 = vmul.f32 %v1934, 1.442695
    %v2017 = vpow.pop %v2016
    %v2018 = vmul.f32 %v1935, 1.442695
    %v2019 = vpow.pop %v2018
    %v2020 = vmul.f32 %v1936, 1.442695
    %v2021 = vpow.pop %v2020
    %v2022 = vmul.f32 %v1937, 1.442695
    %v2023 = vpow.pop %v2022
    %v2024 = vmul.f32 %v1938, 1.442695
    %v2025 = vpow.pop %v2024
    %v2026 = vmul.f32 %v1939, 1.442695
    %v2027 = vpow.pop %v2026
    %v2028 = vmul.f32 %v1940, 1.442695
    %v2029 = vpow.pop %v2028
    %v2030 = vmul.f32 %v1941, 1.442695
    %v2031 = vpow.pop %v2030
    %v2032 = vmul.f32 %v1942, 1.442695
    %v2033 = vpow.pop %v2032
    %v2034 = vmul.f32 %v1943, 1.442695
    %v2035 = vpow.pop %v2034
    %v2036 = vmul.f32 %v1944, 1.442695
    %v2037 = vpow.pop %v2036
    %v2038 = vmul.f32 %v1945, 1.442695
    %v2039 = vpow.pop %v2038
    %v2040 = vmul.f32 %v1946, 1.442695
    %v2041 = vpow.pop %v2040
    %v2042 = vmul.f32 %v1947, 1.442695
    %v2043 = vpow.pop %v2042
    %v2044 = vmul.f32 %v1948, 1.442695
    %v2045 = vpow.pop %v2044
    %v2046 = vmul.f32 %v1949, 1.442695
    %v2047 = vpow.pop %v2046
    %v2048 = vmul.f32 %v1950, 1.442695
    %v2049 = vpow.pop %v2048
    %v2050 = vmul.f32 %v1951, 1.442695
    %v2051 = vpow.pop %v2050
    %v2052 = vmul.f32 %v1952, 1.442695
    %v2053 = vpow.pop %v2052
    %v2054 = vmul.f32 %v1953, 1.442695
    %v2055 = vpow.pop %v2054
    %v2056 = vmul.f32 %v1954, 1.442695
    %v2057 = vpow.pop %v2056
    %v2058 = vmul.f32 %v1955, 1.442695
    %v2059 = vpow.pop %v2058
    %v2060 = vmul.f32 %v1956, 1.442695
    %v2061 = vpow.pop %v2060
    %v2062 = vmul.f32 %v1957, 1.442695
    %v2063 = vpow.pop %v2062
    %v2064 = vmul.f32 %v1958, 1.442695
    %v2065 = vpow.pop %v2064
    %v2066 = vmul.f32 %v1959, 1.442695
    %v2067 = vpow.pop %v2066
    %v2068 = vmul.f32 %v1960, 1.442695
    %v2069 = vpow.pop %v2068
    %v2070 = vmul.f32 %v1961, 1.442695
    %v2071 = vpow.pop %v2070
    %v2072 = vmul.f32 %v1962, 1.442695
    %v2073 = vpow.pop %v2072
    %v2074 = vmul.f32 %v1963, 1.442695
    %v2075 = vpow.pop %v2074
    %v2076 = vmul.f32 %v1964, 1.442695
    %v2077 = vpow.pop %v2076
    %v2078 = vmul.f32 %v1965, 1.442695
    %v2079 = vpow.pop %v2078
    %v2080 = vmul.f32 %v1966, 1.442695
    %v2081 = vpow.pop %v2080
    %v2082 = vmul.f32 %v1967, 1.442695
    %v2083 = vpow.pop %v2082
    %v2084 = vmul.f32 %v1968, 1.442695
    %v2085 = vpow.pop %v2084
    %v2086 = vmul.f32 %v1969, 1.442695
    %v2087 = vpow.pop %v2086
    %v2088 = vmul.f32 %v1970, 1.442695
    %v2089 = vpow.pop %v2088
    %v2090 = vmul.f32 %v1971, 1.442695
    %v2091 = vpow.pop %v2090
    %v2092 = vmul.f32 %v1972, 1.442695
    %v2093 = vpow.pop %v2092
    %v2094 = vmul.f32 %v1973, 1.442695
    %v2095 = vpow.pop %v2094
    %v2096 = vmul.f32 %v1974, 1.442695
    %v2097 = vpow.pop %v2096
    %v2098 = vmul.f32 %v1975, 1.442695
    %v2099 = vpow.pop %v2098
    %v2100 = vmul.f32 %v1976, 1.442695
    %v2101 = vpow.pop %v2100
    %v2102 = vmul.f32 %v1977, 1.442695
    %v2103 = vpow.pop %v2102
    %v2104 = vmul.f32 %v1978, 1.442695
    %v2105 = vpow.pop %v2104
    %v2106 = vmul.f32 %v1979, 1.442695
    %v2107 = vpow.pop %v2106
    %v2108 = vmul.f32 %v1788, %v1981
    %v2109 = vmul.f32 %v1789, %v1983
    %v2110 = vmul.f32 %v1790, %v1985
    %v2111 = vmul.f32 %v1791, %v1987
    %v2112 = vmul.f32 %v1792, %v1989
    %v2113 = vmul.f32 %v1793, %v1991
    %v2114 = vmul.f32 %v1794, %v1993
    %v2115 = vmul.f32 %v1795, %v1995
    %v2116 = vmul.f32 %v1796, %v1997
    %v2117 = vmul.f32 %v1797, %v1999
    %v2118 = vmul.f32 %v1798, %v2001
    %v2119 = vmul.f32 %v1799, %v2003
    %v2120 = vmul.f32 %v1800, %v2005
    %v2121 = vmul.f32 %v1801, %v2007
    %v2122 = vmul.f32 %v1802, %v2009
    %v2123 = vmul.f32 %v1803, %v2011
    %v2124 = vmul.f32 %v1804, %v2013
    %v2125 = vmul.f32 %v1805, %v2015
    %v2126 = vmul.f32 %v1806, %v2017
    %v2127 = vmul.f32 %v1807, %v2019
    %v2128 = vmul.f32 %v1808, %v2021
    %v2129 = vmul.f32 %v1809, %v2023
    %v2130 = vmul.f32 %v1810, %v2025
    %v2131 = vmul.f32 %v1811, %v2027
    %v2132 = vmul.f32 %v1812, %v2029
    %v2133 = vmul.f32 %v1813, %v2031
    %v2134 = vmul.f32 %v1814, %v2033
    %v2135 = vmul.f32 %v1815, %v2035
    %v2136 = vmul.f32 %v1816, %v2037
    %v2137 = vmul.f32 %v1817, %v2039
    %v2138 = vmul.f32 %v1818, %v2041
    %v2139 = vmul.f32 %v1819, %v2043
    %v2140 = vmul.f32 %v1820, %v2045
    %v2141 = vmul.f32 %v1821, %v2047
    %v2142 = vmul.f32 %v1822, %v2049
    %v2143 = vmul.f32 %v1823, %v2051
    %v2144 = vmul.f32 %v1824, %v2053
    %v2145 = vmul.f32 %v1825, %v2055
    %v2146 = vmul.f32 %v1826, %v2057
    %v2147 = vmul.f32 %v1827, %v2059
    %v2148 = vmul.f32 %v1828, %v2061
    %v2149 = vmul.f32 %v1829, %v2063
    %v2150 = vmul.f32 %v1830, %v2065
    %v2151 = vmul.f32 %v1831, %v2067
    %v2152 = vmul.f32 %v1832, %v2069
    %v2153 = vmul.f32 %v1833, %v2071
    %v2154 = vmul.f32 %v1834, %v2073
    %v2155 = vmul.f32 %v1835, %v2075
    %v2156 = vmul.f32 %v1836, %v2077
    %v2157 = vmul.f32 %v1837, %v2079
    %v2158 = vmul.f32 %v1838, %v2081
    %v2159 = vmul.f32 %v1839, %v2083
    %v2160 = vmul.f32 %v1840, %v2085
    %v2161 = vmul.f32 %v1841, %v2087
    %v2162 = vmul.f32 %v1842, %v2089
    %v2163 = vmul.f32 %v1843, %v2091
    %v2164 = vmul.f32 %v1844, %v2093
    %v2165 = vmul.f32 %v1845, %v2095
    %v2166 = vmul.f32 %v1846, %v2097
    %v2167 = vmul.f32 %v1847, %v2099
    %v2168 = vmul.f32 %v1848, %v2101
    %v2169 = vmul.f32 %v1849, %v2103
    %v2170 = vmul.f32 %v1850, %v2105
    %v2171 = vmul.f32 %v1851, %v2107
    %v2172 = vsub.f32 1.0, %v2108
    %v2173 = vsub.f32 1.0, %v2109
    %v2174 = vsub.f32 1.0, %v2110
    %v2175 = vsub.f32 1.0, %v2111
    %v2176 = vsub.f32 1.0, %v2112
    %v2177 = vsub.f32 1.0, %v2113
    %v2178 = vsub.f32 1.0, %v2114
    %v2179 = vsub.f32 1.0, %v2115
    %v2180 = vsub.f32 1.0, %v2116
    %v2181 = vsub.f32 1.0, %v2117
    %v2182 = vsub.f32 1.0, %v2118
    %v2183 = vsub.f32 1.0, %v2119
    %v2184 = vsub.f32 1.0, %v2120
    %v2185 = vsub.f32 1.0, %v2121
    %v2186 = vsub.f32 1.0, %v2122
    %v2187 = vsub.f32 1.0, %v2123
    %v2188 = vsub.f32 1.0, %v2124
    %v2189 = vsub.f32 1.0, %v2125
    %v2190 = vsub.f32 1.0, %v2126
    %v2191 = vsub.f32 1.0, %v2127
    %v2192 = vsub.f32 1.0, %v2128
    %v2193 = vsub.f32 1.0, %v2129
    %v2194 = vsub.f32 1.0, %v2130
    %v2195 = vsub.f32 1.0, %v2131
    %v2196 = vsub.f32 1.0, %v2132
    %v2197 = vsub.f32 1.0, %v2133
    %v2198 = vsub.f32 1.0, %v2134
    %v2199 = vsub.f32 1.0, %v2135
    %v2200 = vsub.f32 1.0, %v2136
    %v2201 = vsub.f32 1.0, %v2137
    %v2202 = vsub.f32 1.0, %v2138
    %v2203 = vsub.f32 1.0, %v2139
    %v2204 = vsub.f32 1.0, %v2140
    %v2205 = vsub.f32 1.0, %v2141
    %v2206 = vsub.f32 1.0, %v2142
    %v2207 = vsub.f32 1.0, %v2143
    %v2208 = vsub.f32 1.0, %v2144
    %v2209 = vsub.f32 1.0, %v2145
    %v2210 = vsub.f32 1.0, %v2146
    %v2211 = vsub.f32 1.0, %v2147
    %v2212 = vsub.f32 1.0, %v2148
    %v2213 = vsub.f32 1.0, %v2149
    %v2214 = vsub.f32 1.0, %v2150
    %v2215 = vsub.f32 1.0, %v2151
    %v2216 = vsub.f32 1.0, %v2152
    %v2217 = vsub.f32 1.0, %v2153
    %v2218 = vsub.f32 1.0, %v2154
    %v2219 = vsub.f32 1.0, %v2155
    %v2220 = vsub.f32 1.0, %v2156
    %v2221 = vsub.f32 1.0, %v2157
    %v2222 = vsub.f32 1.0, %v2158
    %v2223 = vsub.f32 1.0, %v2159
    %v2224 = vsub.f32 1.0, %v2160
    %v2225 = vsub.f32 1.0, %v2161
    %v2226 = vsub.f32 1.0, %v2162
    %v2227 = vsub.f32 1.0, %v2163
    %v2228 = vsub.f32 1.0, %v2164
    %v2229 = vsub.f32 1.0, %v2165
    %v2230 = vsub.f32 1.0, %v2166
    %v2231 = vsub.f32 1.0, %v2167
    %v2232 = vsub.f32 1.0, %v2168
    %v2233 = vsub.f32 1.0, %v2169
    %v2234 = vsub.f32 1.0, %v2170
    %v2235 = vsub.f32 1.0, %v2171
    %v2236 = vmul.f32 %v892, %v2172
    %v2237 = vmul.f32 %v893, %v2173
    %v2238 = vmul.f32 %v894, %v2174
    %v2239 = vmul.f32 %v895, %v2175
    %v2240 = vmul.f32 %v896, %v2176
    %v2241 = vmul.f32 %v897, %v2177
    %v2242 = vmul.f32 %v898, %v2178
    %v2243 = vmul.f32 %v899, %v2179
    %v2244 = vmul.f32 %v900, %v2180
    %v2245 = vmul.f32 %v901, %v2181
    %v2246 = vmul.f32 %v902, %v2182
    %v2247 = vmul.f32 %v903, %v2183
    %v2248 = vmul.f32 %v904, %v2184
    %v2249 = vmul.f32 %v905, %v2185
    %v2250 = vmul.f32 %v906, %v2186
    %v2251 = vmul.f32 %v907, %v2187
    %v2252 = vmul.f32 %v908, %v2188
    %v2253 = vmul.f32 %v909, %v2189
    %v2254 = vmul.f32 %v910, %v2190
    %v2255 = vmul.f32 %v911, %v2191
    %v2256 = vmul.f32 %v912, %v2192
    %v2257 = vmul.f32 %v913, %v2193
    %v2258 = vmul.f32 %v914, %v2194
    %v2259 = vmul.f32 %v915, %v2195
    %v2260 = vmul.f32 %v916, %v2196
    %v2261 = vmul.f32 %v917, %v2197
    %v2262 = vmul.f32 %v918, %v2198
    %v2263 = vmul.f32 %v919, %v2199
    %v2264 = vmul.f32 %v920, %v2200
    %v2265 = vmul.f32 %v921, %v2201
    %v2266 = vmul.f32 %v922, %v2202
    %v2267 = vmul.f32 %v923, %v2203
    %v2268 = vmul.f32 %v924, %v2204
    %v2269 = vmul.f32 %v925, %v2205
    %v2270 = vmul.f32 %v926, %v2206
    %v2271 = vmul.f32 %v927, %v2207
    %v2272 = vmul.f32 %v928, %v2208
    %v2273 = vmul.f32 %v929, %v2209
    %v2274 = vmul.f32 %v930, %v2210
    %v2275 = vmul.f32 %v931, %v2211
    %v2276 = vmul.f32 %v932, %v2212
    %v2277 = vmul.f32 %v933, %v2213
    %v2278 = vmul.f32 %v934, %v2214
    %v2279 = vmul.f32 %v935, %v2215
    %v2280 = vmul.f32 %v936, %v2216
    %v2281 = vmul.f32 %v937, %v2217
    %v2282 = vmul.f32 %v938, %v2218
    %v2283 = vmul.f32 %v939, %v2219
    %v2284 = vmul.f32 %v940, %v2220
    %v2285 = vmul.f32 %v941, %v2221
    %v2286 = vmul.f32 %v942, %v2222
    %v2287 = vmul.f32 %v943, %v2223
    %v2288 = vmul.f32 %v944, %v2224
    %v2289 = vmul.f32 %v945, %v2225
    %v2290 = vmul.f32 %v946, %v2226
    %v2291 = vmul.f32 %v947, %v2227
    %v2292 = vmul.f32 %v948, %v2228
    %v2293 = vmul.f32 %v949, %v2229
    %v2294 = vmul.f32 %v950, %v2230
    %v2295 = vmul.f32 %v951, %v2231
    %v2296 = vmul.f32 %v952, %v2232
    %v2297 = vmul.f32 %v953, %v2233
    %v2298 = vmul.f32 %v954, %v2234
    %v2299 = vmul.f32 %v955, %v2235
    %v2300 = vadd.f32 %v2236, 1.0
    %v2301 = vadd.f32 %v2237, 1.0
    %v2302 = vadd.f32 %v2238, 1.0
    %v2303 = vadd.f32 %v2239, 1.0
    %v2304 = vadd.f32 %v2240, 1.0
    %v2305 = vadd.f32 %v2241, 1.0
    %v2306 = vadd.f32 %v2242, 1.0
    %v2307 = vadd.f32 %v2243, 1.0
    %v2308 = vadd.f32 %v2244, 1.0
    %v2309 = vadd.f32 %v2245, 1.0
    %v2310 = vadd.f32 %v2246, 1.0
    %v2311 = vadd.f32 %v2247, 1.0
    %v2312 = vadd.f32 %v2248, 1.0
    %v2313 = vadd.f32 %v2249, 1.0
    %v2314 = vadd.f32 %v2250, 1.0
    %v2315 = vadd.f32 %v2251, 1.0
    %v2316 = vadd.f32 %v2252, 1.0
    %v2317 = vadd.f32 %v2253, 1.0
    %v2318 = vadd.f32 %v2254, 1.0
    %v2319 = vadd.f32 %v2255, 1.0
    %v2320 = vadd.f32 %v2256, 1.0
    %v2321 = vadd.f32 %v2257, 1.0
    %v2322 = vadd.f32 %v2258, 1.0
    %v2323 = vadd.f32 %v2259, 1.0
    %v2324 = vadd.f32 %v2260, 1.0
    %v2325 = vadd.f32 %v2261, 1.0
    %v2326 = vadd.f32 %v2262, 1.0
    %v2327 = vadd.f32 %v2263, 1.0
    %v2328 = vadd.f32 %v2264, 1.0
    %v2329 = vadd.f32 %v2265, 1.0
    %v2330 = vadd.f32 %v2266, 1.0
    %v2331 = vadd.f32 %v2267, 1.0
    %v2332 = vadd.f32 %v2268, 1.0
    %v2333 = vadd.f32 %v2269, 1.0
    %v2334 = vadd.f32 %v2270, 1.0
    %v2335 = vadd.f32 %v2271, 1.0
    %v2336 = vadd.f32 %v2272, 1.0
    %v2337 = vadd.f32 %v2273, 1.0
    %v2338 = vadd.f32 %v2274, 1.0
    %v2339 = vadd.f32 %v2275, 1.0
    %v2340 = vadd.f32 %v2276, 1.0
    %v2341 = vadd.f32 %v2277, 1.0
    %v2342 = vadd.f32 %v2278, 1.0
    %v2343 = vadd.f32 %v2279, 1.0
    %v2344 = vadd.f32 %v2280, 1.0
    %v2345 = vadd.f32 %v2281, 1.0
    %v2346 = vadd.f32 %v2282, 1.0
    %v2347 = vadd.f32 %v2283, 1.0
    %v2348 = vadd.f32 %v2284, 1.0
    %v2349 = vadd.f32 %v2285, 1.0
    %v2350 = vadd.f32 %v2286, 1.0
    %v2351 = vadd.f32 %v2287, 1.0
    %v2352 = vadd.f32 %v2288, 1.0
    %v2353 = vadd.f32 %v2289, 1.0
    %v2354 = vadd.f32 %v2290, 1.0
    %v2355 = vadd.f32 %v2291, 1.0
    %v2356 = vadd.f32 %v2292, 1.0
    %v2357 = vadd.f32 %v2293, 1.0
    %v2358 = vadd.f32 %v2294, 1.0
    %v2359 = vadd.f32 %v2295, 1.0
    %v2360 = vadd.f32 %v2296, 1.0
    %v2361 = vadd.f32 %v2297, 1.0
    %v2362 = vadd.f32 %v2298, 1.0
    %v2363 = vadd.f32 %v2299, 1.0
    %v2364 = vmul.f32 %v700, %v2300
    %v2365 = vmul.f32 %v701, %v2301
    %v2366 = vmul.f32 %v702, %v2302
    %v2367 = vmul.f32 %v703, %v2303
    %v2368 = vmul.f32 %v704, %v2304
    %v2369 = vmul.f32 %v705, %v2305
    %v2370 = vmul.f32 %v706, %v2306
    %v2371 = vmul.f32 %v707, %v2307
    %v2372 = vmul.f32 %v708, %v2308
    %v2373 = vmul.f32 %v709, %v2309
    %v2374 = vmul.f32 %v710, %v2310
    %v2375 = vmul.f32 %v711, %v2311
    %v2376 = vmul.f32 %v712, %v2312
    %v2377 = vmul.f32 %v713, %v2313
    %v2378 = vmul.f32 %v714, %v2314
    %v2379 = vmul.f32 %v715, %v2315
    %v2380 = vmul.f32 %v716, %v2316
    %v2381 = vmul.f32 %v717, %v2317
    %v2382 = vmul.f32 %v718, %v2318
    %v2383 = vmul.f32 %v719, %v2319
    %v2384 = vmul.f32 %v720, %v2320
    %v2385 = vmul.f32 %v721, %v2321
    %v2386 = vmul.f32 %v722, %v2322
    %v2387 = vmul.f32 %v723, %v2323
    %v2388 = vmul.f32 %v724, %v2324
    %v2389 = vmul.f32 %v725, %v2325
    %v2390 = vmul.f32 %v726, %v2326
    %v2391 = vmul.f32 %v727, %v2327
    %v2392 = vmul.f32 %v728, %v2328
    %v2393 = vmul.f32 %v729, %v2329
    %v2394 = vmul.f32 %v730, %v2330
    %v2395 = vmul.f32 %v731, %v2331
    %v2396 = vmul.f32 %v732, %v2332
    %v2397 = vmul.f32 %v733, %v2333
    %v2398 = vmul.f32 %v734, %v2334
    %v2399 = vmul.f32 %v735, %v2335
    %v2400 = vmul.f32 %v736, %v2336
    %v2401 = vmul.f32 %v737, %v2337
    %v2402 = vmul.f32 %v738, %v2338
    %v2403 = vmul.f32 %v739, %v2339
    %v2404 = vmul.f32 %v740, %v2340
    %v2405 = vmul.f32 %v741, %v2341
    %v2406 = vmul.f32 %v742, %v2342
    %v2407 = vmul.f32 %v743, %v2343
    %v2408 = vmul.f32 %v744, %v2344
    %v2409 = vmul.f32 %v745, %v2345
    %v2410 = vmul.f32 %v746, %v2346
    %v2411 = vmul.f32 %v747, %v2347
    %v2412 = vmul.f32 %v748, %v2348
    %v2413 = vmul.f32 %v749, %v2349
    %v2414 = vmul.f32 %v750, %v2350
    %v2415 = vmul.f32 %v751, %v2351
    %v2416 = vmul.f32 %v752, %v2352
    %v2417 = vmul.f32 %v753, %v2353
    %v2418 = vmul.f32 %v754, %v2354
    %v2419 = vmul.f32 %v755, %v2355
    %v2420 = vmul.f32 %v756, %v2356
    %v2421 = vmul.f32 %v757, %v2357
    %v2422 = vmul.f32 %v758, %v2358
    %v2423 = vmul.f32 %v759, %v2359
    %v2424 = vmul.f32 %v760, %v2360
    %v2425 = vmul.f32 %v761, %v2361
    %v2426 = vmul.f32 %v762, %v2362
    %v2427 = vmul.f32 %v763, %v2363
    %v2428 = vld [vmem:[#allocation7] sm:$0xff]
    %v2429 = vld [vmem:[#allocation7 + $0x8] sm:$0xff]
    %v2431 = vsel %vm122, %v2364, 0
    %v2434 = vsel %vm122, %v2365, 0
    %v2437 = vsel %vm122, %v2366, 0
    %v2440 = vsel %vm122, %v2367, 0
    %v2443 = vsel %vm122, %v2368, 0
    %v2446 = vsel %vm122, %v2369, 0
    %v2449 = vsel %vm122, %v2370, 0
    %v2452 = vsel %vm122, %v2371, 0
    %v2455 = vsel %vm122, %v2372, 0
    %v2458 = vsel %vm122, %v2373, 0
    %v2461 = vsel %vm122, %v2374, 0
    %v2464 = vsel %vm122, %v2375, 0
    %v2467 = vsel %vm122, %v2376, 0
    %v2470 = vsel %vm122, %v2377, 0
    %v2473 = vsel %vm122, %v2378, 0
    %v2476 = vsel %vm122, %v2379, 0
    %v2479 = vsel %vm122, %v2380, 0
    %v2482 = vsel %vm122, %v2381, 0
    %v2485 = vsel %vm122, %v2382, 0
    %v2488 = vsel %vm122, %v2383, 0
    %v2491 = vsel %vm122, %v2384, 0
    %v2494 = vsel %vm122, %v2385, 0
    %v2497 = vsel %vm122, %v2386, 0
    %v2500 = vsel %vm122, %v2387, 0
    %v2503 = vsel %vm122, %v2388, 0
    %v2506 = vsel %vm122, %v2389, 0
    %v2509 = vsel %vm122, %v2390, 0
    %v2512 = vsel %vm122, %v2391, 0
    %v2515 = vsel %vm122, %v2392, 0
    %v2518 = vsel %vm122, %v2393, 0
    %v2521 = vsel %vm122, %v2394, 0
    %v2524 = vsel %vm122, %v2395, 0
    %v2527 = vsel %vm122, %v2396, 0
    %v2530 = vsel %vm122, %v2397, 0
    %v2533 = vsel %vm122, %v2398, 0
    %v2536 = vsel %vm122, %v2399, 0
    %v2539 = vsel %vm122, %v2400, 0
    %v2542 = vsel %vm122, %v2401, 0
    %v2545 = vsel %vm122, %v2402, 0
    %v2548 = vsel %vm122, %v2403, 0
    %v2551 = vsel %vm122, %v2404, 0
    %v2554 = vsel %vm122, %v2405, 0
    %v2557 = vsel %vm122, %v2406, 0
    %v2560 = vsel %vm122, %v2407, 0
    %v2563 = vsel %vm122, %v2408, 0
    %v2566 = vsel %vm122, %v2409, 0
    %v2569 = vsel %vm122, %v2410, 0
    %v2572 = vsel %vm122, %v2411, 0
    %v2575 = vsel %vm122, %v2412, 0
    %v2578 = vsel %vm122, %v2413, 0
    %v2581 = vsel %vm122, %v2414, 0
    %v2584 = vsel %vm122, %v2415, 0
    %v2587 = vsel %vm122, %v2416, 0
    %v2590 = vsel %vm122, %v2417, 0
    %v2593 = vsel %vm122, %v2418, 0
    %v2596 = vsel %vm122, %v2419, 0
    %v2599 = vsel %vm122, %v2420, 0
    %v2602 = vsel %vm122, %v2421, 0
    %v2605 = vsel %vm122, %v2422, 0
    %v2608 = vsel %vm122, %v2423, 0
    %v2611 = vsel %vm122, %v2424, 0
    %v2614 = vsel %vm122, %v2425, 0
    %v2617 = vsel %vm122, %v2426, 0
    %v2620 = vsel %vm122, %v2427, 0
    %2622 = vmatprep.subr.mxu0 0.0
    %2623 = vmatpush1.msra.mxu0 %v2428
    %2624 = vmatprep.subr.mxu0 0.0
    %2625 = vmatpush1.msra.mxu0 %v2429
    %2626 = vmatprep.subr.mxu0 0.0
    %2627 = vmatpush1.msra.mxu0 0.0
    %2628 = vmatprep.subr.mxu0 0.0
    %2629 = vmatpush1.msra.mxu0 0.0
    %2630 = vmatprep.subr.mxu0 0.0
    %2631 = vmatpush1.msra.mxu0 0.0
    %2632 = vmatprep.subr.mxu0 0.0
    %2633 = vmatpush1.msra.mxu0 0.0
    %2634 = vmatprep.subr.mxu0 0.0
    %2635 = vmatpush1.msra.mxu0 0.0
    %2636 = vmatprep.subr.mxu0 0.0
    %2637 = vmatpush1.msra.mxu0 0.0
    %2638 = vmatprep.subr.mxu0 0.0
    %2639 = vmatpush1.msra.mxu0 0.0
    %2640 = vmatprep.subr.mxu0 0.0
    %2641 = vmatpush1.msra.mxu0 0.0
    %2642 = vmatprep.subr.mxu0 0.0
    %2643 = vmatpush1.msra.mxu0 0.0
    %2644 = vmatprep.subr.mxu0 0.0
    %2645 = vmatpush1.msra.mxu0 0.0
    %2646 = vmatprep.subr.mxu0 0.0
    %2647 = vmatpush1.msra.mxu0 0.0
    %2648 = vmatprep.subr.mxu0 0.0
    %2649 = vmatpush1.msra.mxu0 0.0
    %2650 = vmatprep.subr.mxu0 0.0
    %2651 = vmatpush1.msra.mxu0 0.0
    %2652 = vmatprep.subr.mxu0 0.0
    %2653 = vmatpush1.msra.mxu0 0.0
    %2654 = vmatprep.subr.mxu0 0.0
    %2655 = vmatpush1.msra.mxu0 0.0
    %2656 = vmatprep.subr.mxu0 0.0
    %2657 = vmatpush1.msra.mxu0 0.0
    %2658 = vmatprep.subr.mxu0 0.0
    %2659 = vmatpush1.msra.mxu0 0.0
    %2660 = vmatprep.subr.mxu0 0.0
    %2661 = vmatpush1.msra.mxu0 0.0
    %2662 = vmatprep.subr.mxu0 0.0
    %2663 = vmatpush1.msra.mxu0 0.0
    %2664 = vmatprep.subr.mxu0 0.0
    %2665 = vmatpush1.msra.mxu0 0.0
    %2666 = vmatprep.subr.mxu0 0.0
    %2667 = vmatpush1.msra.mxu0 0.0
    %2668 = vmatprep.subr.mxu0 0.0
    %2669 = vmatpush1.msra.mxu0 0.0
    %2670 = vmatprep.subr.mxu0 0.0
    %2671 = vmatpush1.msra.mxu0 0.0
    %2672 = vmatprep.subr.mxu0 0.0
    %2673 = vmatpush1.msra.mxu0 0.0
    %2674 = vmatprep.subr.mxu0 0.0
    %2675 = vmatpush1.msra.mxu0 0.0
    %2676 = vmatprep.subr.mxu0 0.0
    %2677 = vmatpush1.msra.mxu0 0.0
    %2678 = vmatprep.subr.mxu0 0.0
    %2679 = vmatpush1.msra.mxu0 0.0
    %2680 = vmatprep.subr.mxu0 0.0
    %2681 = vmatpush1.msra.mxu0 0.0
    %2682 = vmatprep.subr.mxu0 0.0
    %2683 = vmatpush1.msra.mxu0 0.0
    %2684 = vmatprep.subr.mxu0 0.0
    %2685 = vmatpush1.msra.mxu0 0.0
    %2686 = vmatprep.mubr.f32.mxu0 0.0
    %2687 = vmatmul.mubr.f32.gmra.mrb[0].mxu0 %v2431
    %v2688 = vpop.f32.mrb[0].mxu0
    %v2689 = vadd.f32 0.0, %v2688
    %v2690 = vpop.f32.mrb[0].mxu0
    %2691 = vmatprep.mubr.f32.mxu0 0.0
    %2692 = vmatmul.mubr.f32.gmra.mrb[0].mxu0 %v2434
    %v2693 = vpop.f32.mrb[0].mxu0
    %v2694 = vadd.f32 0.0, %v2693
    %v2695 = vpop.f32.mrb[0].mxu0
    %2696 = vmatprep.mubr.f32.mxu0 0.0
    %2697 = vmatmul.mubr.f32.gmra.mrb[0].mxu0 %v2437
    %v2698 = vpop.f32.mrb[0].mxu0
    %v2699 = vadd.f32 0.0, %v2698
    %v2700 = vpop.f32.mrb[0].mxu0
    %2701 = vmatprep.mubr.f32.mxu0 0.0
    %2702 = vmatmul.mubr.f32.gmra.mrb[0].mxu0 %v2440
    %v2703 = vpop.f32.mrb[0].mxu0
    %v2704 = vadd.f32 0.0, %v2703
    %v2705 = vpop.f32.mrb[0].mxu0
    %2706 = vmatprep.mubr.f32.mxu0 0.0
    %2707 = vmatmul.mubr.f32.gmra.mrb[0].mxu0 %v2443
    %v2708 = vpop.f32.mrb[0].mxu0
    %v2709 = vadd.f32 0.0, %v2708
    %v2710 = vpop.f32.mrb[0].mxu0
    %2711 = vmatprep.mubr.f32.mxu0 0.0
    %2712 = vmatmul.mubr.f32.gmra.mrb[0].mxu0 %v2446
    %v2713 = vpop.f32.mrb[0].mxu0
    %v2714 = vadd.f32 0.0, %v2713
    %v2715 = vpop.f32.mrb[0].mxu0
    %2716 = vmatprep.mubr.f32.mxu0 0.0
    %2717 = vmatmul.mubr.f32.gmra.mrb[0].mxu0 %v2449
    %v2718 = vpop.f32.mrb[0].mxu0
    %v2719 = vadd.f32 0.0, %v2718
    %v2720 = vpop.f32.mrb[0].mxu0
    %2721 = vmatprep.mubr.f32.mxu0 0.0
    %2722 = vmatmul.mubr.f32.gmra.mrb[0].mxu0 %v2452
    %v2723 = vpop.f32.mrb[0].mxu0
    %v2724 = vadd.f32 0.0, %v2723
    %v2725 = vpop.f32.mrb[0].mxu0
    %2726 = vmatprep.mubr.f32.mxu0 0.0
    %2727 = vmatmul.mubr.f32.gmra.mrb[0].mxu0 %v2455
    %v2728 = vpop.f32.mrb[0].mxu0
    %v2729 = vadd.f32 0.0, %v2728
    %v2730 = vpop.f32.mrb[0].mxu0
    %2731 = vmatprep.mubr.f32.mxu0 0.0
    %2732 = vmatmul.mubr.f32.gmra.mrb[0].mxu0 %v2458
    %v2733 = vpop.f32.mrb[0].mxu0
    %v2734 = vadd.f32 0.0, %v2733
    %v2735 = vpop.f32.mrb[0].mxu0
    %2736 = vmatprep.mubr.f32.mxu0 0.0
    %2737 = vmatmul.mubr.f32.gmra.mrb[0].mxu0 %v2461
    %v2738 = vpop.f32.mrb[0].mxu0
    %v2739 = vadd.f32 0.0, %v2738
    %v2740 = vpop.f32.mrb[0].mxu0
    %2741 = vmatprep.mubr.f32.mxu0 0.0
    %2742 = vmatmul.mubr.f32.gmra.mrb[0].mxu0 %v2464
    %v2743 = vpop.f32.mrb[0].mxu0
    %v2744 = vadd.f32 0.0, %v2743
    %v2745 = vpop.f32.mrb[0].mxu0
    %2746 = vmatprep.mubr.f32.mxu0 0.0
    %2747 = vmatmul.mubr.f32.gmra.mrb[0].mxu0 %v2467
    %v2748 = vpop.f32.mrb[0].mxu0
    %v2749 = vadd.f32 0.0, %v2748
    %v2750 = vpop.f32.mrb[0].mxu0
    %2751 = vmatprep.mubr.f32.mxu0 0.0
    %2752 = vmatmul.mubr.f32.gmra.mrb[0].mxu0 %v2470
    %v2753 = vpop.f32.mrb[0].mxu0
    %v2754 = vadd.f32 0.0, %v2753
    %v2755 = vpop.f32.mrb[0].mxu0
    %2756 = vmatprep.mubr.f32.mxu0 0.0
    %2757 = vmatmul.mubr.f32.gmra.mrb[0].mxu0 %v2473
    %v2758 = vpop.f32.mrb[0].mxu0
    %v2759 = vadd.f32 0.0, %v2758
    %v2760 = vpop.f32.mrb[0].mxu0
    %2761 = vmatprep.mubr.f32.mxu0 0.0
    %2762 = vmatmul.mubr.f32.gmra.mrb[0].mxu0 %v2476
    %v2763 = vpop.f32.mrb[0].mxu0
    %v2764 = vadd.f32 0.0, %v2763
    %v2765 = vpop.f32.mrb[0].mxu0
    %2766 = vmatprep.mubr.f32.mxu0 0.0
    %2767 = vmatmul.mubr.f32.gmra.mrb[0].mxu0 %v2479
    %v2768 = vpop.f32.mrb[0].mxu0
    %v2769 = vadd.f32 0.0, %v2768
    %v2770 = vpop.f32.mrb[0].mxu0
    %2771 = vmatprep.mubr.f32.mxu0 0.0
    %2772 = vmatmul.mubr.f32.gmra.mrb[0].mxu0 %v2482
    %v2773 = vpop.f32.mrb[0].mxu0
    %v2774 = vadd.f32 0.0, %v2773
    %v2775 = vpop.f32.mrb[0].mxu0
    %2776 = vmatprep.mubr.f32.mxu0 0.0
    %2777 = vmatmul.mubr.f32.gmra.mrb[0].mxu0 %v2485
    %v2778 = vpop.f32.mrb[0].mxu0
    %v2779 = vadd.f32 0.0, %v2778
    %v2780 = vpop.f32.mrb[0].mxu0
    %2781 = vmatprep.mubr.f32.mxu0 0.0
    %2782 = vmatmul.mubr.f32.gmra.mrb[0].mxu0 %v2488
    %v2783 = vpop.f32.mrb[0].mxu0
    %v2784 = vadd.f32 0.0, %v2783
    %v2785 = vpop.f32.mrb[0].mxu0
    %2786 = vmatprep.mubr.f32.mxu0 0.0
    %2787 = vmatmul.mubr.f32.gmra.mrb[0].mxu0 %v2491
    %v2788 = vpop.f32.mrb[0].mxu0
    %v2789 = vadd.f32 0.0, %v2788
    %v2790 = vpop.f32.mrb[0].mxu0
    %2791 = vmatprep.mubr.f32.mxu0 0.0
    %2792 = vmatmul.mubr.f32.gmra.mrb[0].mxu0 %v2494
    %v2793 = vpop.f32.mrb[0].mxu0
    %v2794 = vadd.f32 0.0, %v2793
    %v2795 = vpop.f32.mrb[0].mxu0
    %2796 = vmatprep.mubr.f32.mxu0 0.0
    %2797 = vmatmul.mubr.f32.gmra.mrb[0].mxu0 %v2497
    %v2798 = vpop.f32.mrb[0].mxu0
    %v2799 = vadd.f32 0.0, %v2798
    %v2800 = vpop.f32.mrb[0].mxu0
    %2801 = vmatprep.mubr.f32.mxu0 0.0
    %2802 = vmatmul.mubr.f32.gmra.mrb[0].mxu0 %v2500
    %v2803 = vpop.f32.mrb[0].mxu0
    %v2804 = vadd.f32 0.0, %v2803
    %v2805 = vpop.f32.mrb[0].mxu0
    %2806 = vmatprep.mubr.f32.mxu0 0.0
    %2807 = vmatmul.mubr.f32.gmra.mrb[0].mxu0 %v2503
    %v2808 = vpop.f32.mrb[0].mxu0
    %v2809 = vadd.f32 0.0, %v2808
    %v2810 = vpop.f32.mrb[0].mxu0
    %2811 = vmatprep.mubr.f32.mxu0 0.0
    %2812 = vmatmul.mubr.f32.gmra.mrb[0].mxu0 %v2506
    %v2813 = vpop.f32.mrb[0].mxu0
    %v2814 = vadd.f32 0.0, %v2813
    %v2815 = vpop.f32.mrb[0].mxu0
    %2816 = vmatprep.mubr.f32.mxu0 0.0
    %2817 = vmatmul.mubr.f32.gmra.mrb[0].mxu0 %v2509
    %v2818 = vpop.f32.mrb[0].mxu0
    %v2819 = vadd.f32 0.0, %v2818
    %v2820 = vpop.f32.mrb[0].mxu0
    %2821 = vmatprep.mubr.f32.mxu0 0.0
    %2822 = vmatmul.mubr.f32.gmra.mrb[0].mxu0 %v2512
    %v2823 = vpop.f32.mrb[0].mxu0
    %v2824 = vadd.f32 0.0, %v2823
    %v2825 = vpop.f32.mrb[0].mxu0
    %2826 = vmatprep.mubr.f32.mxu0 0.0
    %2827 = vmatmul.mubr.f32.gmra.mrb[0].mxu0 %v2515
    %v2828 = vpop.f32.mrb[0].mxu0
    %v2829 = vadd.f32 0.0, %v2828
    %v2830 = vpop.f32.mrb[0].mxu0
    %2831 = vmatprep.mubr.f32.mxu0 0.0
    %2832 = vmatmul.mubr.f32.gmra.mrb[0].mxu0 %v2518
    %v2833 = vpop.f32.mrb[0].mxu0
    %v2834 = vadd.f32 0.0, %v2833
    %v2835 = vpop.f32.mrb[0].mxu0
    %2836 = vmatprep.mubr.f32.mxu0 0.0
    %2837 = vmatmul.mubr.f32.gmra.mrb[0].mxu0 %v2521
    %v2838 = vpop.f32.mrb[0].mxu0
    %v2839 = vadd.f32 0.0, %v2838
    %v2840 = vpop.f32.mrb[0].mxu0
    %2841 = vmatprep.mubr.f32.mxu0 0.0
    %2842 = vmatmul.mubr.f32.gmra.mrb[0].mxu0 %v2524
    %v2843 = vpop.f32.mrb[0].mxu0
    %v2844 = vadd.f32 0.0, %v2843
    %v2845 = vpop.f32.mrb[0].mxu0
    %2846 = vmatprep.mubr.f32.mxu0 0.0
    %2847 = vmatmul.mubr.f32.gmra.mrb[0].mxu0 %v2527
    %v2848 = vpop.f32.mrb[0].mxu0
    %v2849 = vadd.f32 0.0, %v2848
    %v2850 = vpop.f32.mrb[0].mxu0
    %2851 = vmatprep.mubr.f32.mxu0 0.0
    %2852 = vmatmul.mubr.f32.gmra.mrb[0].mxu0 %v2530
    %v2853 = vpop.f32.mrb[0].mxu0
    %v2854 = vadd.f32 0.0, %v2853
    %v2855 = vpop.f32.mrb[0].mxu0
    %2856 = vmatprep.mubr.f32.mxu0 0.0
    %2857 = vmatmul.mubr.f32.gmra.mrb[0].mxu0 %v2533
    %v2858 = vpop.f32.mrb[0].mxu0
    %v2859 = vadd.f32 0.0, %v2858
    %v2860 = vpop.f32.mrb[0].mxu0
    %2861 = vmatprep.mubr.f32.mxu0 0.0
    %2862 = vmatmul.mubr.f32.gmra.mrb[0].mxu0 %v2536
    %v2863 = vpop.f32.mrb[0].mxu0
    %v2864 = vadd.f32 0.0, %v2863
    %v2865 = vpop.f32.mrb[0].mxu0
    %2866 = vmatprep.mubr.f32.mxu0 0.0
    %2867 = vmatmul.mubr.f32.gmra.mrb[0].mxu0 %v2539
    %v2868 = vpop.f32.mrb[0].mxu0
    %v2869 = vadd.f32 0.0, %v2868
    %v2870 = vpop.f32.mrb[0].mxu0
    %2871 = vmatprep.mubr.f32.mxu0 0.0
    %2872 = vmatmul.mubr.f32.gmra.mrb[0].mxu0 %v2542
    %v2873 = vpop.f32.mrb[0].mxu0
    %v2874 = vadd.f32 0.0, %v2873
    %v2875 = vpop.f32.mrb[0].mxu0
    %2876 = vmatprep.mubr.f32.mxu0 0.0
    %2877 = vmatmul.mubr.f32.gmra.mrb[0].mxu0 %v2545
    %v2878 = vpop.f32.mrb[0].mxu0
    %v2879 = vadd.f32 0.0, %v2878
    %v2880 = vpop.f32.mrb[0].mxu0
    %2881 = vmatprep.mubr.f32.mxu0 0.0
    %2882 = vmatmul.mubr.f32.gmra.mrb[0].mxu0 %v2548
    %v2883 = vpop.f32.mrb[0].mxu0
    %v2884 = vadd.f32 0.0, %v2883
    %v2885 = vpop.f32.mrb[0].mxu0
    %2886 = vmatprep.mubr.f32.mxu0 0.0
    %2887 = vmatmul.mubr.f32.gmra.mrb[0].mxu0 %v2551
    %v2888 = vpop.f32.mrb[0].mxu0
    %v2889 = vadd.f32 0.0, %v2888
    %v2890 = vpop.f32.mrb[0].mxu0
    %2891 = vmatprep.mubr.f32.mxu0 0.0
    %2892 = vmatmul.mubr.f32.gmra.mrb[0].mxu0 %v2554
    %v2893 = vpop.f32.mrb[0].mxu0
    %v2894 = vadd.f32 0.0, %v2893
    %v2895 = vpop.f32.mrb[0].mxu0
    %2896 = vmatprep.mubr.f32.mxu0 0.0
    %2897 = vmatmul.mubr.f32.gmra.mrb[0].mxu0 %v2557
    %v2898 = vpop.f32.mrb[0].mxu0
    %v2899 = vadd.f32 0.0, %v2898
    %v2900 = vpop.f32.mrb[0].mxu0
    %2901 = vmatprep.mubr.f32.mxu0 0.0
    %2902 = vmatmul.mubr.f32.gmra.mrb[0].mxu0 %v2560
    %v2903 = vpop.f32.mrb[0].mxu0
    %v2904 = vadd.f32 0.0, %v2903
    %v2905 = vpop.f32.mrb[0].mxu0
    %2906 = vmatprep.mubr.f32.mxu0 0.0
    %2907 = vmatmul.mubr.f32.gmra.mrb[0].mxu0 %v2563
    %v2908 = vpop.f32.mrb[0].mxu0
    %v2909 = vadd.f32 0.0, %v2908
    %v2910 = vpop.f32.mrb[0].mxu0
    %2911 = vmatprep.mubr.f32.mxu0 0.0
    %2912 = vmatmul.mubr.f32.gmra.mrb[0].mxu0 %v2566
    %v2913 = vpop.f32.mrb[0].mxu0
    %v2914 = vadd.f32 0.0, %v2913
    %v2915 = vpop.f32.mrb[0].mxu0
    %2916 = vmatprep.mubr.f32.mxu0 0.0
    %2917 = vmatmul.mubr.f32.gmra.mrb[0].mxu0 %v2569
    %v2918 = vpop.f32.mrb[0].mxu0
    %v2919 = vadd.f32 0.0, %v2918
    %v2920 = vpop.f32.mrb[0].mxu0
    %2921 = vmatprep.mubr.f32.mxu0 0.0
    %2922 = vmatmul.mubr.f32.gmra.mrb[0].mxu0 %v2572
    %v2923 = vpop.f32.mrb[0].mxu0
    %v2924 = vadd.f32 0.0, %v2923
    %v2925 = vpop.f32.mrb[0].mxu0
    %2926 = vmatprep.mubr.f32.mxu0 0.0
    %2927 = vmatmul.mubr.f32.gmra.mrb[0].mxu0 %v2575
    %v2928 = vpop.f32.mrb[0].mxu0
    %v2929 = vadd.f32 0.0, %v2928
    %v2930 = vpop.f32.mrb[0].mxu0
    %2931 = vmatprep.mubr.f32.mxu0 0.0
    %2932 = vmatmul.mubr.f32.gmra.mrb[0].mxu0 %v2578
    %v2933 = vpop.f32.mrb[0].mxu0
    %v2934 = vadd.f32 0.0, %v2933
    %v2935 = vpop.f32.mrb[0].mxu0
    %2936 = vmatprep.mubr.f32.mxu0 0.0
    %2937 = vmatmul.mubr.f32.gmra.mrb[0].mxu0 %v2581
    %v2938 = vpop.f32.mrb[0].mxu0
    %v2939 = vadd.f32 0.0, %v2938
    %v2940 = vpop.f32.mrb[0].mxu0
    %2941 = vmatprep.mubr.f32.mxu0 0.0
    %2942 = vmatmul.mubr.f32.gmra.mrb[0].mxu0 %v2584
    %v2943 = vpop.f32.mrb[0].mxu0
    %v2944 = vadd.f32 0.0, %v2943
    %v2945 = vpop.f32.mrb[0].mxu0
    %2946 = vmatprep.mubr.f32.mxu0 0.0
    %2947 = vmatmul.mubr.f32.gmra.mrb[0].mxu0 %v2587
    %v2948 = vpop.f32.mrb[0].mxu0
    %v2949 = vadd.f32 0.0, %v2948
    %v2950 = vpop.f32.mrb[0].mxu0
    %2951 = vmatprep.mubr.f32.mxu0 0.0
    %2952 = vmatmul.mubr.f32.gmra.mrb[0].mxu0 %v2590
    %v2953 = vpop.f32.mrb[0].mxu0
    %v2954 = vadd.f32 0.0, %v2953
    %v2955 = vpop.f32.mrb[0].mxu0
    %2956 = vmatprep.mubr.f32.mxu0 0.0
    %2957 = vmatmul.mubr.f32.gmra.mrb[0].mxu0 %v2593
    %v2958 = vpop.f32.mrb[0].mxu0
    %v2959 = vadd.f32 0.0, %v2958
    %v2960 = vpop.f32.mrb[0].mxu0
    %2961 = vmatprep.mubr.f32.mxu0 0.0
    %2962 = vmatmul.mubr.f32.gmra.mrb[0].mxu0 %v2596
    %v2963 = vpop.f32.mrb[0].mxu0
    %v2964 = vadd.f32 0.0, %v2963
    %v2965 = vpop.f32.mrb[0].mxu0
    %2966 = vmatprep.mubr.f32.mxu0 0.0
    %2967 = vmatmul.mubr.f32.gmra.mrb[0].mxu0 %v2599
    %v2968 = vpop.f32.mrb[0].mxu0
    %v2969 = vadd.f32 0.0, %v2968
    %v2970 = vpop.f32.mrb[0].mxu0
    %2971 = vmatprep.mubr.f32.mxu0 0.0
    %2972 = vmatmul.mubr.f32.gmra.mrb[0].mxu0 %v2602
    %v2973 = vpop.f32.mrb[0].mxu0
    %v2974 = vadd.f32 0.0, %v2973
    %v2975 = vpop.f32.mrb[0].mxu0
    %2976 = vmatprep.mubr.f32.mxu0 0.0
    %2977 = vmatmul.mubr.f32.gmra.mrb[0].mxu0 %v2605
    %v2978 = vpop.f32.mrb[0].mxu0
    %v2979 = vadd.f32 0.0, %v2978
    %v2980 = vpop.f32.mrb[0].mxu0
    %2981 = vmatprep.mubr.f32.mxu0 0.0
    %2982 = vmatmul.mubr.f32.gmra.mrb[0].mxu0 %v2608
    %v2983 = vpop.f32.mrb[0].mxu0
    %v2984 = vadd.f32 0.0, %v2983
    %v2985 = vpop.f32.mrb[0].mxu0
    %2986 = vmatprep.mubr.f32.mxu0 0.0
    %2987 = vmatmul.mubr.f32.gmra.mrb[0].mxu0 %v2611
    %v2988 = vpop.f32.mrb[0].mxu0
    %v2989 = vadd.f32 0.0, %v2988
    %v2990 = vpop.f32.mrb[0].mxu0
    %2991 = vmatprep.mubr.f32.mxu0 0.0
    %2992 = vmatmul.mubr.f32.gmra.mrb[0].mxu0 %v2614
    %v2993 = vpop.f32.mrb[0].mxu0
    %v2994 = vadd.f32 0.0, %v2993
    %v2995 = vpop.f32.mrb[0].mxu0
    %2996 = vmatprep.mubr.f32.mxu0 0.0
    %2997 = vmatmul.mubr.f32.gmra.mrb[0].mxu0 %v2617
    %v2998 = vpop.f32.mrb[0].mxu0
    %v2999 = vadd.f32 0.0, %v2998
    %v3000 = vpop.f32.mrb[0].mxu0
    %3001 = vmatprep.mubr.f32.mxu0 0.0
    %3002 = vmatmul.mubr.f32.gmra.mrb[0].mxu0 %v2620
    %v3003 = vpop.f32.mrb[0].mxu0
    %v3004 = vadd.f32 0.0, %v3003
    %v3005 = vpop.f32.mrb[0].mxu0
    %3006 = vdwg.mxu0
    %3007 = vst.msk [vmem:[#allocation8] sm:$0xff] %vm122, %v2689
    %3008 = vst.msk [vmem:[#allocation8 + $0x8] sm:$0xff] %vm122, %v2694
    %3009 = vst.msk [vmem:[#allocation8 + $0x10] sm:$0xff] %vm122, %v2699
    %3010 = vst.msk [vmem:[#allocation8 + $0x18] sm:$0xff] %vm122, %v2704
    %3011 = vst.msk [vmem:[#allocation8 + $0x20] sm:$0xff] %vm122, %v2709
    %3012 = vst.msk [vmem:[#allocation8 + $0x28] sm:$0xff] %vm122, %v2714
    %3013 = vst.msk [vmem:[#allocation8 + $0x30] sm:$0xff] %vm122, %v2719
    %3014 = vst.msk [vmem:[#allocation8 + $0x38] sm:$0xff] %vm122, %v2724
    %3015 = vst.msk [vmem:[#allocation8 + $0x40] sm:$0xff] %vm122, %v2729
    %3016 = vst.msk [vmem:[#allocation8 + $0x48] sm:$0xff] %vm122, %v2734
    %3017 = vst.msk [vmem:[#allocation8 + $0x50] sm:$0xff] %vm122, %v2739
    %3018 = vst.msk [vmem:[#allocation8 + $0x58] sm:$0xff] %vm122, %v2744
    %3019 = vst.msk [vmem:[#allocation8 + $0x60] sm:$0xff] %vm122, %v2749
    %3020 = vst.msk [vmem:[#allocation8 + $0x68] sm:$0xff] %vm122, %v2754
    %3021 = vst.msk [vmem:[#allocation8 + $0x70] sm:$0xff] %vm122, %v2759
    %3022 = vst.msk [vmem:[#allocation8 + $0x78] sm:$0xff] %vm122, %v2764
    %3023 = vst.msk [vmem:[#allocation8 + $0x80] sm:$0xff] %vm122, %v2769
    %3024 = vst.msk [vmem:[#allocation8 + $0x88] sm:$0xff] %vm122, %v2774
    %3025 = vst.msk [vmem:[#allocation8 + $0x90] sm:$0xff] %vm122, %v2779
    %3026 = vst.msk [vmem:[#allocation8 + $0x98] sm:$0xff] %vm122, %v2784
    %3027 = vst.msk [vmem:[#allocation8 + $0xa0] sm:$0xff] %vm122, %v2789
    %3028 = vst.msk [vmem:[#allocation8 + $0xa8] sm:$0xff] %vm122, %v2794
    %3029 = vst.msk [vmem:[#allocation8 + $0xb0] sm:$0xff] %vm122, %v2799
    %3030 = vst.msk [vmem:[#allocation8 + $0xb8] sm:$0xff] %vm122, %v2804
    %3031 = vst.msk [vmem:[#allocation8 + $0xc0] sm:$0xff] %vm122, %v2809
    %3032 = vst.msk [vmem:[#allocation8 + $0xc8] sm:$0xff] %vm122, %v2814
    %3033 = vst.msk [vmem:[#allocation8 + $0xd0] sm:$0xff] %vm122, %v2819
    %3034 = vst.msk [vmem:[#allocation8 + $0xd8] sm:$0xff] %vm122, %v2824
    %3035 = vst.msk [vmem:[#allocation8 + $0xe0] sm:$0xff] %vm122, %v2829
    %3036 = vst.msk [vmem:[#allocation8 + $0xe8] sm:$0xff] %vm122, %v2834
    %3037 = vst.msk [vmem:[#allocation8 + $0xf0] sm:$0xff] %vm122, %v2839
    %3038 = vst.msk [vmem:[#allocation8 + $0xf8] sm:$0xff] %vm122, %v2844
    %3039 = vst.msk [vmem:[#allocation8 + $0x100] sm:$0xff] %vm122, %v2849
    %3040 = vst.msk [vmem:[#allocation8 + $0x108] sm:$0xff] %vm122, %v2854
    %3041 = vst.msk [vmem:[#allocation8 + $0x110] sm:$0xff] %vm122, %v2859
    %3042 = vst.msk [vmem:[#allocation8 + $0x118] sm:$0xff] %vm122, %v2864
    %3043 = vst.msk [vmem:[#allocation8 + $0x120] sm:$0xff] %vm122, %v2869
    %3044 = vst.msk [vmem:[#allocation8 + $0x128] sm:$0xff] %vm122, %v2874
    %3045 = vst.msk [vmem:[#allocation8 + $0x130] sm:$0xff] %vm122, %v2879
    %3046 = vst.msk [vmem:[#allocation8 + $0x138] sm:$0xff] %vm122, %v2884
    %3047 = vst.msk [vmem:[#allocation8 + $0x140] sm:$0xff] %vm122, %v2889
    %3048 = vst.msk [vmem:[#allocation8 + $0x148] sm:$0xff] %vm122, %v2894
    %3049 = vst.msk [vmem:[#allocation8 + $0x150] sm:$0xff] %vm122, %v2899
    %3050 = vst.msk [vmem:[#allocation8 + $0x158] sm:$0xff] %vm122, %v2904
    %3051 = vst.msk [vmem:[#allocation8 + $0x160] sm:$0xff] %vm122, %v2909
    %3052 = vst.msk [vmem:[#allocation8 + $0x168] sm:$0xff] %vm122, %v2914
    %3053 = vst.msk [vmem:[#allocation8 + $0x170] sm:$0xff] %vm122, %v2919
    %3054 = vst.msk [vmem:[#allocation8 + $0x178] sm:$0xff] %vm122, %v2924
    %3055 = vst.msk [vmem:[#allocation8 + $0x180] sm:$0xff] %vm122, %v2929
    %3056 = vst.msk [vmem:[#allocation8 + $0x188] sm:$0xff] %vm122, %v2934
    %3057 = vst.msk [vmem:[#allocation8 + $0x190] sm:$0xff] %vm122, %v2939
    %3058 = vst.msk [vmem:[#allocation8 + $0x198] sm:$0xff] %vm122, %v2944
    %3059 = vst.msk [vmem:[#allocation8 + $0x1a0] sm:$0xff] %vm122, %v2949
    %3060 = vst.msk [vmem:[#allocation8 + $0x1a8] sm:$0xff] %vm122, %v2954
    %3061 = vst.msk [vmem:[#allocation8 + $0x1b0] sm:$0xff] %vm122, %v2959
    %3062 = vst.msk [vmem:[#allocation8 + $0x1b8] sm:$0xff] %vm122, %v2964
    %3063 = vst.msk [vmem:[#allocation8 + $0x1c0] sm:$0xff] %vm122, %v2969
    %3064 = vst.msk [vmem:[#allocation8 + $0x1c8] sm:$0xff] %vm122, %v2974
    %3065 = vst.msk [vmem:[#allocation8 + $0x1d0] sm:$0xff] %vm122, %v2979
    %3066 = vst.msk [vmem:[#allocation8 + $0x1d8] sm:$0xff] %vm122, %v2984
    %3067 = vst.msk [vmem:[#allocation8 + $0x1e0] sm:$0xff] %vm122, %v2989
    %3068 = vst.msk [vmem:[#allocation8 + $0x1e8] sm:$0xff] %vm122, %v2994
    %3069 = vst.msk [vmem:[#allocation8 + $0x1f0] sm:$0xff] %vm122, %v2999
    %3070 = vst.msk [vmem:[#allocation8 + $0x1f8] sm:$0xff] %vm122, %v3004
    // Predicated region
    $region26: #{tpu_custom_call.1} parent=1 // pred_check
      _
    $region27: #{tpu_custom_call.1} parent=1 // pred_check_branch
      %3072 = sbr.rel (0) target = $region29
    $region28: #{tpu_custom_call.1} parent=1 // pred_region
      %s3074 = ssub.s32 8192, 8192
      %3075 = vsyncadd [#allocation4], %s3074
      %s3076 = sshll.u32 [#allocation8], 4
      %s3077 = int_to_ptr.vmem [resolvable:$true] %s3076
      %3082 = dma.vmem_to_hbm [thread:$0]  %s3077, 8192, %s3, [#allocation4], 128, 128, 8
    $region29: #{tpu_custom_call.1} parent=1 // pred_fallthru
      _
    // Predicated region
    $region30: #{tpu_custom_call.1} parent=1 // pred_check
      _
    $region31: #{tpu_custom_call.1} parent=1 // pred_check_branch
      %3084 = sbr.rel (0) target = $region33
    $region32: #{tpu_custom_call.1} parent=1 // pred_region
      %3085 = dma.done [#allocation4], 8192
    $region33: #{tpu_custom_call.1} parent=1 // pred_fallthru
      _
    %3086 = vsyncpa [#allocation3], 1
    %3087 = vsyncpa [#allocation6], 1
    %3088 = vsyncpa [#allocation4], 1

</llo_original>
